<compile_context>
chip_gen: v5e
topology: v5e:2x2
jax: 0.10.0
libtpu: 0.0.40
codegen_flags: <defaults>
</compile_context>

<pallas_src>
import jax
import jax.numpy as jnp
from jax.experimental import pallas as pl
from jax.experimental.pallas import tpu as pltpu

INPUT_SIZE = 1
HIDDEN = 200          # logical PyTorch hidden_layer_size
HP = 256              # lane-padded hidden size (multiple of 128)
OUTPUT_SIZE = 1
SEQ = 8


def _sigmoid_eup(x):
    # Explicit sigmoid = 1 / (1 + exp(-x)); approx reciprocal keeps both the
    # exp and the reciprocal on the EUP instead of a VALU divide.
    return pl.reciprocal(1.0 + jnp.exp(-x), approx=True)


def _lstm_kernel(x_ref, wih_ref, whh_ref, b_ref, wout_ref, bout_ref,
                 out_ref, xg_ref):
    seq = x_ref.shape[0]          # static (= SEQ)
    hp = whh_ref.shape[0]         # static (= HP)

    # Dense precompute of the input-gate contributions, written once to VMEM
    # scratch: xg[t, :] = x[t] * W_ih + b.  (SEQ,1)*(1,4HP)+(1,4HP) -> (SEQ,4HP)
    xg_ref[...] = x_ref[...] * wih_ref[...] + b_ref[...]

    h = jnp.zeros((1, hp), jnp.float32)
    c = jnp.zeros((1, hp), jnp.float32)

    # seq is tiny and static -> fully unrolled loop (no grid / fori overhead).
    for t in range(seq):
        # whh_ref[...] is read inside the loop (not hoisted) so weight loads can
        # be rematerialized per step instead of staying live for 8 iterations.
        gates = xg_ref[pl.ds(t, 1), :] + jnp.dot(
            h.astype(jnp.bfloat16), whh_ref[...],
            preferred_element_type=jnp.float32)               # (1, 4*HP) f32

        i = _sigmoid_eup(gates[:, 0 * hp:1 * hp])
        f = _sigmoid_eup(gates[:, 1 * hp:2 * hp])
        g = jnp.tanh(gates[:, 2 * hp:3 * hp])
        o = _sigmoid_eup(gates[:, 3 * hp:4 * hp])
        c = f * c + i * g
        h = o * jnp.tanh(c)

    # Linear head on the last hidden state -> predictions[-1].
    out_ref[...] = (jnp.sum(h * wout_ref[...], axis=-1, keepdims=True)
                    + bout_ref[0, 0])


def _pad_gate_cols(x, h, hp):
    """Zero-pad each of the 4 gate blocks along the last axis from h -> hp."""
    lead = x.shape[:-1]
    xg = x.reshape(lead + (4, h))
    pad = [(0, 0)] * (xg.ndim - 1) + [(0, hp - h)]
    return jnp.pad(xg, pad).reshape(lead + (4 * hp,))


@jax.jit
def lstm_forward(input_seq, w_ih, w_hh, b, w_out, b_out):
    h, hp = HIDDEN, HP
    # Zero-pad H=200 -> HP=256 (gate blocks on 128-lane boundaries).
    w_ih_p = _pad_gate_cols(w_ih, h, hp)                          # (1, 4*HP)
    b_p = _pad_gate_cols(b, h, hp)                                # (1, 4*HP)
    w_hh_p = jnp.pad(_pad_gate_cols(w_hh, h, hp),
                     ((0, hp - h), (0, 0)))                       # (HP, 4*HP)
    w_out_p = jnp.pad(w_out, ((0, 0), (0, hp - h)))               # (1, HP)

    # bf16 only on the MXU operand; accumulation and all gate math stay f32.
    w_hh_bf16 = w_hh_p.astype(jnp.bfloat16)
    x2d = input_seq.reshape(SEQ, 1).astype(jnp.float32)

    cost = pl.CostEstimate(
        flops=2 * SEQ * hp * 4 * hp + SEQ * 10 * hp + 2 * hp,
        transcendentals=SEQ * 5 * hp,
        bytes_accessed=(hp * 4 * hp * 2            # W_hh bf16
                        + 2 * (4 * hp * 4)         # W_ih + b f32
                        + hp * 4 + SEQ * 4 + 8))

    out = pl.pallas_call(
        _lstm_kernel,
        out_shape=jax.ShapeDtypeStruct((1, 1), jnp.float32),
        in_specs=[
            pl.BlockSpec(memory_space=pltpu.MemorySpace.VMEM),    # x     (SEQ, 1)
            pl.BlockSpec(memory_space=pltpu.MemorySpace.VMEM),    # W_ih  (1, 4HP)
            pl.BlockSpec(memory_space=pltpu.MemorySpace.VMEM),    # W_hh  (HP, 4HP) bf16
            pl.BlockSpec(memory_space=pltpu.MemorySpace.VMEM),    # b     (1, 4HP)
            pl.BlockSpec(memory_space=pltpu.MemorySpace.VMEM),    # W_out (1, HP)
            pl.BlockSpec(memory_space=pltpu.MemorySpace.SMEM),    # b_out (1, 1)
        ],
        out_specs=pl.BlockSpec(memory_space=pltpu.MemorySpace.VMEM),
        scratch_shapes=[pltpu.VMEM((SEQ, 4 * hp), jnp.float32)],  # xg slab
        cost_estimate=cost,
    )(x2d, w_ih_p, w_hh_bf16, b_p, w_out_p, b_out)
    return out.reshape(OUTPUT_SIZE)


def reference_forward(input_seq, w_ih, w_hh, b, w_out, b_out,
                      matmul_dtype=jnp.float32):
    """Pure-JAX reference of the PyTorch forward (gate order i|f|g|o), at the
    logical (unpadded) H.  matmul_dtype lets us build a bf16-comparable
    reference for the bf16-weight kernel while keeping other math in f32."""
    H = w_hh.shape[0]
    w_hh_m = w_hh.astype(matmul_dtype)
    h = jnp.zeros((1, H), jnp.float32)
    c = jnp.zeros((1, H), jnp.float32)

    def step(carry, x_t):
        h, c = carry
        gates = (x_t * w_ih + b
                 + jnp.dot(h.astype(matmul_dtype), w_hh_m,
                           preferred_element_type=jnp.float32))
        i = jax.nn.sigmoid(gates[:, 0 * H:1 * H])
        f = jax.nn.sigmoid(gates[:, 1 * H:2 * H])
        g = jnp.tanh(gates[:, 2 * H:3 * H])
        o = jax.nn.sigmoid(gates[:, 3 * H:4 * H])
        c = f * c + i * g
        h = o * jnp.tanh(c)
        return (h, c), None

    (h, c), _ = jax.lax.scan(step, (h, c), input_seq)
    return (jnp.sum(h * w_out, axis=-1, keepdims=True) + b_out).reshape(OUTPUT_SIZE)


def init_params(key, input_size=INPUT_SIZE, hidden=HIDDEN, output=OUTPUT_SIZE):
    # PyTorch-style uniform(-1/sqrt(H), 1/sqrt(H)) init, deterministic from key.
    k = 1.0 / jnp.sqrt(jnp.float32(hidden))
    keys = jax.random.split(key, 6)
    w_ih = jax.random.uniform(keys[0], (input_size, 4 * hidden), jnp.float32, -k, k)
    w_hh = jax.random.uniform(keys[1], (hidden, 4 * hidden), jnp.float32, -k, k)
    b_ih = jax.random.uniform(keys[2], (1, 4 * hidden), jnp.float32, -k, k)
    b_hh = jax.random.uniform(keys[3], (1, 4 * hidden), jnp.float32, -k, k)
    w_out = jax.random.uniform(keys[4], (1, hidden), jnp.float32, -k, k)
    b_out = jax.random.uniform(keys[5], (1, output), jnp.float32, -k, k)
    return w_ih, w_hh, b_ih + b_hh, w_out, b_out


if __name__ == "__main__":
    key = jax.random.PRNGKey(0)
    k_x, k_p = jax.random.split(key)
    input_seq = jax.random.normal(k_x, (SEQ,), jnp.float32)
    w_ih, w_hh, b, w_out, b_out = init_params(k_p)

    out = lstm_forward(input_seq, w_ih, w_hh, b, w_out, b_out)
    out = jax.block_until_ready(out)
    assert out.shape == (OUTPUT_SIZE,)

    # Check vs a reference using the same bf16 recurrent matmul (the residual
    # difference is the approx-reciprocal sigmoid on the EUP).
    ref_bf16 = reference_forward(input_seq, w_ih, w_hh, b, w_out, b_out,
                                 matmul_dtype=jnp.bfloat16)
    assert jnp.allclose(out, ref_bf16, atol=1e-2, rtol=1e-2), (out, ref_bf16)

    # Loose check vs the full-f32 reference.
    ref_f32 = reference_forward(input_seq, w_ih, w_hh, b, w_out, b_out)
    assert jnp.allclose(out, ref_f32, atol=3e-2, rtol=3e-2), (out, ref_f32)

    print("KERNEL_OK")
</pallas_src>

<mosaic_0001>
module attributes {stable_mosaic.version = 11 : i64} {
  func.func @_lstm_kernel(%arg0: memref<8x1xf32, #tpu.memory_space<vmem>>, %arg1: memref<1x1024xf32, #tpu.memory_space<vmem>>, %arg2: memref<256x1024xbf16, #tpu.memory_space<vmem>>, %arg3: memref<1x1024xf32, #tpu.memory_space<vmem>>, %arg4: memref<1x256xf32, #tpu.memory_space<vmem>>, %arg5: memref<1x1xf32, #tpu.memory_space<smem>>, %arg6: memref<1x1xf32, #tpu.memory_space<vmem>>, %arg7: memref<8x1024xf32, #tpu.memory_space<vmem>>) attributes {dimension_semantics = [], scalar_prefetch = 0 : i64, scratch_operands = 1 : i64, tpu.core_type = #tpu.core_type<tc>} {
    %c0 = arith.constant 0 : index
    %c0_0 = arith.constant 0 : index
    %0 = vector.load %arg0[%c0, %c0_0] : memref<8x1xf32, #tpu.memory_space<vmem>>, vector<8x1xf32>
    %c0_1 = arith.constant 0 : index
    %c0_2 = arith.constant 0 : index
    %1 = vector.load %arg1[%c0_1, %c0_2] : memref<1x1024xf32, #tpu.memory_space<vmem>>, vector<1x1024xf32>
    %2 = vector.broadcast %0 : vector<8x1xf32> to vector<8x1024xf32>
    %3 = vector.broadcast %1 : vector<1x1024xf32> to vector<8x1024xf32>
    %4 = arith.mulf %2, %3 : vector<8x1024xf32>
    %c0_3 = arith.constant 0 : index
    %c0_4 = arith.constant 0 : index
    %5 = vector.load %arg3[%c0_3, %c0_4] : memref<1x1024xf32, #tpu.memory_space<vmem>>, vector<1x1024xf32>
    %6 = vector.broadcast %5 : vector<1x1024xf32> to vector<8x1024xf32>
    %7 = arith.addf %4, %6 : vector<8x1024xf32>
    %c0_5 = arith.constant 0 : index
    %c0_6 = arith.constant 0 : index
    %8 = vector.load %arg7[%c0_5, %c0_6] : memref<8x1024xf32, #tpu.memory_space<vmem>>, vector<8x1024xf32>
    tpu.vector_store %arg7[%c0_5, %c0_6], %7 {strides = array<i32>} : memref<8x1024xf32, #tpu.memory_space<vmem>>, vector<8x1024xf32>,
    %cst = arith.constant 0.000000e+00 : f32
    %9 = vector.broadcast %cst : f32 to vector<1x256xf32>
    %cst_7 = arith.constant 0.000000e+00 : f32
    %10 = vector.broadcast %cst_7 : f32 to vector<1x256xf32>
    %c0_8 = arith.constant 0 : index
    %c0_9 = arith.constant 0 : index
    %11 = vector.load %arg7[%c0_8, %c0_9] : memref<8x1024xf32, #tpu.memory_space<vmem>>, vector<1x1024xf32>
    %12 = arith.truncf %9 : vector<1x256xf32> to vector<1x256xbf16>
    %c0_10 = arith.constant 0 : index
    %c0_11 = arith.constant 0 : index
    %13 = vector.load %arg2[%c0_10, %c0_11] : memref<256x1024xbf16, #tpu.memory_space<vmem>>, vector<256x1024xbf16>
    %cst_12 = arith.constant dense<0.000000e+00> : vector<1x1024xf32>
    %14 = tpu.matmul %12, %13, %cst_12 {dimension_numbers = #tpu.dot_dimension_numbers<[1], [0], [0], [1], [0, 0, 1, 1], [], []>} : vector<1x256xbf16>, vector<256x1024xbf16>, vector<1x1024xf32> -> vector<1x1024xf32>
    %15 = arith.addf %11, %14 : vector<1x1024xf32>
    %16 = vector.extract_strided_slice %15 {offsets = [0, 0], sizes = [1, 256], strides = [1, 1]} : vector<1x1024xf32> to vector<1x256xf32>
    %cst_13 = arith.constant 0.000000e+00 : f32
    %17 = vector.broadcast %cst_13 : f32 to vector<1x256xf32>
    %18 = arith.subf %17, %16 : vector<1x256xf32>
    %19 = math.exp %18 : vector<1x256xf32>
    %cst_14 = arith.constant 1.000000e+00 : f32
    %20 = vector.broadcast %cst_14 : f32 to vector<1x256xf32>
    %21 = arith.addf %20, %19 : vector<1x256xf32>
    %22 = tpu.reciprocal %21 {approx = true} : vector<1x256xf32> -> vector<1x256xf32>
    %23 = vector.extract_strided_slice %15 {offsets = [0, 256], sizes = [1, 256], strides = [1, 1]} : vector<1x1024xf32> to vector<1x256xf32>
    %cst_15 = arith.constant 0.000000e+00 : f32
    %24 = vector.broadcast %cst_15 : f32 to vector<1x256xf32>
    %25 = arith.subf %24, %23 : vector<1x256xf32>
    %26 = math.exp %25 : vector<1x256xf32>
    %cst_16 = arith.constant 1.000000e+00 : f32
    %27 = vector.broadcast %cst_16 : f32 to vector<1x256xf32>
    %28 = arith.addf %27, %26 : vector<1x256xf32>
    %29 = tpu.reciprocal %28 {approx = true} : vector<1x256xf32> -> vector<1x256xf32>
    %30 = vector.extract_strided_slice %15 {offsets = [0, 512], sizes = [1, 256], strides = [1, 1]} : vector<1x1024xf32> to vector<1x256xf32>
    %31 = math.tanh %30 : vector<1x256xf32>
    %32 = vector.extract_strided_slice %15 {offsets = [0, 768], sizes = [1, 256], strides = [1, 1]} : vector<1x1024xf32> to vector<1x256xf32>
    %cst_17 = arith.constant 0.000000e+00 : f32
    %33 = vector.broadcast %cst_17 : f32 to vector<1x256xf32>
    %34 = arith.subf %33, %32 : vector<1x256xf32>
    %35 = math.exp %34 : vector<1x256xf32>
    %cst_18 = arith.constant 1.000000e+00 : f32
    %36 = vector.broadcast %cst_18 : f32 to vector<1x256xf32>
    %37 = arith.addf %36, %35 : vector<1x256xf32>
    %38 = tpu.reciprocal %37 {approx = true} : vector<1x256xf32> -> vector<1x256xf32>
    %39 = arith.mulf %29, %10 : vector<1x256xf32>
    %40 = arith.mulf %22, %31 : vector<1x256xf32>
    %41 = arith.addf %39, %40 : vector<1x256xf32>
    %42 = math.tanh %41 : vector<1x256xf32>
    %43 = arith.mulf %38, %42 : vector<1x256xf32>
    %c1 = arith.constant 1 : index
    %c0_19 = arith.constant 0 : index
    %44 = vector.load %arg7[%c1, %c0_19] : memref<8x1024xf32, #tpu.memory_space<vmem>>, vector<1x1024xf32>
    %45 = arith.truncf %43 : vector<1x256xf32> to vector<1x256xbf16>
    %c0_20 = arith.constant 0 : index
    %c0_21 = arith.constant 0 : index
    %46 = vector.load %arg2[%c0_20, %c0_21] : memref<256x1024xbf16, #tpu.memory_space<vmem>>, vector<256x1024xbf16>
    %cst_22 = arith.constant dense<0.000000e+00> : vector<1x1024xf32>
    %47 = tpu.matmul %45, %46, %cst_22 {dimension_numbers = #tpu.dot_dimension_numbers<[1], [0], [0], [1], [0, 0, 1, 1], [], []>} : vector<1x256xbf16>, vector<256x1024xbf16>, vector<1x1024xf32> -> vector<1x1024xf32>
    %48 = arith.addf %44, %47 : vector<1x1024xf32>
    %49 = vector.extract_strided_slice %48 {offsets = [0, 0], sizes = [1, 256], strides = [1, 1]} : vector<1x1024xf32> to vector<1x256xf32>
    %cst_23 = arith.constant 0.000000e+00 : f32
    %50 = vector.broadcast %cst_23 : f32 to vector<1x256xf32>
    %51 = arith.subf %50, %49 : vector<1x256xf32>
    %52 = math.exp %51 : vector<1x256xf32>
    %cst_24 = arith.constant 1.000000e+00 : f32
    %53 = vector.broadcast %cst_24 : f32 to vector<1x256xf32>
    %54 = arith.addf %53, %52 : vector<1x256xf32>
    %55 = tpu.reciprocal %54 {approx = true} : vector<1x256xf32> -> vector<1x256xf32>
    %56 = vector.extract_strided_slice %48 {offsets = [0, 256], sizes = [1, 256], strides = [1, 1]} : vector<1x1024xf32> to vector<1x256xf32>
    %cst_25 = arith.constant 0.000000e+00 : f32
    %57 = vector.broadcast %cst_25 : f32 to vector<1x256xf32>
    %58 = arith.subf %57, %56 : vector<1x256xf32>
    %59 = math.exp %58 : vector<1x256xf32>
    %cst_26 = arith.constant 1.000000e+00 : f32
    %60 = vector.broadcast %cst_26 : f32 to vector<1x256xf32>
    %61 = arith.addf %60, %59 : vector<1x256xf32>
    %62 = tpu.reciprocal %61 {approx = true} : vector<1x256xf32> -> vector<1x256xf32>
    %63 = vector.extract_strided_slice %48 {offsets = [0, 512], sizes = [1, 256], strides = [1, 1]} : vector<1x1024xf32> to vector<1x256xf32>
    %64 = math.tanh %63 : vector<1x256xf32>
    %65 = vector.extract_strided_slice %48 {offsets = [0, 768], sizes = [1, 256], strides = [1, 1]} : vector<1x1024xf32> to vector<1x256xf32>
    %cst_27 = arith.constant 0.000000e+00 : f32
    %66 = vector.broadcast %cst_27 : f32 to vector<1x256xf32>
    %67 = arith.subf %66, %65 : vector<1x256xf32>
    %68 = math.exp %67 : vector<1x256xf32>
    %cst_28 = arith.constant 1.000000e+00 : f32
    %69 = vector.broadcast %cst_28 : f32 to vector<1x256xf32>
    %70 = arith.addf %69, %68 : vector<1x256xf32>
    %71 = tpu.reciprocal %70 {approx = true} : vector<1x256xf32> -> vector<1x256xf32>
    %72 = arith.mulf %62, %41 : vector<1x256xf32>
    %73 = arith.mulf %55, %64 : vector<1x256xf32>
    %74 = arith.addf %72, %73 : vector<1x256xf32>
    %75 = math.tanh %74 : vector<1x256xf32>
    %76 = arith.mulf %71, %75 : vector<1x256xf32>
    %c2 = arith.constant 2 : index
    %c0_29 = arith.constant 0 : index
    %77 = vector.load %arg7[%c2, %c0_29] : memref<8x1024xf32, #tpu.memory_space<vmem>>, vector<1x1024xf32>
    %78 = arith.truncf %76 : vector<1x256xf32> to vector<1x256xbf16>
    %c0_30 = arith.constant 0 : index
    %c0_31 = arith.constant 0 : index
    %79 = vector.load %arg2[%c0_30, %c0_31] : memref<256x1024xbf16, #tpu.memory_space<vmem>>, vector<256x1024xbf16>
    %cst_32 = arith.constant dense<0.000000e+00> : vector<1x1024xf32>
    %80 = tpu.matmul %78, %79, %cst_32 {dimension_numbers = #tpu.dot_dimension_numbers<[1], [0], [0], [1], [0, 0, 1, 1], [], []>} : vector<1x256xbf16>, vector<256x1024xbf16>, vector<1x1024xf32> -> vector<1x1024xf32>
    %81 = arith.addf %77, %80 : vector<1x1024xf32>
    %82 = vector.extract_strided_slice %81 {offsets = [0, 0], sizes = [1, 256], strides = [1, 1]} : vector<1x1024xf32> to vector<1x256xf32>
    %cst_33 = arith.constant 0.000000e+00 : f32
    %83 = vector.broadcast %cst_33 : f32 to vector<1x256xf32>
    %84 = arith.subf %83, %82 : vector<1x256xf32>
    %85 = math.exp %84 : vector<1x256xf32>
    %cst_34 = arith.constant 1.000000e+00 : f32
    %86 = vector.broadcast %cst_34 : f32 to vector<1x256xf32>
    %87 = arith.addf %86, %85 : vector<1x256xf32>
    %88 = tpu.reciprocal %87 {approx = true} : vector<1x256xf32> -> vector<1x256xf32>
    %89 = vector.extract_strided_slice %81 {offsets = [0, 256], sizes = [1, 256], strides = [1, 1]} : vector<1x1024xf32> to vector<1x256xf32>
    %cst_35 = arith.constant 0.000000e+00 : f32
    %90 = vector.broadcast %cst_35 : f32 to vector<1x256xf32>
    %91 = arith.subf %90, %89 : vector<1x256xf32>
    %92 = math.exp %91 : vector<1x256xf32>
    %cst_36 = arith.constant 1.000000e+00 : f32
    %93 = vector.broadcast %cst_36 : f32 to vector<1x256xf32>
    %94 = arith.addf %93, %92 : vector<1x256xf32>
    %95 = tpu.reciprocal %94 {approx = true} : vector<1x256xf32> -> vector<1x256xf32>
    %96 = vector.extract_strided_slice %81 {offsets = [0, 512], sizes = [1, 256], strides = [1, 1]} : vector<1x1024xf32> to vector<1x256xf32>
    %97 = math.tanh %96 : vector<1x256xf32>
    %98 = vector.extract_strided_slice %81 {offsets = [0, 768], sizes = [1, 256], strides = [1, 1]} : vector<1x1024xf32> to vector<1x256xf32>
    %cst_37 = arith.constant 0.000000e+00 : f32
    %99 = vector.broadcast %cst_37 : f32 to vector<1x256xf32>
    %100 = arith.subf %99, %98 : vector<1x256xf32>
    %101 = math.exp %100 : vector<1x256xf32>
    %cst_38 = arith.constant 1.000000e+00 : f32
    %102 = vector.broadcast %cst_38 : f32 to vector<1x256xf32>
    %103 = arith.addf %102, %101 : vector<1x256xf32>
    %104 = tpu.reciprocal %103 {approx = true} : vector<1x256xf32> -> vector<1x256xf32>
    %105 = arith.mulf %95, %74 : vector<1x256xf32>
    %106 = arith.mulf %88, %97 : vector<1x256xf32>
    %107 = arith.addf %105, %106 : vector<1x256xf32>
    %108 = math.tanh %107 : vector<1x256xf32>
    %109 = arith.mulf %104, %108 : vector<1x256xf32>
    %c3 = arith.constant 3 : index
    %c0_39 = arith.constant 0 : index
    %110 = vector.load %arg7[%c3, %c0_39] : memref<8x1024xf32, #tpu.memory_space<vmem>>, vector<1x1024xf32>
    %111 = arith.truncf %109 : vector<1x256xf32> to vector<1x256xbf16>
    %c0_40 = arith.constant 0 : index
    %c0_41 = arith.constant 0 : index
    %112 = vector.load %arg2[%c0_40, %c0_41] : memref<256x1024xbf16, #tpu.memory_space<vmem>>, vector<256x1024xbf16>
    %cst_42 = arith.constant dense<0.000000e+00> : vector<1x1024xf32>
    %113 = tpu.matmul %111, %112, %cst_42 {dimension_numbers = #tpu.dot_dimension_numbers<[1], [0], [0], [1], [0, 0, 1, 1], [], []>} : vector<1x256xbf16>, vector<256x1024xbf16>, vector<1x1024xf32> -> vector<1x1024xf32>
    %114 = arith.addf %110, %113 : vector<1x1024xf32>
    %115 = vector.extract_strided_slice %114 {offsets = [0, 0], sizes = [1, 256], strides = [1, 1]} : vector<1x1024xf32> to vector<1x256xf32>
    %cst_43 = arith.constant 0.000000e+00 : f32
    %116 = vector.broadcast %cst_43 : f32 to vector<1x256xf32>
    %117 = arith.subf %116, %115 : vector<1x256xf32>
    %118 = math.exp %117 : vector<1x256xf32>
    %cst_44 = arith.constant 1.000000e+00 : f32
    %119 = vector.broadcast %cst_44 : f32 to vector<1x256xf32>
    %120 = arith.addf %119, %118 : vector<1x256xf32>
    %121 = tpu.reciprocal %120 {approx = true} : vector<1x256xf32> -> vector<1x256xf32>
    %122 = vector.extract_strided_slice %114 {offsets = [0, 256], sizes = [1, 256], strides = [1, 1]} : vector<1x1024xf32> to vector<1x256xf32>
    %cst_45 = arith.constant 0.000000e+00 : f32
    %123 = vector.broadcast %cst_45 : f32 to vector<1x256xf32>
    %124 = arith.subf %123, %122 : vector<1x256xf32>
    %125 = math.exp %124 : vector<1x256xf32>
    %cst_46 = arith.constant 1.000000e+00 : f32
    %126 = vector.broadcast %cst_46 : f32 to vector<1x256xf32>
    %127 = arith.addf %126, %125 : vector<1x256xf32>
    %128 = tpu.reciprocal %127 {approx = true} : vector<1x256xf32> -> vector<1x256xf32>
    %129 = vector.extract_strided_slice %114 {offsets = [0, 512], sizes = [1, 256], strides = [1, 1]} : vector<1x1024xf32> to vector<1x256xf32>
    %130 = math.tanh %129 : vector<1x256xf32>
    %131 = vector.extract_strided_slice %114 {offsets = [0, 768], sizes = [1, 256], strides = [1, 1]} : vector<1x1024xf32> to vector<1x256xf32>
    %cst_47 = arith.constant 0.000000e+00 : f32
    %132 = vector.broadcast %cst_47 : f32 to vector<1x256xf32>
    %133 = arith.subf %132, %131 : vector<1x256xf32>
    %134 = math.exp %133 : vector<1x256xf32>
    %cst_48 = arith.constant 1.000000e+00 : f32
    %135 = vector.broadcast %cst_48 : f32 to vector<1x256xf32>
    %136 = arith.addf %135, %134 : vector<1x256xf32>
    %137 = tpu.reciprocal %136 {approx = true} : vector<1x256xf32> -> vector<1x256xf32>
    %138 = arith.mulf %128, %107 : vector<1x256xf32>
    %139 = arith.mulf %121, %130 : vector<1x256xf32>
    %140 = arith.addf %138, %139 : vector<1x256xf32>
    %141 = math.tanh %140 : vector<1x256xf32>
    %142 = arith.mulf %137, %141 : vector<1x256xf32>
    %c4 = arith.constant 4 : index
    %c0_49 = arith.constant 0 : index
    %143 = vector.load %arg7[%c4, %c0_49] : memref<8x1024xf32, #tpu.memory_space<vmem>>, vector<1x1024xf32>
    %144 = arith.truncf %142 : vector<1x256xf32> to vector<1x256xbf16>
    %c0_50 = arith.constant 0 : index
    %c0_51 = arith.constant 0 : index
    %145 = vector.load %arg2[%c0_50, %c0_51] : memref<256x1024xbf16, #tpu.memory_space<vmem>>, vector<256x1024xbf16>
    %cst_52 = arith.constant dense<0.000000e+00> : vector<1x1024xf32>
    %146 = tpu.matmul %144, %145, %cst_52 {dimension_numbers = #tpu.dot_dimension_numbers<[1], [0], [0], [1], [0, 0, 1, 1], [], []>} : vector<1x256xbf16>, vector<256x1024xbf16>, vector<1x1024xf32> -> vector<1x1024xf32>
    %147 = arith.addf %143, %146 : vector<1x1024xf32>
    %148 = vector.extract_strided_slice %147 {offsets = [0, 0], sizes = [1, 256], strides = [1, 1]} : vector<1x1024xf32> to vector<1x256xf32>
    %cst_53 = arith.constant 0.000000e+00 : f32
    %149 = vector.broadcast %cst_53 : f32 to vector<1x256xf32>
    %150 = arith.subf %149, %148 : vector<1x256xf32>
    %151 = math.exp %150 : vector<1x256xf32>
    %cst_54 = arith.constant 1.000000e+00 : f32
    %152 = vector.broadcast %cst_54 : f32 to vector<1x256xf32>
    %153 = arith.addf %152, %151 : vector<1x256xf32>
    %154 = tpu.reciprocal %153 {approx = true} : vector<1x256xf32> -> vector<1x256xf32>
    %155 = vector.extract_strided_slice %147 {offsets = [0, 256], sizes = [1, 256], strides = [1, 1]} : vector<1x1024xf32> to vector<1x256xf32>
    %cst_55 = arith.constant 0.000000e+00 : f32
    %156 = vector.broadcast %cst_55 : f32 to vector<1x256xf32>
    %157 = arith.subf %156, %155 : vector<1x256xf32>
    %158 = math.exp %157 : vector<1x256xf32>
    %cst_56 = arith.constant 1.000000e+00 : f32
    %159 = vector.broadcast %cst_56 : f32 to vector<1x256xf32>
    %160 = arith.addf %159, %158 : vector<1x256xf32>
    %161 = tpu.reciprocal %160 {approx = true} : vector<1x256xf32> -> vector<1x256xf32>
    %162 = vector.extract_strided_slice %147 {offsets = [0, 512], sizes = [1, 256], strides = [1, 1]} : vector<1x1024xf32> to vector<1x256xf32>
    %163 = math.tanh %162 : vector<1x256xf32>
    %164 = vector.extract_strided_slice %147 {offsets = [0, 768], sizes = [1, 256], strides = [1, 1]} : vector<1x1024xf32> to vector<1x256xf32>
    %cst_57 = arith.constant 0.000000e+00 : f32
    %165 = vector.broadcast %cst_57 : f32 to vector<1x256xf32>
    %166 = arith.subf %165, %164 : vector<1x256xf32>
    %167 = math.exp %166 : vector<1x256xf32>
    %cst_58 = arith.constant 1.000000e+00 : f32
    %168 = vector.broadcast %cst_58 : f32 to vector<1x256xf32>
    %169 = arith.addf %168, %167 : vector<1x256xf32>
    %170 = tpu.reciprocal %169 {approx = true} : vector<1x256xf32> -> vector<1x256xf32>
    %171 = arith.mulf %161, %140 : vector<1x256xf32>
    %172 = arith.mulf %154, %163 : vector<1x256xf32>
    %173 = arith.addf %171, %172 : vector<1x256xf32>
    %174 = math.tanh %173 : vector<1x256xf32>
    %175 = arith.mulf %170, %174 : vector<1x256xf32>
    %c5 = arith.constant 5 : index
    %c0_59 = arith.constant 0 : index
    %176 = vector.load %arg7[%c5, %c0_59] : memref<8x1024xf32, #tpu.memory_space<vmem>>, vector<1x1024xf32>
    %177 = arith.truncf %175 : vector<1x256xf32> to vector<1x256xbf16>
    %c0_60 = arith.constant 0 : index
    %c0_61 = arith.constant 0 : index
    %178 = vector.load %arg2[%c0_60, %c0_61] : memref<256x1024xbf16, #tpu.memory_space<vmem>>, vector<256x1024xbf16>
    %cst_62 = arith.constant dense<0.000000e+00> : vector<1x1024xf32>
    %179 = tpu.matmul %177, %178, %cst_62 {dimension_numbers = #tpu.dot_dimension_numbers<[1], [0], [0], [1], [0, 0, 1, 1], [], []>} : vector<1x256xbf16>, vector<256x1024xbf16>, vector<1x1024xf32> -> vector<1x1024xf32>
    %180 = arith.addf %176, %179 : vector<1x1024xf32>
    %181 = vector.extract_strided_slice %180 {offsets = [0, 0], sizes = [1, 256], strides = [1, 1]} : vector<1x1024xf32> to vector<1x256xf32>
    %cst_63 = arith.constant 0.000000e+00 : f32
    %182 = vector.broadcast %cst_63 : f32 to vector<1x256xf32>
    %183 = arith.subf %182, %181 : vector<1x256xf32>
    %184 = math.exp %183 : vector<1x256xf32>
    %cst_64 = arith.constant 1.000000e+00 : f32
    %185 = vector.broadcast %cst_64 : f32 to vector<1x256xf32>
    %186 = arith.addf %185, %184 : vector<1x256xf32>
    %187 = tpu.reciprocal %186 {approx = true} : vector<1x256xf32> -> vector<1x256xf32>
    %188 = vector.extract_strided_slice %180 {offsets = [0, 256], sizes = [1, 256], strides = [1, 1]} : vector<1x1024xf32> to vector<1x256xf32>
    %cst_65 = arith.constant 0.000000e+00 : f32
    %189 = vector.broadcast %cst_65 : f32 to vector<1x256xf32>
    %190 = arith.subf %189, %188 : vector<1x256xf32>
    %191 = math.exp %190 : vector<1x256xf32>
    %cst_66 = arith.constant 1.000000e+00 : f32
    %192 = vector.broadcast %cst_66 : f32 to vector<1x256xf32>
    %193 = arith.addf %192, %191 : vector<1x256xf32>
    %194 = tpu.reciprocal %193 {approx = true} : vector<1x256xf32> -> vector<1x256xf32>
    %195 = vector.extract_strided_slice %180 {offsets = [0, 512], sizes = [1, 256], strides = [1, 1]} : vector<1x1024xf32> to vector<1x256xf32>
    %196 = math.tanh %195 : vector<1x256xf32>
    %197 = vector.extract_strided_slice %180 {offsets = [0, 768], sizes = [1, 256], strides = [1, 1]} : vector<1x1024xf32> to vector<1x256xf32>
    %cst_67 = arith.constant 0.000000e+00 : f32
    %198 = vector.broadcast %cst_67 : f32 to vector<1x256xf32>
    %199 = arith.subf %198, %197 : vector<1x256xf32>
    %200 = math.exp %199 : vector<1x256xf32>
    %cst_68 = arith.constant 1.000000e+00 : f32
    %201 = vector.broadcast %cst_68 : f32 to vector<1x256xf32>
    %202 = arith.addf %201, %200 : vector<1x256xf32>
    %203 = tpu.reciprocal %202 {approx = true} : vector<1x256xf32> -> vector<1x256xf32>
    %204 = arith.mulf %194, %173 : vector<1x256xf32>
    %205 = arith.mulf %187, %196 : vector<1x256xf32>
    %206 = arith.addf %204, %205 : vector<1x256xf32>
    %207 = math.tanh %206 : vector<1x256xf32>
    %208 = arith.mulf %203, %207 : vector<1x256xf32>
    %c6 = arith.constant 6 : index
    %c0_69 = arith.constant 0 : index
    %209 = vector.load %arg7[%c6, %c0_69] : memref<8x1024xf32, #tpu.memory_space<vmem>>, vector<1x1024xf32>
    %210 = arith.truncf %208 : vector<1x256xf32> to vector<1x256xbf16>
    %c0_70 = arith.constant 0 : index
    %c0_71 = arith.constant 0 : index
    %211 = vector.load %arg2[%c0_70, %c0_71] : memref<256x1024xbf16, #tpu.memory_space<vmem>>, vector<256x1024xbf16>
    %cst_72 = arith.constant dense<0.000000e+00> : vector<1x1024xf32>
    %212 = tpu.matmul %210, %211, %cst_72 {dimension_numbers = #tpu.dot_dimension_numbers<[1], [0], [0], [1], [0, 0, 1, 1], [], []>} : vector<1x256xbf16>, vector<256x1024xbf16>, vector<1x1024xf32> -> vector<1x1024xf32>
    %213 = arith.addf %209, %212 : vector<1x1024xf32>
    %214 = vector.extract_strided_slice %213 {offsets = [0, 0], sizes = [1, 256], strides = [1, 1]} : vector<1x1024xf32> to vector<1x256xf32>
    %cst_73 = arith.constant 0.000000e+00 : f32
    %215 = vector.broadcast %cst_73 : f32 to vector<1x256xf32>
    %216 = arith.subf %215, %214 : vector<1x256xf32>
    %217 = math.exp %216 : vector<1x256xf32>
    %cst_74 = arith.constant 1.000000e+00 : f32
    %218 = vector.broadcast %cst_74 : f32 to vector<1x256xf32>
    %219 = arith.addf %218, %217 : vector<1x256xf32>
    %220 = tpu.reciprocal %219 {approx = true} : vector<1x256xf32> -> vector<1x256xf32>
    %221 = vector.extract_strided_slice %213 {offsets = [0, 256], sizes = [1, 256], strides = [1, 1]} : vector<1x1024xf32> to vector<1x256xf32>
    %cst_75 = arith.constant 0.000000e+00 : f32
    %222 = vector.broadcast %cst_75 : f32 to vector<1x256xf32>
    %223 = arith.subf %222, %221 : vector<1x256xf32>
    %224 = math.exp %223 : vector<1x256xf32>
    %cst_76 = arith.constant 1.000000e+00 : f32
    %225 = vector.broadcast %cst_76 : f32 to vector<1x256xf32>
    %226 = arith.addf %225, %224 : vector<1x256xf32>
    %227 = tpu.reciprocal %226 {approx = true} : vector<1x256xf32> -> vector<1x256xf32>
    %228 = vector.extract_strided_slice %213 {offsets = [0, 512], sizes = [1, 256], strides = [1, 1]} : vector<1x1024xf32> to vector<1x256xf32>
    %229 = math.tanh %228 : vector<1x256xf32>
    %230 = vector.extract_strided_slice %213 {offsets = [0, 768], sizes = [1, 256], strides = [1, 1]} : vector<1x1024xf32> to vector<1x256xf32>
    %cst_77 = arith.constant 0.000000e+00 : f32
    %231 = vector.broadcast %cst_77 : f32 to vector<1x256xf32>
    %232 = arith.subf %231, %230 : vector<1x256xf32>
    %233 = math.exp %232 : vector<1x256xf32>
    %cst_78 = arith.constant 1.000000e+00 : f32
    %234 = vector.broadcast %cst_78 : f32 to vector<1x256xf32>
    %235 = arith.addf %234, %233 : vector<1x256xf32>
    %236 = tpu.reciprocal %235 {approx = true} : vector<1x256xf32> -> vector<1x256xf32>
    %237 = arith.mulf %227, %206 : vector<1x256xf32>
    %238 = arith.mulf %220, %229 : vector<1x256xf32>
    %239 = arith.addf %237, %238 : vector<1x256xf32>
    %240 = math.tanh %239 : vector<1x256xf32>
    %241 = arith.mulf %236, %240 : vector<1x256xf32>
    %c7 = arith.constant 7 : index
    %c0_79 = arith.constant 0 : index
    %242 = vector.load %arg7[%c7, %c0_79] : memref<8x1024xf32, #tpu.memory_space<vmem>>, vector<1x1024xf32>
    %243 = arith.truncf %241 : vector<1x256xf32> to vector<1x256xbf16>
    %c0_80 = arith.constant 0 : index
    %c0_81 = arith.constant 0 : index
    %244 = vector.load %arg2[%c0_80, %c0_81] : memref<256x1024xbf16, #tpu.memory_space<vmem>>, vector<256x1024xbf16>
    %cst_82 = arith.constant dense<0.000000e+00> : vector<1x1024xf32>
    %245 = tpu.matmul %243, %244, %cst_82 {dimension_numbers = #tpu.dot_dimension_numbers<[1], [0], [0], [1], [0, 0, 1, 1], [], []>} : vector<1x256xbf16>, vector<256x1024xbf16>, vector<1x1024xf32> -> vector<1x1024xf32>
    %246 = arith.addf %242, %245 : vector<1x1024xf32>
    %247 = vector.extract_strided_slice %246 {offsets = [0, 0], sizes = [1, 256], strides = [1, 1]} : vector<1x1024xf32> to vector<1x256xf32>
    %cst_83 = arith.constant 0.000000e+00 : f32
    %248 = vector.broadcast %cst_83 : f32 to vector<1x256xf32>
    %249 = arith.subf %248, %247 : vector<1x256xf32>
    %250 = math.exp %249 : vector<1x256xf32>
    %cst_84 = arith.constant 1.000000e+00 : f32
    %251 = vector.broadcast %cst_84 : f32 to vector<1x256xf32>
    %252 = arith.addf %251, %250 : vector<1x256xf32>
    %253 = tpu.reciprocal %252 {approx = true} : vector<1x256xf32> -> vector<1x256xf32>
    %254 = vector.extract_strided_slice %246 {offsets = [0, 256], sizes = [1, 256], strides = [1, 1]} : vector<1x1024xf32> to vector<1x256xf32>
    %cst_85 = arith.constant 0.000000e+00 : f32
    %255 = vector.broadcast %cst_85 : f32 to vector<1x256xf32>
    %256 = arith.subf %255, %254 : vector<1x256xf32>
    %257 = math.exp %256 : vector<1x256xf32>
    %cst_86 = arith.constant 1.000000e+00 : f32
    %258 = vector.broadcast %cst_86 : f32 to vector<1x256xf32>
    %259 = arith.addf %258, %257 : vector<1x256xf32>
    %260 = tpu.reciprocal %259 {approx = true} : vector<1x256xf32> -> vector<1x256xf32>
    %261 = vector.extract_strided_slice %246 {offsets = [0, 512], sizes = [1, 256], strides = [1, 1]} : vector<1x1024xf32> to vector<1x256xf32>
    %262 = math.tanh %261 : vector<1x256xf32>
    %263 = vector.extract_strided_slice %246 {offsets = [0, 768], sizes = [1, 256], strides = [1, 1]} : vector<1x1024xf32> to vector<1x256xf32>
    %cst_87 = arith.constant 0.000000e+00 : f32
    %264 = vector.broadcast %cst_87 : f32 to vector<1x256xf32>
    %265 = arith.subf %264, %263 : vector<1x256xf32>
    %266 = math.exp %265 : vector<1x256xf32>
    %cst_88 = arith.constant 1.000000e+00 : f32
    %267 = vector.broadcast %cst_88 : f32 to vector<1x256xf32>
    %268 = arith.addf %267, %266 : vector<1x256xf32>
    %269 = tpu.reciprocal %268 {approx = true} : vector<1x256xf32> -> vector<1x256xf32>
    %270 = arith.mulf %260, %239 : vector<1x256xf32>
    %271 = arith.mulf %253, %262 : vector<1x256xf32>
    %272 = arith.addf %270, %271 : vector<1x256xf32>
    %273 = math.tanh %272 : vector<1x256xf32>
    %274 = arith.mulf %269, %273 : vector<1x256xf32>
    %c0_89 = arith.constant 0 : index
    %c0_90 = arith.constant 0 : index
    %275 = vector.load %arg4[%c0_89, %c0_90] : memref<1x256xf32, #tpu.memory_space<vmem>>, vector<1x256xf32>
    %276 = arith.mulf %274, %275 : vector<1x256xf32>
    %cst_91 = arith.constant dense<0.000000e+00> : vector<1xf32>
    %277 = vector.multi_reduction <add>, %276, %cst_91 [1] : vector<1x256xf32> to vector<1xf32>
    %278 = vector.shape_cast %277 : vector<1xf32> to vector<1x1xf32>
    %c0_92 = arith.constant 0 : index
    %c0_93 = arith.constant 0 : index
    %279 = memref.load %arg5[%c0_92, %c0_93] : memref<1x1xf32, #tpu.memory_space<smem>>
    %280 = vector.broadcast %279 : f32 to vector<1x1xf32>
    %281 = arith.addf %278, %280 : vector<1x1xf32>
    %c0_94 = arith.constant 0 : index
    %c0_95 = arith.constant 0 : index
    %282 = vector.load %arg6[%c0_94, %c0_95] : memref<1x1xf32, #tpu.memory_space<vmem>>, vector<1x1xf32>
    tpu.vector_store %arg6[%c0_94, %c0_95], %281 {strides = array<i32>} : memref<1x1xf32, #tpu.memory_space<vmem>>, vector<1x1xf32>,
    return
  }
}

</mosaic_0001>

<llo_original>
// kernel: lstm_forward.1
$region0: #{lstm_forward.1}
  #allocation0 [shape = 'u32[]', space=smem, size = 0x4, offset = 0x4, fixed_abs, tag = 'smem constant byte address 0x4 - core index']
  #allocation1 [shape = 'u32[72,128]{1,0:T(1,128)}', space=vmem, size = 0x9000, scoped, tag = 'internal scratch']
  #allocation2 [shape = 'f32[8,1024]{1,0:T(8,128)}', space=vmem, size = 0x8000, scoped, tag = 'scratch operand']
  #allocation3 [shape = 'f32[1,1]{1,0:T(1,128)S(6)}', space=smem, size = 0x200, scoped, tag = 'scoped memory for lstm_forward.1']
  %s0 = inlined_call_operand.vmem [shape: f32[8,1], index: 0, kind: input, shape index: {}]
  %s1 = inlined_call_operand.vmem [shape: f32[1,1024], index: 1, kind: input, shape index: {}]
  %s2 = inlined_call_operand.vmem [shape: bf16[256,1024], index: 2, kind: input, shape index: {}]
  %s3 = inlined_call_operand.vmem [shape: f32[1,1024], index: 3, kind: input, shape index: {}]
  %s4 = inlined_call_operand.vmem [shape: f32[1,256], index: 4, kind: input, shape index: {}]
  %s5 = inlined_call_operand.<no memory space> [shape: f32[1,1], index: 5, kind: input, shape index: {}]
  %s6 = inlined_call_operand.hbm [shape: f32[1,1], index: 6, kind: output, shape index: {}]
  %s7 = sld [smem:[#allocation0]]
  $region34: #{lstm_forward.1} parent=0
    _
  %s9 = ssub.s32 1, %s7
  %s10 = scalar_select 0, %s9, %s7
  %11 = sst [smem:[#allocation3]] %s5
  $region1: #{lstm_forward.1} parent=0
    #allocation4 [shape = 'u8[512]{0}', space=vmem, size = 0x400, scoped, tag = 'output window, operand 0, single buffered']
    #allocation5 [shape = 's32[1]{0}', space=sflag, size = 0x4, scoped, tag = 'scoped memory for lstm_forward.1']
    %12 = vsyncpa [#allocation5], 0
    // Predicated region
    $region2: #{lstm_forward.1} parent=1 // pred_check
      _
    $region3: #{lstm_forward.1} parent=1 // pred_check_branch
      %14 = sbr.rel (0) target = $region5
    $region4: #{lstm_forward.1} parent=1 // pred_region
      _
    $region5: #{lstm_forward.1} parent=1 // pred_fallthru
      _
    // Predicated region
    $region6: #{lstm_forward.1} parent=1 // pred_check
      _
    $region7: #{lstm_forward.1} parent=1 // pred_check_branch
      %16 = sbr.rel (0) target = $region9
    $region8: #{lstm_forward.1} parent=1 // pred_region
      _
    $region9: #{lstm_forward.1} parent=1 // pred_fallthru
      _
    // Predicated region
    $region10: #{lstm_forward.1} parent=1 // pred_check
      _
    $region11: #{lstm_forward.1} parent=1 // pred_check_branch
      %18 = sbr.rel (0) target = $region13
    $region12: #{lstm_forward.1} parent=1 // pred_region
      _
    $region13: #{lstm_forward.1} parent=1 // pred_fallthru
      _
    // Predicated region
    $region14: #{lstm_forward.1} parent=1 // pred_check
      _
    $region15: #{lstm_forward.1} parent=1 // pred_check_branch
      %20 = sbr.rel (0) target = $region17
    $region16: #{lstm_forward.1} parent=1 // pred_region
      _
    $region17: #{lstm_forward.1} parent=1 // pred_fallthru
      _
    // Predicated region
    $region18: #{lstm_forward.1} parent=1 // pred_check
      _
    $region19: #{lstm_forward.1} parent=1 // pred_check_branch
      %22 = sbr.rel (0) target = $region21
    $region20: #{lstm_forward.1} parent=1 // pred_region
      _
    $region21: #{lstm_forward.1} parent=1 // pred_fallthru
      _
    // Predicated region
    $region22: #{lstm_forward.1} parent=1 // pred_check
      _
    $region23: #{lstm_forward.1} parent=1 // pred_check_branch
      %24 = sbr.rel (0) target = $region25
    $region24: #{lstm_forward.1} parent=1 // pred_region
      _
    $region25: #{lstm_forward.1} parent=1 // pred_fallthru
      _
    %v26 = vld [vmem:[%s0] sm:$0xff]
    %v27 = vld [vmem:[%s1] sm:$0xff]
    %29 = vset.pattern.permute.xlu0 0
    %30 = vperm.xlu0 %29, %v26
    %v31 = vpop.permute.xlu0 %30
    %v34 = vperm.slane %v27, 0
    %v35 = vperm.slane %v27, 1
    %v36 = vperm.slane %v27, 2
    %v37 = vperm.slane %v27, 3
    %v38 = vperm.slane %v27, 4
    %v39 = vperm.slane %v27, 5
    %v40 = vperm.slane %v27, 6
    %v41 = vperm.slane %v27, 7
    %v50 = vmul.f32 %v31, %v34
    %v51 = vmul.f32 %v31, %v35
    %v52 = vmul.f32 %v31, %v36
    %v53 = vmul.f32 %v31, %v37
    %v54 = vmul.f32 %v31, %v38
    %v55 = vmul.f32 %v31, %v39
    %v56 = vmul.f32 %v31, %v40
    %v57 = vmul.f32 %v31, %v41
    %v58 = vld [vmem:[%s3] sm:$0xff]
    %v60 = vperm.slane %v58, 0
    %v61 = vperm.slane %v58, 1
    %v62 = vperm.slane %v58, 2
    %v63 = vperm.slane %v58, 3
    %v64 = vperm.slane %v58, 4
    %v65 = vperm.slane %v58, 5
    %v66 = vperm.slane %v58, 6
    %v67 = vperm.slane %v58, 7
    %v76 = vadd.f32 %v50, %v60
    %v77 = vadd.f32 %v51, %v61
    %v78 = vadd.f32 %v52, %v62
    %v79 = vadd.f32 %v53, %v63
    %v80 = vadd.f32 %v54, %v64
    %v81 = vadd.f32 %v55, %v65
    %v82 = vadd.f32 %v56, %v66
    %v83 = vadd.f32 %v57, %v67
    %84 = vst [vmem:[#allocation2] sm:$0xff] %v76
    %85 = vst [vmem:[#allocation2 + $0x8] sm:$0xff] %v77
    %86 = vst [vmem:[#allocation2 + $0x10] sm:$0xff] %v78
    %87 = vst [vmem:[#allocation2 + $0x18] sm:$0xff] %v79
    %88 = vst [vmem:[#allocation2 + $0x20] sm:$0xff] %v80
    %89 = vst [vmem:[#allocation2 + $0x28] sm:$0xff] %v81
    %90 = vst [vmem:[#allocation2 + $0x30] sm:$0xff] %v82
    %91 = vst [vmem:[#allocation2 + $0x38] sm:$0xff] %v83
    %v92 = vld [vmem:[#allocation2] ss:$8 sm:$0xf]
    %v93 = vld [vmem:[#allocation2] ss:$8 sm:$0xf0]
    %v94 = vor.u32 %v92, %v93
    %v95 = vld [vmem:[%s2] sm:$0xff]
    %v96 = vld [vmem:[%s2 + $0x8] sm:$0xff]
    %v97 = vld [vmem:[%s2 + $0x10] sm:$0xff]
    %v98 = vld [vmem:[%s2 + $0x18] sm:$0xff]
    %v99 = vld [vmem:[%s2 + $0x20] sm:$0xff]
    %v100 = vld [vmem:[%s2 + $0x28] sm:$0xff]
    %v101 = vld [vmem:[%s2 + $0x30] sm:$0xff]
    %v102 = vld [vmem:[%s2 + $0x38] sm:$0xff]
    %v103 = vld [vmem:[%s2 + $0x40] sm:$0xff]
    %v104 = vld [vmem:[%s2 + $0x48] sm:$0xff]
    %v105 = vld [vmem:[%s2 + $0x50] sm:$0xff]
    %v106 = vld [vmem:[%s2 + $0x58] sm:$0xff]
    %v107 = vld [vmem:[%s2 + $0x60] sm:$0xff]
    %v108 = vld [vmem:[%s2 + $0x68] sm:$0xff]
    %v109 = vld [vmem:[%s2 + $0x70] sm:$0xff]
    %v110 = vld [vmem:[%s2 + $0x78] sm:$0xff]
    %v111 = vld [vmem:[%s2 + $0x80] sm:$0xff]
    %v112 = vld [vmem:[%s2 + $0x88] sm:$0xff]
    %v113 = vld [vmem:[%s2 + $0x90] sm:$0xff]
    %v114 = vld [vmem:[%s2 + $0x98] sm:$0xff]
    %v115 = vld [vmem:[%s2 + $0xa0] sm:$0xff]
    %v116 = vld [vmem:[%s2 + $0xa8] sm:$0xff]
    %v117 = vld [vmem:[%s2 + $0xb0] sm:$0xff]
    %v118 = vld [vmem:[%s2 + $0xb8] sm:$0xff]
    %v119 = vld [vmem:[%s2 + $0xc0] sm:$0xff]
    %v120 = vld [vmem:[%s2 + $0xc8] sm:$0xff]
    %v121 = vld [vmem:[%s2 + $0xd0] sm:$0xff]
    %v122 = vld [vmem:[%s2 + $0xd8] sm:$0xff]
    %v123 = vld [vmem:[%s2 + $0xe0] sm:$0xff]
    %v124 = vld [vmem:[%s2 + $0xe8] sm:$0xff]
    %v125 = vld [vmem:[%s2 + $0xf0] sm:$0xff]
    %v126 = vld [vmem:[%s2 + $0xf8] sm:$0xff]
    %v127 = vld [vmem:[%s2 + $0x100] sm:$0xff]
    %v128 = vld [vmem:[%s2 + $0x108] sm:$0xff]
    %v129 = vld [vmem:[%s2 + $0x110] sm:$0xff]
    %v130 = vld [vmem:[%s2 + $0x118] sm:$0xff]
    %v131 = vld [vmem:[%s2 + $0x120] sm:$0xff]
    %v132 = vld [vmem:[%s2 + $0x128] sm:$0xff]
    %v133 = vld [vmem:[%s2 + $0x130] sm:$0xff]
    %v134 = vld [vmem:[%s2 + $0x138] sm:$0xff]
    %v135 = vld [vmem:[%s2 + $0x140] sm:$0xff]
    %v136 = vld [vmem:[%s2 + $0x148] sm:$0xff]
    %v137 = vld [vmem:[%s2 + $0x150] sm:$0xff]
    %v138 = vld [vmem:[%s2 + $0x158] sm:$0xff]
    %v139 = vld [vmem:[%s2 + $0x160] sm:$0xff]
    %v140 = vld [vmem:[%s2 + $0x168] sm:$0xff]
    %v141 = vld [vmem:[%s2 + $0x170] sm:$0xff]
    %v142 = vld [vmem:[%s2 + $0x178] sm:$0xff]
    %v143 = vld [vmem:[%s2 + $0x180] sm:$0xff]
    %v144 = vld [vmem:[%s2 + $0x188] sm:$0xff]
    %v145 = vld [vmem:[%s2 + $0x190] sm:$0xff]
    %v146 = vld [vmem:[%s2 + $0x198] sm:$0xff]
    %v147 = vld [vmem:[%s2 + $0x1a0] sm:$0xff]
    %v148 = vld [vmem:[%s2 + $0x1a8] sm:$0xff]
    %v149 = vld [vmem:[%s2 + $0x1b0] sm:$0xff]
    %v150 = vld [vmem:[%s2 + $0x1b8] sm:$0xff]
    %v151 = vld [vmem:[%s2 + $0x1c0] sm:$0xff]
    %v152 = vld [vmem:[%s2 + $0x1c8] sm:$0xff]
    %v153 = vld [vmem:[%s2 + $0x1d0] sm:$0xff]
    %v154 = vld [vmem:[%s2 + $0x1d8] sm:$0xff]
    %v155 = vld [vmem:[%s2 + $0x1e0] sm:$0xff]
    %v156 = vld [vmem:[%s2 + $0x1e8] sm:$0xff]
    %v157 = vld [vmem:[%s2 + $0x1f0] sm:$0xff]
    %v158 = vld [vmem:[%s2 + $0x1f8] sm:$0xff]
    %v159 = vld [vmem:[%s2 + $0x200] sm:$0xff]
    %v160 = vld [vmem:[%s2 + $0x208] sm:$0xff]
    %v161 = vld [vmem:[%s2 + $0x210] sm:$0xff]
    %v162 = vld [vmem:[%s2 + $0x218] sm:$0xff]
    %v163 = vld [vmem:[%s2 + $0x220] sm:$0xff]
    %v164 = vld [vmem:[%s2 + $0x228] sm:$0xff]
    %v165 = vld [vmem:[%s2 + $0x230] sm:$0xff]
    %v166 = vld [vmem:[%s2 + $0x238] sm:$0xff]
    %v167 = vld [vmem:[%s2 + $0x240] sm:$0xff]
    %v168 = vld [vmem:[%s2 + $0x248] sm:$0xff]
    %v169 = vld [vmem:[%s2 + $0x250] sm:$0xff]
    %v170 = vld [vmem:[%s2 + $0x258] sm:$0xff]
    %v171 = vld [vmem:[%s2 + $0x260] sm:$0xff]
    %v172 = vld [vmem:[%s2 + $0x268] sm:$0xff]
    %v173 = vld [vmem:[%s2 + $0x270] sm:$0xff]
    %v174 = vld [vmem:[%s2 + $0x278] sm:$0xff]
    %v175 = vld [vmem:[%s2 + $0x280] sm:$0xff]
    %v176 = vld [vmem:[%s2 + $0x288] sm:$0xff]
    %v177 = vld [vmem:[%s2 + $0x290] sm:$0xff]
    %v178 = vld [vmem:[%s2 + $0x298] sm:$0xff]
    %v179 = vld [vmem:[%s2 + $0x2a0] sm:$0xff]
    %v180 = vld [vmem:[%s2 + $0x2a8] sm:$0xff]
    %v181 = vld [vmem:[%s2 + $0x2b0] sm:$0xff]
    %v182 = vld [vmem:[%s2 + $0x2b8] sm:$0xff]
    %v183 = vld [vmem:[%s2 + $0x2c0] sm:$0xff]
    %v184 = vld [vmem:[%s2 + $0x2c8] sm:$0xff]
    %v185 = vld [vmem:[%s2 + $0x2d0] sm:$0xff]
    %v186 = vld [vmem:[%s2 + $0x2d8] sm:$0xff]
    %v187 = vld [vmem:[%s2 + $0x2e0] sm:$0xff]
    %v188 = vld [vmem:[%s2 + $0x2e8] sm:$0xff]
    %v189 = vld [vmem:[%s2 + $0x2f0] sm:$0xff]
    %v190 = vld [vmem:[%s2 + $0x2f8] sm:$0xff]
    %v191 = vld [vmem:[%s2 + $0x300] sm:$0xff]
    %v192 = vld [vmem:[%s2 + $0x308] sm:$0xff]
    %v193 = vld [vmem:[%s2 + $0x310] sm:$0xff]
    %v194 = vld [vmem:[%s2 + $0x318] sm:$0xff]
    %v195 = vld [vmem:[%s2 + $0x320] sm:$0xff]
    %v196 = vld [vmem:[%s2 + $0x328] sm:$0xff]
    %v197 = vld [vmem:[%s2 + $0x330] sm:$0xff]
    %v198 = vld [vmem:[%s2 + $0x338] sm:$0xff]
    %v199 = vld [vmem:[%s2 + $0x340] sm:$0xff]
    %v200 = vld [vmem:[%s2 + $0x348] sm:$0xff]
    %v201 = vld [vmem:[%s2 + $0x350] sm:$0xff]
    %v202 = vld [vmem:[%s2 + $0x358] sm:$0xff]
    %v203 = vld [vmem:[%s2 + $0x360] sm:$0xff]
    %v204 = vld [vmem:[%s2 + $0x368] sm:$0xff]
    %v205 = vld [vmem:[%s2 + $0x370] sm:$0xff]
    %v206 = vld [vmem:[%s2 + $0x378] sm:$0xff]
    %v207 = vld [vmem:[%s2 + $0x380] sm:$0xff]
    %v208 = vld [vmem:[%s2 + $0x388] sm:$0xff]
    %v209 = vld [vmem:[%s2 + $0x390] sm:$0xff]
    %v210 = vld [vmem:[%s2 + $0x398] sm:$0xff]
    %v211 = vld [vmem:[%s2 + $0x3a0] sm:$0xff]
    %v212 = vld [vmem:[%s2 + $0x3a8] sm:$0xff]
    %v213 = vld [vmem:[%s2 + $0x3b0] sm:$0xff]
    %v214 = vld [vmem:[%s2 + $0x3b8] sm:$0xff]
    %v215 = vld [vmem:[%s2 + $0x3c0] sm:$0xff]
    %v216 = vld [vmem:[%s2 + $0x3c8] sm:$0xff]
    %v217 = vld [vmem:[%s2 + $0x3d0] sm:$0xff]
    %v218 = vld [vmem:[%s2 + $0x3d8] sm:$0xff]
    %v219 = vld [vmem:[%s2 + $0x3e0] sm:$0xff]
    %v220 = vld [vmem:[%s2 + $0x3e8] sm:$0xff]
    %v221 = vld [vmem:[%s2 + $0x3f0] sm:$0xff]
    %v222 = vld [vmem:[%s2 + $0x3f8] sm:$0xff]
    %v351 = vunpack.c.l.b16 %v95
    %v352 = vunpack.c.h.b16 %v95
    %v353 = vunpack.c.l.b16 %v96
    %v354 = vunpack.c.h.b16 %v96
    %v355 = vunpack.c.l.b16 %v97
    %v356 = vunpack.c.h.b16 %v97
    %v357 = vunpack.c.l.b16 %v98
    %v358 = vunpack.c.h.b16 %v98
    %v359 = vunpack.c.l.b16 %v99
    %v360 = vunpack.c.h.b16 %v99
    %v361 = vunpack.c.l.b16 %v100
    %v362 = vunpack.c.h.b16 %v100
    %v363 = vunpack.c.l.b16 %v101
    %v364 = vunpack.c.h.b16 %v101
    %v365 = vunpack.c.l.b16 %v102
    %v366 = vunpack.c.h.b16 %v102
    %v367 = vunpack.c.l.b16 %v103
    %v368 = vunpack.c.h.b16 %v103
    %v369 = vunpack.c.l.b16 %v104
    %v370 = vunpack.c.h.b16 %v104
    %v371 = vunpack.c.l.b16 %v105
    %v372 = vunpack.c.h.b16 %v105
    %v373 = vunpack.c.l.b16 %v106
    %v374 = vunpack.c.h.b16 %v106
    %v375 = vunpack.c.l.b16 %v107
    %v376 = vunpack.c.h.b16 %v107
    %v377 = vunpack.c.l.b16 %v108
    %v378 = vunpack.c.h.b16 %v108
    %v379 = vunpack.c.l.b16 %v109
    %v380 = vunpack.c.h.b16 %v109
    %v381 = vunpack.c.l.b16 %v110
    %v382 = vunpack.c.h.b16 %v110
    %v383 = vunpack.c.l.b16 %v111
    %v384 = vunpack.c.h.b16 %v111
    %v385 = vunpack.c.l.b16 %v112
    %v386 = vunpack.c.h.b16 %v112
    %v387 = vunpack.c.l.b16 %v113
    %v388 = vunpack.c.h.b16 %v113
    %v389 = vunpack.c.l.b16 %v114
    %v390 = vunpack.c.h.b16 %v114
    %v391 = vunpack.c.l.b16 %v115
    %v392 = vunpack.c.h.b16 %v115
    %v393 = vunpack.c.l.b16 %v116
    %v394 = vunpack.c.h.b16 %v116
    %v395 = vunpack.c.l.b16 %v117
    %v396 = vunpack.c.h.b16 %v117
    %v397 = vunpack.c.l.b16 %v118
    %v398 = vunpack.c.h.b16 %v118
    %v399 = vunpack.c.l.b16 %v119
    %v400 = vunpack.c.h.b16 %v119
    %v401 = vunpack.c.l.b16 %v120
    %v402 = vunpack.c.h.b16 %v120
    %v403 = vunpack.c.l.b16 %v121
    %v404 = vunpack.c.h.b16 %v121
    %v405 = vunpack.c.l.b16 %v122
    %v406 = vunpack.c.h.b16 %v122
    %v407 = vunpack.c.l.b16 %v123
    %v408 = vunpack.c.h.b16 %v123
    %v409 = vunpack.c.l.b16 %v124
    %v410 = vunpack.c.h.b16 %v124
    %v411 = vunpack.c.l.b16 %v125
    %v412 = vunpack.c.h.b16 %v125
    %v413 = vunpack.c.l.b16 %v126
    %v414 = vunpack.c.h.b16 %v126
    %v415 = vunpack.c.l.b16 %v127
    %v416 = vunpack.c.h.b16 %v127
    %v417 = vunpack.c.l.b16 %v128
    %v418 = vunpack.c.h.b16 %v128
    %v419 = vunpack.c.l.b16 %v129
    %v420 = vunpack.c.h.b16 %v129
    %v421 = vunpack.c.l.b16 %v130
    %v422 = vunpack.c.h.b16 %v130
    %v423 = vunpack.c.l.b16 %v131
    %v424 = vunpack.c.h.b16 %v131
    %v425 = vunpack.c.l.b16 %v132
    %v426 = vunpack.c.h.b16 %v132
    %v427 = vunpack.c.l.b16 %v133
    %v428 = vunpack.c.h.b16 %v133
    %v429 = vunpack.c.l.b16 %v134
    %v430 = vunpack.c.h.b16 %v134
    %v431 = vunpack.c.l.b16 %v135
    %v432 = vunpack.c.h.b16 %v135
    %v433 = vunpack.c.l.b16 %v136
    %v434 = vunpack.c.h.b16 %v136
    %v435 = vunpack.c.l.b16 %v137
    %v436 = vunpack.c.h.b16 %v137
    %v437 = vunpack.c.l.b16 %v138
    %v438 = vunpack.c.h.b16 %v138
    %v439 = vunpack.c.l.b16 %v139
    %v440 = vunpack.c.h.b16 %v139
    %v441 = vunpack.c.l.b16 %v140
    %v442 = vunpack.c.h.b16 %v140
    %v443 = vunpack.c.l.b16 %v141
    %v444 = vunpack.c.h.b16 %v141
    %v445 = vunpack.c.l.b16 %v142
    %v446 = vunpack.c.h.b16 %v142
    %v447 = vunpack.c.l.b16 %v143
    %v448 = vunpack.c.h.b16 %v143
    %v449 = vunpack.c.l.b16 %v144
    %v450 = vunpack.c.h.b16 %v144
    %v451 = vunpack.c.l.b16 %v145
    %v452 = vunpack.c.h.b16 %v145
    %v453 = vunpack.c.l.b16 %v146
    %v454 = vunpack.c.h.b16 %v146
    %v455 = vunpack.c.l.b16 %v147
    %v456 = vunpack.c.h.b16 %v147
    %v457 = vunpack.c.l.b16 %v148
    %v458 = vunpack.c.h.b16 %v148
    %v459 = vunpack.c.l.b16 %v149
    %v460 = vunpack.c.h.b16 %v149
    %v461 = vunpack.c.l.b16 %v150
    %v462 = vunpack.c.h.b16 %v150
    %v463 = vunpack.c.l.b16 %v151
    %v464 = vunpack.c.h.b16 %v151
    %v465 = vunpack.c.l.b16 %v152
    %v466 = vunpack.c.h.b16 %v152
    %v467 = vunpack.c.l.b16 %v153
    %v468 = vunpack.c.h.b16 %v153
    %v469 = vunpack.c.l.b16 %v154
    %v470 = vunpack.c.h.b16 %v154
    %v471 = vunpack.c.l.b16 %v155
    %v472 = vunpack.c.h.b16 %v155
    %v473 = vunpack.c.l.b16 %v156
    %v474 = vunpack.c.h.b16 %v156
    %v475 = vunpack.c.l.b16 %v157
    %v476 = vunpack.c.h.b16 %v157
    %v477 = vunpack.c.l.b16 %v158
    %v478 = vunpack.c.h.b16 %v158
    %v479 = vunpack.c.l.b16 %v159
    %v480 = vunpack.c.h.b16 %v159
    %v481 = vunpack.c.l.b16 %v160
    %v482 = vunpack.c.h.b16 %v160
    %v483 = vunpack.c.l.b16 %v161
    %v484 = vunpack.c.h.b16 %v161
    %v485 = vunpack.c.l.b16 %v162
    %v486 = vunpack.c.h.b16 %v162
    %v487 = vunpack.c.l.b16 %v163
    %v488 = vunpack.c.h.b16 %v163
    %v489 = vunpack.c.l.b16 %v164
    %v490 = vunpack.c.h.b16 %v164
    %v491 = vunpack.c.l.b16 %v165
    %v492 = vunpack.c.h.b16 %v165
    %v493 = vunpack.c.l.b16 %v166
    %v494 = vunpack.c.h.b16 %v166
    %v495 = vunpack.c.l.b16 %v167
    %v496 = vunpack.c.h.b16 %v167
    %v497 = vunpack.c.l.b16 %v168
    %v498 = vunpack.c.h.b16 %v168
    %v499 = vunpack.c.l.b16 %v169
    %v500 = vunpack.c.h.b16 %v169
    %v501 = vunpack.c.l.b16 %v170
    %v502 = vunpack.c.h.b16 %v170
    %v503 = vunpack.c.l.b16 %v171
    %v504 = vunpack.c.h.b16 %v171
    %v505 = vunpack.c.l.b16 %v172
    %v506 = vunpack.c.h.b16 %v172
    %v507 = vunpack.c.l.b16 %v173
    %v508 = vunpack.c.h.b16 %v173
    %v509 = vunpack.c.l.b16 %v174
    %v510 = vunpack.c.h.b16 %v174
    %v511 = vunpack.c.l.b16 %v175
    %v512 = vunpack.c.h.b16 %v175
    %v513 = vunpack.c.l.b16 %v176
    %v514 = vunpack.c.h.b16 %v176
    %v515 = vunpack.c.l.b16 %v177
    %v516 = vunpack.c.h.b16 %v177
    %v517 = vunpack.c.l.b16 %v178
    %v518 = vunpack.c.h.b16 %v178
    %v519 = vunpack.c.l.b16 %v179
    %v520 = vunpack.c.h.b16 %v179
    %v521 = vunpack.c.l.b16 %v180
    %v522 = vunpack.c.h.b16 %v180
    %v523 = vunpack.c.l.b16 %v181
    %v524 = vunpack.c.h.b16 %v181
    %v525 = vunpack.c.l.b16 %v182
    %v526 = vunpack.c.h.b16 %v182
    %v527 = vunpack.c.l.b16 %v183
    %v528 = vunpack.c.h.b16 %v183
    %v529 = vunpack.c.l.b16 %v184
    %v530 = vunpack.c.h.b16 %v184
    %v531 = vunpack.c.l.b16 %v185
    %v532 = vunpack.c.h.b16 %v185
    %v533 = vunpack.c.l.b16 %v186
    %v534 = vunpack.c.h.b16 %v186
    %v535 = vunpack.c.l.b16 %v187
    %v536 = vunpack.c.h.b16 %v187
    %v537 = vunpack.c.l.b16 %v188
    %v538 = vunpack.c.h.b16 %v188
    %v539 = vunpack.c.l.b16 %v189
    %v540 = vunpack.c.h.b16 %v189
    %v541 = vunpack.c.l.b16 %v190
    %v542 = vunpack.c.h.b16 %v190
    %v543 = vunpack.c.l.b16 %v191
    %v544 = vunpack.c.h.b16 %v191
    %v545 = vunpack.c.l.b16 %v192
    %v546 = vunpack.c.h.b16 %v192
    %v547 = vunpack.c.l.b16 %v193
    %v548 = vunpack.c.h.b16 %v193
    %v549 = vunpack.c.l.b16 %v194
    %v550 = vunpack.c.h.b16 %v194
    %v551 = vunpack.c.l.b16 %v195
    %v552 = vunpack.c.h.b16 %v195
    %v553 = vunpack.c.l.b16 %v196
    %v554 = vunpack.c.h.b16 %v196
    %v555 = vunpack.c.l.b16 %v197
    %v556 = vunpack.c.h.b16 %v197
    %v557 = vunpack.c.l.b16 %v198
    %v558 = vunpack.c.h.b16 %v198
    %v559 = vunpack.c.l.b16 %v199
    %v560 = vunpack.c.h.b16 %v199
    %v561 = vunpack.c.l.b16 %v200
    %v562 = vunpack.c.h.b16 %v200
    %v563 = vunpack.c.l.b16 %v201
    %v564 = vunpack.c.h.b16 %v201
    %v565 = vunpack.c.l.b16 %v202
    %v566 = vunpack.c.h.b16 %v202
    %v567 = vunpack.c.l.b16 %v203
    %v568 = vunpack.c.h.b16 %v203
    %v569 = vunpack.c.l.b16 %v204
    %v570 = vunpack.c.h.b16 %v204
    %v571 = vunpack.c.l.b16 %v205
    %v572 = vunpack.c.h.b16 %v205
    %v573 = vunpack.c.l.b16 %v206
    %v574 = vunpack.c.h.b16 %v206
    %v575 = vunpack.c.l.b16 %v207
    %v576 = vunpack.c.h.b16 %v207
    %v577 = vunpack.c.l.b16 %v208
    %v578 = vunpack.c.h.b16 %v208
    %v579 = vunpack.c.l.b16 %v209
    %v580 = vunpack.c.h.b16 %v209
    %v581 = vunpack.c.l.b16 %v210
    %v582 = vunpack.c.h.b16 %v210
    %v583 = vunpack.c.l.b16 %v211
    %v584 = vunpack.c.h.b16 %v211
    %v585 = vunpack.c.l.b16 %v212
    %v586 = vunpack.c.h.b16 %v212
    %v587 = vunpack.c.l.b16 %v213
    %v588 = vunpack.c.h.b16 %v213
    %v589 = vunpack.c.l.b16 %v214
    %v590 = vunpack.c.h.b16 %v214
    %v591 = vunpack.c.l.b16 %v215
    %v592 = vunpack.c.h.b16 %v215
    %v593 = vunpack.c.l.b16 %v216
    %v594 = vunpack.c.h.b16 %v216
    %v595 = vunpack.c.l.b16 %v217
    %v596 = vunpack.c.h.b16 %v217
    %v597 = vunpack.c.l.b16 %v218
    %v598 = vunpack.c.h.b16 %v218
    %v599 = vunpack.c.l.b16 %v219
    %v600 = vunpack.c.h.b16 %v219
    %v601 = vunpack.c.l.b16 %v220
    %v602 = vunpack.c.h.b16 %v220
    %v603 = vunpack.c.l.b16 %v221
    %v604 = vunpack.c.h.b16 %v221
    %v605 = vunpack.c.l.b16 %v222
    %v606 = vunpack.c.h.b16 %v222
    %v607 = vpack.c.b16 %v359, %v351
    %v608 = vpack.c.b16 %v360, %v352
    %v609 = vpack.c.b16 %v361, %v353
    %v610 = vpack.c.b16 %v362, %v354
    %v611 = vpack.c.b16 %v363, %v355
    %v612 = vpack.c.b16 %v364, %v356
    %v613 = vpack.c.b16 %v365, %v357
    %v614 = vpack.c.b16 %v366, %v358
    %v615 = vpack.c.b16 %v375, %v367
    %v616 = vpack.c.b16 %v376, %v368
    %v617 = vpack.c.b16 %v377, %v369
    %v618 = vpack.c.b16 %v378, %v370
    %v619 = vpack.c.b16 %v379, %v371
    %v620 = vpack.c.b16 %v380, %v372
    %v621 = vpack.c.b16 %v381, %v373
    %v622 = vpack.c.b16 %v382, %v374
    %v623 = vpack.c.b16 %v391, %v383
    %v624 = vpack.c.b16 %v392, %v384
    %v625 = vpack.c.b16 %v393, %v385
    %v626 = vpack.c.b16 %v394, %v386
    %v627 = vpack.c.b16 %v395, %v387
    %v628 = vpack.c.b16 %v396, %v388
    %v629 = vpack.c.b16 %v397, %v389
    %v630 = vpack.c.b16 %v398, %v390
    %v631 = vpack.c.b16 %v407, %v399
    %v632 = vpack.c.b16 %v408, %v400
    %v633 = vpack.c.b16 %v409, %v401
    %v634 = vpack.c.b16 %v410, %v402
    %v635 = vpack.c.b16 %v411, %v403
    %v636 = vpack.c.b16 %v412, %v404
    %v637 = vpack.c.b16 %v413, %v405
    %v638 = vpack.c.b16 %v414, %v406
    %v639 = vpack.c.b16 %v423, %v415
    %v640 = vpack.c.b16 %v424, %v416
    %v641 = vpack.c.b16 %v425, %v417
    %v642 = vpack.c.b16 %v426, %v418
    %v643 = vpack.c.b16 %v427, %v419
    %v644 = vpack.c.b16 %v428, %v420
    %v645 = vpack.c.b16 %v429, %v421
    %v646 = vpack.c.b16 %v430, %v422
    %v647 = vpack.c.b16 %v439, %v431
    %v648 = vpack.c.b16 %v440, %v432
    %v649 = vpack.c.b16 %v441, %v433
    %v650 = vpack.c.b16 %v442, %v434
    %v651 = vpack.c.b16 %v443, %v435
    %v652 = vpack.c.b16 %v444, %v436
    %v653 = vpack.c.b16 %v445, %v437
    %v654 = vpack.c.b16 %v446, %v438
    %v655 = vpack.c.b16 %v455, %v447
    %v656 = vpack.c.b16 %v456, %v448
    %v657 = vpack.c.b16 %v457, %v449
    %v658 = vpack.c.b16 %v458, %v450
    %v659 = vpack.c.b16 %v459, %v451
    %v660 = vpack.c.b16 %v460, %v452
    %v661 = vpack.c.b16 %v461, %v453
    %v662 = vpack.c.b16 %v462, %v454
    %v663 = vpack.c.b16 %v471, %v463
    %v664 = vpack.c.b16 %v472, %v464
    %v665 = vpack.c.b16 %v473, %v465
    %v666 = vpack.c.b16 %v474, %v466
    %v667 = vpack.c.b16 %v475, %v467
    %v668 = vpack.c.b16 %v476, %v468
    %v669 = vpack.c.b16 %v477, %v469
    %v670 = vpack.c.b16 %v478, %v470
    %v671 = vpack.c.b16 %v487, %v479
    %v672 = vpack.c.b16 %v488, %v480
    %v673 = vpack.c.b16 %v489, %v481
    %v674 = vpack.c.b16 %v490, %v482
    %v675 = vpack.c.b16 %v491, %v483
    %v676 = vpack.c.b16 %v492, %v484
    %v677 = vpack.c.b16 %v493, %v485
    %v678 = vpack.c.b16 %v494, %v486
    %v679 = vpack.c.b16 %v503, %v495
    %v680 = vpack.c.b16 %v504, %v496
    %v681 = vpack.c.b16 %v505, %v497
    %v682 = vpack.c.b16 %v506, %v498
    %v683 = vpack.c.b16 %v507, %v499
    %v684 = vpack.c.b16 %v508, %v500
    %v685 = vpack.c.b16 %v509, %v501
    %v686 = vpack.c.b16 %v510, %v502
    %v687 = vpack.c.b16 %v519, %v511
    %v688 = vpack.c.b16 %v520, %v512
    %v689 = vpack.c.b16 %v521, %v513
    %v690 = vpack.c.b16 %v522, %v514
    %v691 = vpack.c.b16 %v523, %v515
    %v692 = vpack.c.b16 %v524, %v516
    %v693 = vpack.c.b16 %v525, %v517
    %v694 = vpack.c.b16 %v526, %v518
    %v695 = vpack.c.b16 %v535, %v527
    %v696 = vpack.c.b16 %v536, %v528
    %v697 = vpack.c.b16 %v537, %v529
    %v698 = vpack.c.b16 %v538, %v530
    %v699 = vpack.c.b16 %v539, %v531
    %v700 = vpack.c.b16 %v540, %v532
    %v701 = vpack.c.b16 %v541, %v533
    %v702 = vpack.c.b16 %v542, %v534
    %v703 = vpack.c.b16 %v551, %v543
    %v704 = vpack.c.b16 %v552, %v544
    %v705 = vpack.c.b16 %v553, %v545
    %v706 = vpack.c.b16 %v554, %v546
    %v707 = vpack.c.b16 %v555, %v547
    %v708 = vpack.c.b16 %v556, %v548
    %v709 = vpack.c.b16 %v557, %v549
    %v710 = vpack.c.b16 %v558, %v550
    %v711 = vpack.c.b16 %v567, %v559
    %v712 = vpack.c.b16 %v568, %v560
    %v713 = vpack.c.b16 %v569, %v561
    %v714 = vpack.c.b16 %v570, %v562
    %v715 = vpack.c.b16 %v571, %v563
    %v716 = vpack.c.b16 %v572, %v564
    %v717 = vpack.c.b16 %v573, %v565
    %v718 = vpack.c.b16 %v574, %v566
    %v719 = vpack.c.b16 %v583, %v575
    %v720 = vpack.c.b16 %v584, %v576
    %v721 = vpack.c.b16 %v585, %v577
    %v722 = vpack.c.b16 %v586, %v578
    %v723 = vpack.c.b16 %v587, %v579
    %v724 = vpack.c.b16 %v588, %v580
    %v725 = vpack.c.b16 %v589, %v581
    %v726 = vpack.c.b16 %v590, %v582
    %v727 = vpack.c.b16 %v599, %v591
    %v728 = vpack.c.b16 %v600, %v592
    %v729 = vpack.c.b16 %v601, %v593
    %v730 = vpack.c.b16 %v602, %v594
    %v731 = vpack.c.b16 %v603, %v595
    %v732 = vpack.c.b16 %v604, %v596
    %v733 = vpack.c.b16 %v605, %v597
    %v734 = vpack.c.b16 %v606, %v598
    %863 = vmatpush.bf16.msra.mxu0 %v663
    %864 = vmatpush.bf16.msra.mxu0 %v655
    %865 = vmatpush.bf16.msra.mxu0 %v647
    %866 = vmatpush.bf16.msra.mxu0 %v639
    %867 = vmatpush.bf16.msra.mxu0 %v631
    %868 = vmatpush.bf16.msra.mxu0 %v623
    %869 = vmatpush.bf16.msra.mxu0 %v615
    %870 = vmatpush.bf16.msra.mxu0 %v607
    %871 = vmatmul.bf16.gmra.mxu0 0
    %v872 = vpop.f32.mrf.mxu0
    %v873 = vadd.f32 0.0, %v872
    %v874 = vpop.f32.mrf.mxu0
    %875 = vdwg.mxu0
    %876 = vmatpush.bf16.msra.mxu0 %v727
    %877 = vmatpush.bf16.msra.mxu0 %v719
    %878 = vmatpush.bf16.msra.mxu0 %v711
    %879 = vmatpush.bf16.msra.mxu0 %v703
    %880 = vmatpush.bf16.msra.mxu0 %v695
    %881 = vmatpush.bf16.msra.mxu0 %v687
    %882 = vmatpush.bf16.msra.mxu0 %v679
    %883 = vmatpush.bf16.msra.mxu0 %v671
    %884 = vmatmul.bf16.gmra.mxu0 0
    %v885 = vpop.f32.mrf.mxu0
    %v886 = vadd.f32 %v873, %v885
    %v887 = vpop.f32.mrf.mxu0
    %888 = vdwg.mxu0
    %889 = vmatpush.bf16.msra.mxu0 %v664
    %890 = vmatpush.bf16.msra.mxu0 %v656
    %891 = vmatpush.bf16.msra.mxu0 %v648
    %892 = vmatpush.bf16.msra.mxu0 %v640
    %893 = vmatpush.bf16.msra.mxu0 %v632
    %894 = vmatpush.bf16.msra.mxu0 %v624
    %895 = vmatpush.bf16.msra.mxu0 %v616
    %896 = vmatpush.bf16.msra.mxu0 %v608
    %897 = vmatmul.bf16.gmra.mxu0 0
    %v898 = vpop.f32.mrf.mxu0
    %v899 = vadd.f32 0.0, %v898
    %v900 = vpop.f32.mrf.mxu0
    %901 = vdwg.mxu0
    %902 = vmatpush.bf16.msra.mxu0 %v728
    %903 = vmatpush.bf16.msra.mxu0 %v720
    %904 = vmatpush.bf16.msra.mxu0 %v712
    %905 = vmatpush.bf16.msra.mxu0 %v704
    %906 = vmatpush.bf16.msra.mxu0 %v696
    %907 = vmatpush.bf16.msra.mxu0 %v688
    %908 = vmatpush.bf16.msra.mxu0 %v680
    %909 = vmatpush.bf16.msra.mxu0 %v672
    %910 = vmatmul.bf16.gmra.mxu0 0
    %v911 = vpop.f32.mrf.mxu0
    %v912 = vadd.f32 %v899, %v911
    %v913 = vpop.f32.mrf.mxu0
    %914 = vdwg.mxu0
    %915 = vmatpush.bf16.msra.mxu0 %v665
    %916 = vmatpush.bf16.msra.mxu0 %v657
    %917 = vmatpush.bf16.msra.mxu0 %v649
    %918 = vmatpush.bf16.msra.mxu0 %v641
    %919 = vmatpush.bf16.msra.mxu0 %v633
    %920 = vmatpush.bf16.msra.mxu0 %v625
    %921 = vmatpush.bf16.msra.mxu0 %v617
    %922 = vmatpush.bf16.msra.mxu0 %v609
    %923 = vmatmul.bf16.gmra.mxu0 0
    %v924 = vpop.f32.mrf.mxu0
    %v925 = vadd.f32 0.0, %v924
    %v926 = vpop.f32.mrf.mxu0
    %927 = vdwg.mxu0
    %928 = vmatpush.bf16.msra.mxu0 %v729
    %929 = vmatpush.bf16.msra.mxu0 %v721
    %930 = vmatpush.bf16.msra.mxu0 %v713
    %931 = vmatpush.bf16.msra.mxu0 %v705
    %932 = vmatpush.bf16.msra.mxu0 %v697
    %933 = vmatpush.bf16.msra.mxu0 %v689
    %934 = vmatpush.bf16.msra.mxu0 %v681
    %935 = vmatpush.bf16.msra.mxu0 %v673
    %936 = vmatmul.bf16.gmra.mxu0 0
    %v937 = vpop.f32.mrf.mxu0
    %v938 = vadd.f32 %v925, %v937
    %v939 = vpop.f32.mrf.mxu0
    %940 = vdwg.mxu0
    %941 = vmatpush.bf16.msra.mxu0 %v666
    %942 = vmatpush.bf16.msra.mxu0 %v658
    %943 = vmatpush.bf16.msra.mxu0 %v650
    %944 = vmatpush.bf16.msra.mxu0 %v642
    %945 = vmatpush.bf16.msra.mxu0 %v634
    %946 = vmatpush.bf16.msra.mxu0 %v626
    %947 = vmatpush.bf16.msra.mxu0 %v618
    %948 = vmatpush.bf16.msra.mxu0 %v610
    %949 = vmatmul.bf16.gmra.mxu0 0
    %v950 = vpop.f32.mrf.mxu0
    %v951 = vadd.f32 0.0, %v950
    %v952 = vpop.f32.mrf.mxu0
    %953 = vdwg.mxu0
    %954 = vmatpush.bf16.msra.mxu0 %v730
    %955 = vmatpush.bf16.msra.mxu0 %v722
    %956 = vmatpush.bf16.msra.mxu0 %v714
    %957 = vmatpush.bf16.msra.mxu0 %v706
    %958 = vmatpush.bf16.msra.mxu0 %v698
    %959 = vmatpush.bf16.msra.mxu0 %v690
    %960 = vmatpush.bf16.msra.mxu0 %v682
    %961 = vmatpush.bf16.msra.mxu0 %v674
    %962 = vmatmul.bf16.gmra.mxu0 0
    %v963 = vpop.f32.mrf.mxu0
    %v964 = vadd.f32 %v951, %v963
    %v965 = vpop.f32.mrf.mxu0
    %966 = vdwg.mxu0
    %967 = vmatpush.bf16.msra.mxu0 %v667
    %968 = vmatpush.bf16.msra.mxu0 %v659
    %969 = vmatpush.bf16.msra.mxu0 %v651
    %970 = vmatpush.bf16.msra.mxu0 %v643
    %971 = vmatpush.bf16.msra.mxu0 %v635
    %972 = vmatpush.bf16.msra.mxu0 %v627
    %973 = vmatpush.bf16.msra.mxu0 %v619
    %974 = vmatpush.bf16.msra.mxu0 %v611
    %975 = vmatmul.bf16.gmra.mxu0 0
    %v976 = vpop.f32.mrf.mxu0
    %v977 = vadd.f32 0.0, %v976
    %v978 = vpop.f32.mrf.mxu0
    %979 = vdwg.mxu0
    %980 = vmatpush.bf16.msra.mxu0 %v731
    %981 = vmatpush.bf16.msra.mxu0 %v723
    %982 = vmatpush.bf16.msra.mxu0 %v715
    %983 = vmatpush.bf16.msra.mxu0 %v707
    %984 = vmatpush.bf16.msra.mxu0 %v699
    %985 = vmatpush.bf16.msra.mxu0 %v691
    %986 = vmatpush.bf16.msra.mxu0 %v683
    %987 = vmatpush.bf16.msra.mxu0 %v675
    %988 = vmatmul.bf16.gmra.mxu0 0
    %v989 = vpop.f32.mrf.mxu0
    %v990 = vadd.f32 %v977, %v989
    %v991 = vpop.f32.mrf.mxu0
    %992 = vdwg.mxu0
    %993 = vmatpush.bf16.msra.mxu0 %v668
    %994 = vmatpush.bf16.msra.mxu0 %v660
    %995 = vmatpush.bf16.msra.mxu0 %v652
    %996 = vmatpush.bf16.msra.mxu0 %v644
    %997 = vmatpush.bf16.msra.mxu0 %v636
    %998 = vmatpush.bf16.msra.mxu0 %v628
    %999 = vmatpush.bf16.msra.mxu0 %v620
    %1000 = vmatpush.bf16.msra.mxu0 %v612
    %1001 = vmatmul.bf16.gmra.mxu0 0
    %v1002 = vpop.f32.mrf.mxu0
    %v1003 = vadd.f32 0.0, %v1002
    %v1004 = vpop.f32.mrf.mxu0
    %1005 = vdwg.mxu0
    %1006 = vmatpush.bf16.msra.mxu0 %v732
    %1007 = vmatpush.bf16.msra.mxu0 %v724
    %1008 = vmatpush.bf16.msra.mxu0 %v716
    %1009 = vmatpush.bf16.msra.mxu0 %v708
    %1010 = vmatpush.bf16.msra.mxu0 %v700
    %1011 = vmatpush.bf16.msra.mxu0 %v692
    %1012 = vmatpush.bf16.msra.mxu0 %v684
    %1013 = vmatpush.bf16.msra.mxu0 %v676
    %1014 = vmatmul.bf16.gmra.mxu0 0
    %v1015 = vpop.f32.mrf.mxu0
    %v1016 = vadd.f32 %v1003, %v1015
    %v1017 = vpop.f32.mrf.mxu0
    %1018 = vdwg.mxu0
    %1019 = vmatpush.bf16.msra.mxu0 %v669
    %1020 = vmatpush.bf16.msra.mxu0 %v661
    %1021 = vmatpush.bf16.msra.mxu0 %v653
    %1022 = vmatpush.bf16.msra.mxu0 %v645
    %1023 = vmatpush.bf16.msra.mxu0 %v637
    %1024 = vmatpush.bf16.msra.mxu0 %v629
    %1025 = vmatpush.bf16.msra.mxu0 %v621
    %1026 = vmatpush.bf16.msra.mxu0 %v613
    %1027 = vmatmul.bf16.gmra.mxu0 0
    %v1028 = vpop.f32.mrf.mxu0
    %v1029 = vadd.f32 0.0, %v1028
    %v1030 = vpop.f32.mrf.mxu0
    %1031 = vdwg.mxu0
    %1032 = vmatpush.bf16.msra.mxu0 %v733
    %1033 = vmatpush.bf16.msra.mxu0 %v725
    %1034 = vmatpush.bf16.msra.mxu0 %v717
    %1035 = vmatpush.bf16.msra.mxu0 %v709
    %1036 = vmatpush.bf16.msra.mxu0 %v701
    %1037 = vmatpush.bf16.msra.mxu0 %v693
    %1038 = vmatpush.bf16.msra.mxu0 %v685
    %1039 = vmatpush.bf16.msra.mxu0 %v677
    %1040 = vmatmul.bf16.gmra.mxu0 0
    %v1041 = vpop.f32.mrf.mxu0
    %v1042 = vadd.f32 %v1029, %v1041
    %v1043 = vpop.f32.mrf.mxu0
    %1044 = vdwg.mxu0
    %1045 = vmatpush.bf16.msra.mxu0 %v670
    %1046 = vmatpush.bf16.msra.mxu0 %v662
    %1047 = vmatpush.bf16.msra.mxu0 %v654
    %1048 = vmatpush.bf16.msra.mxu0 %v646
    %1049 = vmatpush.bf16.msra.mxu0 %v638
    %1050 = vmatpush.bf16.msra.mxu0 %v630
    %1051 = vmatpush.bf16.msra.mxu0 %v622
    %1052 = vmatpush.bf16.msra.mxu0 %v614
    %1053 = vmatmul.bf16.gmra.mxu0 0
    %v1054 = vpop.f32.mrf.mxu0
    %v1055 = vadd.f32 0.0, %v1054
    %v1056 = vpop.f32.mrf.mxu0
    %1057 = vdwg.mxu0
    %1058 = vmatpush.bf16.msra.mxu0 %v734
    %1059 = vmatpush.bf16.msra.mxu0 %v726
    %1060 = vmatpush.bf16.msra.mxu0 %v718
    %1061 = vmatpush.bf16.msra.mxu0 %v710
    %1062 = vmatpush.bf16.msra.mxu0 %v702
    %1063 = vmatpush.bf16.msra.mxu0 %v694
    %1064 = vmatpush.bf16.msra.mxu0 %v686
    %1065 = vmatpush.bf16.msra.mxu0 %v678
    %1066 = vmatmul.bf16.gmra.mxu0 0
    %v1067 = vpop.f32.mrf.mxu0
    %v1068 = vadd.f32 %v1055, %v1067
    %v1069 = vpop.f32.mrf.mxu0
    %1070 = vdwg.mxu0
    %v1079 = vrot.slane %v912, 7
    %v1080 = vrot.slane %v938, 6
    %v1081 = vrot.slane %v964, 5
    %v1082 = vrot.slane %v990, 4
    %v1083 = vrot.slane %v1016, 3
    %v1084 = vrot.slane %v1042, 2
    %v1085 = vrot.slane %v1068, 1
    %vm1086 = vcmask 1040384
    %v1087 = vsel %vm1086, %v886, %v1079
    %vm1088 = vcmask 1042434
    %v1089 = vsel %vm1088, %v1080, %v1081
    %vm1090 = vcmask 1041408
    %v1091 = vsel %vm1090, %v1087, %v1089
    %vm1092 = vcmask 1044484
    %v1093 = vsel %vm1092, %v1082, %v1083
    %vm1094 = vcmask 1046534
    %v1095 = vsel %vm1094, %v1084, %v1085
    %vm1096 = vcmask 1045508
    %v1097 = vsel %vm1096, %v1093, %v1095
    %vm1098 = vcmask 1043456
    %v1099 = vsel %vm1098, %v1091, %v1097
    %v1101 = vadd.f32 %v94, %v1099
    %v1102 = vsub.f32 0.0, %v1101
    %v1103 = vmul.f32 %v1102, 1.442695
    %v1104 = vpow.pop %v1103
    %v1105 = vadd.f32 %v1104, 1.0
    %v1106 = vrcp.pop %v1105
    %v1108 = vrot.slane %v1101, 2
    %v1110 = vsub.f32 0.0, %v1108
    %v1111 = vmul.f32 %v1110, 1.442695
    %v1112 = vpow.pop %v1111
    %v1113 = vadd.f32 %v1112, 1.0
    %v1114 = vrcp.pop %v1113
    %v1115 = vrot.slane %v1101, 4
    %v1117 = vtanh.pop %v1115
    %v1118 = vrot.slane %v1101, 6
    %v1120 = vsub.f32 0.0, %v1118
    %v1121 = vmul.f32 %v1120, 1.442695
    %v1122 = vpow.pop %v1121
    %v1123 = vadd.f32 %v1122, 1.0
    %v1124 = vrcp.pop %v1123
    %v1125 = vmul.f32 %v1114, 0.0
    %v1126 = vmul.f32 %v1106, %v1117
    %v1127 = vadd.f32 %v1125, %v1126
    %v1128 = vtanh.pop %v1127
    %v1129 = vmul.f32 %v1124, %v1128
    %s1130 = scalar_lea.vmem [#allocation2], 1
    %v1131 = vld [vmem:[%s1130] ss:$8 sm:$0xf]
    %v1132 = vld [vmem:[%s1130] ss:$8 sm:$0xf0]
    %v1133 = vor.u32 %v1131, %v1132
    %v1135 = vperm.slane %v1129, 0
    %v1136 = vperm.slane %v1129, 1
    %v1139 = vpack.c.bf16 %v1135, %v1135
    %v1140 = vpack.c.bf16 %v1136, %v1136
    %1141 = vmatpush.bf16.msra.mxu0 %v663
    %1142 = vmatpush.bf16.msra.mxu0 %v655
    %1143 = vmatpush.bf16.msra.mxu0 %v647
    %1144 = vmatpush.bf16.msra.mxu0 %v639
    %1145 = vmatpush.bf16.msra.mxu0 %v631
    %1146 = vmatpush.bf16.msra.mxu0 %v623
    %1147 = vmatpush.bf16.msra.mxu0 %v615
    %1148 = vmatpush.bf16.msra.mxu0 %v607
    %1149 = vmatmul.bf16.gmra.mxu0 %v1139
    %v1150 = vpop.f32.mrf.mxu0
    %v1151 = vadd.f32 0.0, %v1150
    %v1152 = vpop.f32.mrf.mxu0
    %1153 = vdwg.mxu0
    %1154 = vmatpush.bf16.msra.mxu0 %v727
    %1155 = vmatpush.bf16.msra.mxu0 %v719
    %1156 = vmatpush.bf16.msra.mxu0 %v711
    %1157 = vmatpush.bf16.msra.mxu0 %v703
    %1158 = vmatpush.bf16.msra.mxu0 %v695
    %1159 = vmatpush.bf16.msra.mxu0 %v687
    %1160 = vmatpush.bf16.msra.mxu0 %v679
    %1161 = vmatpush.bf16.msra.mxu0 %v671
    %1162 = vmatmul.bf16.gmra.mxu0 %v1140
    %v1163 = vpop.f32.mrf.mxu0
    %v1164 = vadd.f32 %v1151, %v1163
    %v1165 = vpop.f32.mrf.mxu0
    %1166 = vdwg.mxu0
    %1167 = vmatpush.bf16.msra.mxu0 %v664
    %1168 = vmatpush.bf16.msra.mxu0 %v656
    %1169 = vmatpush.bf16.msra.mxu0 %v648
    %1170 = vmatpush.bf16.msra.mxu0 %v640
    %1171 = vmatpush.bf16.msra.mxu0 %v632
    %1172 = vmatpush.bf16.msra.mxu0 %v624
    %1173 = vmatpush.bf16.msra.mxu0 %v616
    %1174 = vmatpush.bf16.msra.mxu0 %v608
    %1175 = vmatmul.bf16.gmra.mxu0 %v1139
    %v1176 = vpop.f32.mrf.mxu0
    %v1177 = vadd.f32 0.0, %v1176
    %v1178 = vpop.f32.mrf.mxu0
    %1179 = vdwg.mxu0
    %1180 = vmatpush.bf16.msra.mxu0 %v728
    %1181 = vmatpush.bf16.msra.mxu0 %v720
    %1182 = vmatpush.bf16.msra.mxu0 %v712
    %1183 = vmatpush.bf16.msra.mxu0 %v704
    %1184 = vmatpush.bf16.msra.mxu0 %v696
    %1185 = vmatpush.bf16.msra.mxu0 %v688
    %1186 = vmatpush.bf16.msra.mxu0 %v680
    %1187 = vmatpush.bf16.msra.mxu0 %v672
    %1188 = vmatmul.bf16.gmra.mxu0 %v1140
    %v1189 = vpop.f32.mrf.mxu0
    %v1190 = vadd.f32 %v1177, %v1189
    %v1191 = vpop.f32.mrf.mxu0
    %1192 = vdwg.mxu0
    %1193 = vmatpush.bf16.msra.mxu0 %v665
    %1194 = vmatpush.bf16.msra.mxu0 %v657
    %1195 = vmatpush.bf16.msra.mxu0 %v649
    %1196 = vmatpush.bf16.msra.mxu0 %v641
    %1197 = vmatpush.bf16.msra.mxu0 %v633
    %1198 = vmatpush.bf16.msra.mxu0 %v625
    %1199 = vmatpush.bf16.msra.mxu0 %v617
    %1200 = vmatpush.bf16.msra.mxu0 %v609
    %1201 = vmatmul.bf16.gmra.mxu0 %v1139
    %v1202 = vpop.f32.mrf.mxu0
    %v1203 = vadd.f32 0.0, %v1202
    %v1204 = vpop.f32.mrf.mxu0
    %1205 = vdwg.mxu0
    %1206 = vmatpush.bf16.msra.mxu0 %v729
    %1207 = vmatpush.bf16.msra.mxu0 %v721
    %1208 = vmatpush.bf16.msra.mxu0 %v713
    %1209 = vmatpush.bf16.msra.mxu0 %v705
    %1210 = vmatpush.bf16.msra.mxu0 %v697
    %1211 = vmatpush.bf16.msra.mxu0 %v689
    %1212 = vmatpush.bf16.msra.mxu0 %v681
    %1213 = vmatpush.bf16.msra.mxu0 %v673
    %1214 = vmatmul.bf16.gmra.mxu0 %v1140
    %v1215 = vpop.f32.mrf.mxu0
    %v1216 = vadd.f32 %v1203, %v1215
    %v1217 = vpop.f32.mrf.mxu0
    %1218 = vdwg.mxu0
    %1219 = vmatpush.bf16.msra.mxu0 %v666
    %1220 = vmatpush.bf16.msra.mxu0 %v658
    %1221 = vmatpush.bf16.msra.mxu0 %v650
    %1222 = vmatpush.bf16.msra.mxu0 %v642
    %1223 = vmatpush.bf16.msra.mxu0 %v634
    %1224 = vmatpush.bf16.msra.mxu0 %v626
    %1225 = vmatpush.bf16.msra.mxu0 %v618
    %1226 = vmatpush.bf16.msra.mxu0 %v610
    %1227 = vmatmul.bf16.gmra.mxu0 %v1139
    %v1228 = vpop.f32.mrf.mxu0
    %v1229 = vadd.f32 0.0, %v1228
    %v1230 = vpop.f32.mrf.mxu0
    %1231 = vdwg.mxu0
    %1232 = vmatpush.bf16.msra.mxu0 %v730
    %1233 = vmatpush.bf16.msra.mxu0 %v722
    %1234 = vmatpush.bf16.msra.mxu0 %v714
    %1235 = vmatpush.bf16.msra.mxu0 %v706
    %1236 = vmatpush.bf16.msra.mxu0 %v698
    %1237 = vmatpush.bf16.msra.mxu0 %v690
    %1238 = vmatpush.bf16.msra.mxu0 %v682
    %1239 = vmatpush.bf16.msra.mxu0 %v674
    %1240 = vmatmul.bf16.gmra.mxu0 %v1140
    %v1241 = vpop.f32.mrf.mxu0
    %v1242 = vadd.f32 %v1229, %v1241
    %v1243 = vpop.f32.mrf.mxu0
    %1244 = vdwg.mxu0
    %1245 = vmatpush.bf16.msra.mxu0 %v667
    %1246 = vmatpush.bf16.msra.mxu0 %v659
    %1247 = vmatpush.bf16.msra.mxu0 %v651
    %1248 = vmatpush.bf16.msra.mxu0 %v643
    %1249 = vmatpush.bf16.msra.mxu0 %v635
    %1250 = vmatpush.bf16.msra.mxu0 %v627
    %1251 = vmatpush.bf16.msra.mxu0 %v619
    %1252 = vmatpush.bf16.msra.mxu0 %v611
    %1253 = vmatmul.bf16.gmra.mxu0 %v1139
    %v1254 = vpop.f32.mrf.mxu0
    %v1255 = vadd.f32 0.0, %v1254
    %v1256 = vpop.f32.mrf.mxu0
    %1257 = vdwg.mxu0
    %1258 = vmatpush.bf16.msra.mxu0 %v731
    %1259 = vmatpush.bf16.msra.mxu0 %v723
    %1260 = vmatpush.bf16.msra.mxu0 %v715
    %1261 = vmatpush.bf16.msra.mxu0 %v707
    %1262 = vmatpush.bf16.msra.mxu0 %v699
    %1263 = vmatpush.bf16.msra.mxu0 %v691
    %1264 = vmatpush.bf16.msra.mxu0 %v683
    %1265 = vmatpush.bf16.msra.mxu0 %v675
    %1266 = vmatmul.bf16.gmra.mxu0 %v1140
    %v1267 = vpop.f32.mrf.mxu0
    %v1268 = vadd.f32 %v1255, %v1267
    %v1269 = vpop.f32.mrf.mxu0
    %1270 = vdwg.mxu0
    %1271 = vmatpush.bf16.msra.mxu0 %v668
    %1272 = vmatpush.bf16.msra.mxu0 %v660
    %1273 = vmatpush.bf16.msra.mxu0 %v652
    %1274 = vmatpush.bf16.msra.mxu0 %v644
    %1275 = vmatpush.bf16.msra.mxu0 %v636
    %1276 = vmatpush.bf16.msra.mxu0 %v628
    %1277 = vmatpush.bf16.msra.mxu0 %v620
    %1278 = vmatpush.bf16.msra.mxu0 %v612
    %1279 = vmatmul.bf16.gmra.mxu0 %v1139
    %v1280 = vpop.f32.mrf.mxu0
    %v1281 = vadd.f32 0.0, %v1280
    %v1282 = vpop.f32.mrf.mxu0
    %1283 = vdwg.mxu0
    %1284 = vmatpush.bf16.msra.mxu0 %v732
    %1285 = vmatpush.bf16.msra.mxu0 %v724
    %1286 = vmatpush.bf16.msra.mxu0 %v716
    %1287 = vmatpush.bf16.msra.mxu0 %v708
    %1288 = vmatpush.bf16.msra.mxu0 %v700
    %1289 = vmatpush.bf16.msra.mxu0 %v692
    %1290 = vmatpush.bf16.msra.mxu0 %v684
    %1291 = vmatpush.bf16.msra.mxu0 %v676
    %1292 = vmatmul.bf16.gmra.mxu0 %v1140
    %v1293 = vpop.f32.mrf.mxu0
    %v1294 = vadd.f32 %v1281, %v1293
    %v1295 = vpop.f32.mrf.mxu0
    %1296 = vdwg.mxu0
    %1297 = vmatpush.bf16.msra.mxu0 %v669
    %1298 = vmatpush.bf16.msra.mxu0 %v661
    %1299 = vmatpush.bf16.msra.mxu0 %v653
    %1300 = vmatpush.bf16.msra.mxu0 %v645
    %1301 = vmatpush.bf16.msra.mxu0 %v637
    %1302 = vmatpush.bf16.msra.mxu0 %v629
    %1303 = vmatpush.bf16.msra.mxu0 %v621
    %1304 = vmatpush.bf16.msra.mxu0 %v613
    %1305 = vmatmul.bf16.gmra.mxu0 %v1139
    %v1306 = vpop.f32.mrf.mxu0
    %v1307 = vadd.f32 0.0, %v1306
    %v1308 = vpop.f32.mrf.mxu0
    %1309 = vdwg.mxu0
    %1310 = vmatpush.bf16.msra.mxu0 %v733
    %1311 = vmatpush.bf16.msra.mxu0 %v725
    %1312 = vmatpush.bf16.msra.mxu0 %v717
    %1313 = vmatpush.bf16.msra.mxu0 %v709
    %1314 = vmatpush.bf16.msra.mxu0 %v701
    %1315 = vmatpush.bf16.msra.mxu0 %v693
    %1316 = vmatpush.bf16.msra.mxu0 %v685
    %1317 = vmatpush.bf16.msra.mxu0 %v677
    %1318 = vmatmul.bf16.gmra.mxu0 %v1140
    %v1319 = vpop.f32.mrf.mxu0
    %v1320 = vadd.f32 %v1307, %v1319
    %v1321 = vpop.f32.mrf.mxu0
    %1322 = vdwg.mxu0
    %1323 = vmatpush.bf16.msra.mxu0 %v670
    %1324 = vmatpush.bf16.msra.mxu0 %v662
    %1325 = vmatpush.bf16.msra.mxu0 %v654
    %1326 = vmatpush.bf16.msra.mxu0 %v646
    %1327 = vmatpush.bf16.msra.mxu0 %v638
    %1328 = vmatpush.bf16.msra.mxu0 %v630
    %1329 = vmatpush.bf16.msra.mxu0 %v622
    %1330 = vmatpush.bf16.msra.mxu0 %v614
    %1331 = vmatmul.bf16.gmra.mxu0 %v1139
    %v1332 = vpop.f32.mrf.mxu0
    %v1333 = vadd.f32 0.0, %v1332
    %v1334 = vpop.f32.mrf.mxu0
    %1335 = vdwg.mxu0
    %1336 = vmatpush.bf16.msra.mxu0 %v734
    %1337 = vmatpush.bf16.msra.mxu0 %v726
    %1338 = vmatpush.bf16.msra.mxu0 %v718
    %1339 = vmatpush.bf16.msra.mxu0 %v710
    %1340 = vmatpush.bf16.msra.mxu0 %v702
    %1341 = vmatpush.bf16.msra.mxu0 %v694
    %1342 = vmatpush.bf16.msra.mxu0 %v686
    %1343 = vmatpush.bf16.msra.mxu0 %v678
    %1344 = vmatmul.bf16.gmra.mxu0 %v1140
    %v1345 = vpop.f32.mrf.mxu0
    %v1346 = vadd.f32 %v1333, %v1345
    %v1347 = vpop.f32.mrf.mxu0
    %1348 = vdwg.mxu0
    %v1357 = vrot.slane %v1190, 7
    %v1358 = vrot.slane %v1216, 6
    %v1359 = vrot.slane %v1242, 5
    %v1360 = vrot.slane %v1268, 4
    %v1361 = vrot.slane %v1294, 3
    %v1362 = vrot.slane %v1320, 2
    %v1363 = vrot.slane %v1346, 1
    %v1364 = vsel %vm1086, %v1164, %v1357
    %v1365 = vsel %vm1088, %v1358, %v1359
    %v1366 = vsel %vm1090, %v1364, %v1365
    %v1367 = vsel %vm1092, %v1360, %v1361
    %v1368 = vsel %vm1094, %v1362, %v1363
    %v1369 = vsel %vm1096, %v1367, %v1368
    %v1370 = vsel %vm1098, %v1366, %v1369
    %v1372 = vadd.f32 %v1133, %v1370
    %v1373 = vsub.f32 0.0, %v1372
    %v1374 = vmul.f32 %v1373, 1.442695
    %v1375 = vpow.pop %v1374
    %v1376 = vadd.f32 %v1375, 1.0
    %v1377 = vrcp.pop %v1376
    %v1379 = vrot.slane %v1372, 2
    %v1381 = vsub.f32 0.0, %v1379
    %v1382 = vmul.f32 %v1381, 1.442695
    %v1383 = vpow.pop %v1382
    %v1384 = vadd.f32 %v1383, 1.0
    %v1385 = vrcp.pop %v1384
    %v1386 = vrot.slane %v1372, 4
    %v1388 = vtanh.pop %v1386
    %v1389 = vrot.slane %v1372, 6
    %v1391 = vsub.f32 0.0, %v1389
    %v1392 = vmul.f32 %v1391, 1.442695
    %v1393 = vpow.pop %v1392
    %v1394 = vadd.f32 %v1393, 1.0
    %v1395 = vrcp.pop %v1394
    %v1396 = vmul.f32 %v1385, %v1127
    %v1397 = vmul.f32 %v1377, %v1388
    %v1398 = vadd.f32 %v1396, %v1397
    %v1399 = vtanh.pop %v1398
    %v1400 = vmul.f32 %v1395, %v1399
    %s1401 = scalar_lea.vmem [#allocation2], 2
    %v1402 = vld [vmem:[%s1401] ss:$8 sm:$0xf]
    %v1403 = vld [vmem:[%s1401] ss:$8 sm:$0xf0]
    %v1404 = vor.u32 %v1402, %v1403
    %v1406 = vperm.slane %v1400, 0
    %v1407 = vperm.slane %v1400, 1
    %v1410 = vpack.c.bf16 %v1406, %v1406
    %v1411 = vpack.c.bf16 %v1407, %v1407
    %1412 = vmatpush.bf16.msra.mxu0 %v663
    %1413 = vmatpush.bf16.msra.mxu0 %v655
    %1414 = vmatpush.bf16.msra.mxu0 %v647
    %1415 = vmatpush.bf16.msra.mxu0 %v639
    %1416 = vmatpush.bf16.msra.mxu0 %v631
    %1417 = vmatpush.bf16.msra.mxu0 %v623
    %1418 = vmatpush.bf16.msra.mxu0 %v615
    %1419 = vmatpush.bf16.msra.mxu0 %v607
    %1420 = vmatmul.bf16.gmra.mxu0 %v1410
    %v1421 = vpop.f32.mrf.mxu0
    %v1422 = vadd.f32 0.0, %v1421
    %v1423 = vpop.f32.mrf.mxu0
    %1424 = vdwg.mxu0
    %1425 = vmatpush.bf16.msra.mxu0 %v727
    %1426 = vmatpush.bf16.msra.mxu0 %v719
    %1427 = vmatpush.bf16.msra.mxu0 %v711
    %1428 = vmatpush.bf16.msra.mxu0 %v703
    %1429 = vmatpush.bf16.msra.mxu0 %v695
    %1430 = vmatpush.bf16.msra.mxu0 %v687
    %1431 = vmatpush.bf16.msra.mxu0 %v679
    %1432 = vmatpush.bf16.msra.mxu0 %v671
    %1433 = vmatmul.bf16.gmra.mxu0 %v1411
    %v1434 = vpop.f32.mrf.mxu0
    %v1435 = vadd.f32 %v1422, %v1434
    %v1436 = vpop.f32.mrf.mxu0
    %1437 = vdwg.mxu0
    %1438 = vmatpush.bf16.msra.mxu0 %v664
    %1439 = vmatpush.bf16.msra.mxu0 %v656
    %1440 = vmatpush.bf16.msra.mxu0 %v648
    %1441 = vmatpush.bf16.msra.mxu0 %v640
    %1442 = vmatpush.bf16.msra.mxu0 %v632
    %1443 = vmatpush.bf16.msra.mxu0 %v624
    %1444 = vmatpush.bf16.msra.mxu0 %v616
    %1445 = vmatpush.bf16.msra.mxu0 %v608
    %1446 = vmatmul.bf16.gmra.mxu0 %v1410
    %v1447 = vpop.f32.mrf.mxu0
    %v1448 = vadd.f32 0.0, %v1447
    %v1449 = vpop.f32.mrf.mxu0
    %1450 = vdwg.mxu0
    %1451 = vmatpush.bf16.msra.mxu0 %v728
    %1452 = vmatpush.bf16.msra.mxu0 %v720
    %1453 = vmatpush.bf16.msra.mxu0 %v712
    %1454 = vmatpush.bf16.msra.mxu0 %v704
    %1455 = vmatpush.bf16.msra.mxu0 %v696
    %1456 = vmatpush.bf16.msra.mxu0 %v688
    %1457 = vmatpush.bf16.msra.mxu0 %v680
    %1458 = vmatpush.bf16.msra.mxu0 %v672
    %1459 = vmatmul.bf16.gmra.mxu0 %v1411
    %v1460 = vpop.f32.mrf.mxu0
    %v1461 = vadd.f32 %v1448, %v1460
    %v1462 = vpop.f32.mrf.mxu0
    %1463 = vdwg.mxu0
    %1464 = vmatpush.bf16.msra.mxu0 %v665
    %1465 = vmatpush.bf16.msra.mxu0 %v657
    %1466 = vmatpush.bf16.msra.mxu0 %v649
    %1467 = vmatpush.bf16.msra.mxu0 %v641
    %1468 = vmatpush.bf16.msra.mxu0 %v633
    %1469 = vmatpush.bf16.msra.mxu0 %v625
    %1470 = vmatpush.bf16.msra.mxu0 %v617
    %1471 = vmatpush.bf16.msra.mxu0 %v609
    %1472 = vmatmul.bf16.gmra.mxu0 %v1410
    %v1473 = vpop.f32.mrf.mxu0
    %v1474 = vadd.f32 0.0, %v1473
    %v1475 = vpop.f32.mrf.mxu0
    %1476 = vdwg.mxu0
    %1477 = vmatpush.bf16.msra.mxu0 %v729
    %1478 = vmatpush.bf16.msra.mxu0 %v721
    %1479 = vmatpush.bf16.msra.mxu0 %v713
    %1480 = vmatpush.bf16.msra.mxu0 %v705
    %1481 = vmatpush.bf16.msra.mxu0 %v697
    %1482 = vmatpush.bf16.msra.mxu0 %v689
    %1483 = vmatpush.bf16.msra.mxu0 %v681
    %1484 = vmatpush.bf16.msra.mxu0 %v673
    %1485 = vmatmul.bf16.gmra.mxu0 %v1411
    %v1486 = vpop.f32.mrf.mxu0
    %v1487 = vadd.f32 %v1474, %v1486
    %v1488 = vpop.f32.mrf.mxu0
    %1489 = vdwg.mxu0
    %1490 = vmatpush.bf16.msra.mxu0 %v666
    %1491 = vmatpush.bf16.msra.mxu0 %v658
    %1492 = vmatpush.bf16.msra.mxu0 %v650
    %1493 = vmatpush.bf16.msra.mxu0 %v642
    %1494 = vmatpush.bf16.msra.mxu0 %v634
    %1495 = vmatpush.bf16.msra.mxu0 %v626
    %1496 = vmatpush.bf16.msra.mxu0 %v618
    %1497 = vmatpush.bf16.msra.mxu0 %v610
    %1498 = vmatmul.bf16.gmra.mxu0 %v1410
    %v1499 = vpop.f32.mrf.mxu0
    %v1500 = vadd.f32 0.0, %v1499
    %v1501 = vpop.f32.mrf.mxu0
    %1502 = vdwg.mxu0
    %1503 = vmatpush.bf16.msra.mxu0 %v730
    %1504 = vmatpush.bf16.msra.mxu0 %v722
    %1505 = vmatpush.bf16.msra.mxu0 %v714
    %1506 = vmatpush.bf16.msra.mxu0 %v706
    %1507 = vmatpush.bf16.msra.mxu0 %v698
    %1508 = vmatpush.bf16.msra.mxu0 %v690
    %1509 = vmatpush.bf16.msra.mxu0 %v682
    %1510 = vmatpush.bf16.msra.mxu0 %v674
    %1511 = vmatmul.bf16.gmra.mxu0 %v1411
    %v1512 = vpop.f32.mrf.mxu0
    %v1513 = vadd.f32 %v1500, %v1512
    %v1514 = vpop.f32.mrf.mxu0
    %1515 = vdwg.mxu0
    %1516 = vmatpush.bf16.msra.mxu0 %v667
    %1517 = vmatpush.bf16.msra.mxu0 %v659
    %1518 = vmatpush.bf16.msra.mxu0 %v651
    %1519 = vmatpush.bf16.msra.mxu0 %v643
    %1520 = vmatpush.bf16.msra.mxu0 %v635
    %1521 = vmatpush.bf16.msra.mxu0 %v627
    %1522 = vmatpush.bf16.msra.mxu0 %v619
    %1523 = vmatpush.bf16.msra.mxu0 %v611
    %1524 = vmatmul.bf16.gmra.mxu0 %v1410
    %v1525 = vpop.f32.mrf.mxu0
    %v1526 = vadd.f32 0.0, %v1525
    %v1527 = vpop.f32.mrf.mxu0
    %1528 = vdwg.mxu0
    %1529 = vmatpush.bf16.msra.mxu0 %v731
    %1530 = vmatpush.bf16.msra.mxu0 %v723
    %1531 = vmatpush.bf16.msra.mxu0 %v715
    %1532 = vmatpush.bf16.msra.mxu0 %v707
    %1533 = vmatpush.bf16.msra.mxu0 %v699
    %1534 = vmatpush.bf16.msra.mxu0 %v691
    %1535 = vmatpush.bf16.msra.mxu0 %v683
    %1536 = vmatpush.bf16.msra.mxu0 %v675
    %1537 = vmatmul.bf16.gmra.mxu0 %v1411
    %v1538 = vpop.f32.mrf.mxu0
    %v1539 = vadd.f32 %v1526, %v1538
    %v1540 = vpop.f32.mrf.mxu0
    %1541 = vdwg.mxu0
    %1542 = vmatpush.bf16.msra.mxu0 %v668
    %1543 = vmatpush.bf16.msra.mxu0 %v660
    %1544 = vmatpush.bf16.msra.mxu0 %v652
    %1545 = vmatpush.bf16.msra.mxu0 %v644
    %1546 = vmatpush.bf16.msra.mxu0 %v636
    %1547 = vmatpush.bf16.msra.mxu0 %v628
    %1548 = vmatpush.bf16.msra.mxu0 %v620
    %1549 = vmatpush.bf16.msra.mxu0 %v612
    %1550 = vmatmul.bf16.gmra.mxu0 %v1410
    %v1551 = vpop.f32.mrf.mxu0
    %v1552 = vadd.f32 0.0, %v1551
    %v1553 = vpop.f32.mrf.mxu0
    %1554 = vdwg.mxu0
    %1555 = vmatpush.bf16.msra.mxu0 %v732
    %1556 = vmatpush.bf16.msra.mxu0 %v724
    %1557 = vmatpush.bf16.msra.mxu0 %v716
    %1558 = vmatpush.bf16.msra.mxu0 %v708
    %1559 = vmatpush.bf16.msra.mxu0 %v700
    %1560 = vmatpush.bf16.msra.mxu0 %v692
    %1561 = vmatpush.bf16.msra.mxu0 %v684
    %1562 = vmatpush.bf16.msra.mxu0 %v676
    %1563 = vmatmul.bf16.gmra.mxu0 %v1411
    %v1564 = vpop.f32.mrf.mxu0
    %v1565 = vadd.f32 %v1552, %v1564
    %v1566 = vpop.f32.mrf.mxu0
    %1567 = vdwg.mxu0
    %1568 = vmatpush.bf16.msra.mxu0 %v669
    %1569 = vmatpush.bf16.msra.mxu0 %v661
    %1570 = vmatpush.bf16.msra.mxu0 %v653
    %1571 = vmatpush.bf16.msra.mxu0 %v645
    %1572 = vmatpush.bf16.msra.mxu0 %v637
    %1573 = vmatpush.bf16.msra.mxu0 %v629
    %1574 = vmatpush.bf16.msra.mxu0 %v621
    %1575 = vmatpush.bf16.msra.mxu0 %v613
    %1576 = vmatmul.bf16.gmra.mxu0 %v1410
    %v1577 = vpop.f32.mrf.mxu0
    %v1578 = vadd.f32 0.0, %v1577
    %v1579 = vpop.f32.mrf.mxu0
    %1580 = vdwg.mxu0
    %1581 = vmatpush.bf16.msra.mxu0 %v733
    %1582 = vmatpush.bf16.msra.mxu0 %v725
    %1583 = vmatpush.bf16.msra.mxu0 %v717
    %1584 = vmatpush.bf16.msra.mxu0 %v709
    %1585 = vmatpush.bf16.msra.mxu0 %v701
    %1586 = vmatpush.bf16.msra.mxu0 %v693
    %1587 = vmatpush.bf16.msra.mxu0 %v685
    %1588 = vmatpush.bf16.msra.mxu0 %v677
    %1589 = vmatmul.bf16.gmra.mxu0 %v1411
    %v1590 = vpop.f32.mrf.mxu0
    %v1591 = vadd.f32 %v1578, %v1590
    %v1592 = vpop.f32.mrf.mxu0
    %1593 = vdwg.mxu0
    %1594 = vmatpush.bf16.msra.mxu0 %v670
    %1595 = vmatpush.bf16.msra.mxu0 %v662
    %1596 = vmatpush.bf16.msra.mxu0 %v654
    %1597 = vmatpush.bf16.msra.mxu0 %v646
    %1598 = vmatpush.bf16.msra.mxu0 %v638
    %1599 = vmatpush.bf16.msra.mxu0 %v630
    %1600 = vmatpush.bf16.msra.mxu0 %v622
    %1601 = vmatpush.bf16.msra.mxu0 %v614
    %1602 = vmatmul.bf16.gmra.mxu0 %v1410
    %v1603 = vpop.f32.mrf.mxu0
    %v1604 = vadd.f32 0.0, %v1603
    %v1605 = vpop.f32.mrf.mxu0
    %1606 = vdwg.mxu0
    %1607 = vmatpush.bf16.msra.mxu0 %v734
    %1608 = vmatpush.bf16.msra.mxu0 %v726
    %1609 = vmatpush.bf16.msra.mxu0 %v718
    %1610 = vmatpush.bf16.msra.mxu0 %v710
    %1611 = vmatpush.bf16.msra.mxu0 %v702
    %1612 = vmatpush.bf16.msra.mxu0 %v694
    %1613 = vmatpush.bf16.msra.mxu0 %v686
    %1614 = vmatpush.bf16.msra.mxu0 %v678
    %1615 = vmatmul.bf16.gmra.mxu0 %v1411
    %v1616 = vpop.f32.mrf.mxu0
    %v1617 = vadd.f32 %v1604, %v1616
    %v1618 = vpop.f32.mrf.mxu0
    %1619 = vdwg.mxu0
    %v1628 = vrot.slane %v1461, 7
    %v1629 = vrot.slane %v1487, 6
    %v1630 = vrot.slane %v1513, 5
    %v1631 = vrot.slane %v1539, 4
    %v1632 = vrot.slane %v1565, 3
    %v1633 = vrot.slane %v1591, 2
    %v1634 = vrot.slane %v1617, 1
    %v1635 = vsel %vm1086, %v1435, %v1628
    %v1636 = vsel %vm1088, %v1629, %v1630
    %v1637 = vsel %vm1090, %v1635, %v1636
    %v1638 = vsel %vm1092, %v1631, %v1632
    %v1639 = vsel %vm1094, %v1633, %v1634
    %v1640 = vsel %vm1096, %v1638, %v1639
    %v1641 = vsel %vm1098, %v1637, %v1640
    %v1643 = vadd.f32 %v1404, %v1641
    %v1644 = vsub.f32 0.0, %v1643
    %v1645 = vmul.f32 %v1644, 1.442695
    %v1646 = vpow.pop %v1645
    %v1647 = vadd.f32 %v1646, 1.0
    %v1648 = vrcp.pop %v1647
    %v1650 = vrot.slane %v1643, 2
    %v1652 = vsub.f32 0.0, %v1650
    %v1653 = vmul.f32 %v1652, 1.442695
    %v1654 = vpow.pop %v1653
    %v1655 = vadd.f32 %v1654, 1.0
    %v1656 = vrcp.pop %v1655
    %v1657 = vrot.slane %v1643, 4
    %v1659 = vtanh.pop %v1657
    %v1660 = vrot.slane %v1643, 6
    %v1662 = vsub.f32 0.0, %v1660
    %v1663 = vmul.f32 %v1662, 1.442695
    %v1664 = vpow.pop %v1663
    %v1665 = vadd.f32 %v1664, 1.0
    %v1666 = vrcp.pop %v1665
    %v1667 = vmul.f32 %v1656, %v1398
    %v1668 = vmul.f32 %v1648, %v1659
    %v1669 = vadd.f32 %v1667, %v1668
    %v1670 = vtanh.pop %v1669
    %v1671 = vmul.f32 %v1666, %v1670
    %s1672 = scalar_lea.vmem [#allocation2], 3
    %v1673 = vld [vmem:[%s1672] ss:$8 sm:$0xf]
    %v1674 = vld [vmem:[%s1672] ss:$8 sm:$0xf0]
    %v1675 = vor.u32 %v1673, %v1674
    %v1677 = vperm.slane %v1671, 0
    %v1678 = vperm.slane %v1671, 1
    %v1681 = vpack.c.bf16 %v1677, %v1677
    %v1682 = vpack.c.bf16 %v1678, %v1678
    %1683 = vmatpush.bf16.msra.mxu0 %v663
    %1684 = vmatpush.bf16.msra.mxu0 %v655
    %1685 = vmatpush.bf16.msra.mxu0 %v647
    %1686 = vmatpush.bf16.msra.mxu0 %v639
    %1687 = vmatpush.bf16.msra.mxu0 %v631
    %1688 = vmatpush.bf16.msra.mxu0 %v623
    %1689 = vmatpush.bf16.msra.mxu0 %v615
    %1690 = vmatpush.bf16.msra.mxu0 %v607
    %1691 = vmatmul.bf16.gmra.mxu0 %v1681
    %v1692 = vpop.f32.mrf.mxu0
    %v1693 = vadd.f32 0.0, %v1692
    %v1694 = vpop.f32.mrf.mxu0
    %1695 = vdwg.mxu0
    %1696 = vmatpush.bf16.msra.mxu0 %v727
    %1697 = vmatpush.bf16.msra.mxu0 %v719
    %1698 = vmatpush.bf16.msra.mxu0 %v711
    %1699 = vmatpush.bf16.msra.mxu0 %v703
    %1700 = vmatpush.bf16.msra.mxu0 %v695
    %1701 = vmatpush.bf16.msra.mxu0 %v687
    %1702 = vmatpush.bf16.msra.mxu0 %v679
    %1703 = vmatpush.bf16.msra.mxu0 %v671
    %1704 = vmatmul.bf16.gmra.mxu0 %v1682
    %v1705 = vpop.f32.mrf.mxu0
    %v1706 = vadd.f32 %v1693, %v1705
    %v1707 = vpop.f32.mrf.mxu0
    %1708 = vdwg.mxu0
    %1709 = vmatpush.bf16.msra.mxu0 %v664
    %1710 = vmatpush.bf16.msra.mxu0 %v656
    %1711 = vmatpush.bf16.msra.mxu0 %v648
    %1712 = vmatpush.bf16.msra.mxu0 %v640
    %1713 = vmatpush.bf16.msra.mxu0 %v632
    %1714 = vmatpush.bf16.msra.mxu0 %v624
    %1715 = vmatpush.bf16.msra.mxu0 %v616
    %1716 = vmatpush.bf16.msra.mxu0 %v608
    %1717 = vmatmul.bf16.gmra.mxu0 %v1681
    %v1718 = vpop.f32.mrf.mxu0
    %v1719 = vadd.f32 0.0, %v1718
    %v1720 = vpop.f32.mrf.mxu0
    %1721 = vdwg.mxu0
    %1722 = vmatpush.bf16.msra.mxu0 %v728
    %1723 = vmatpush.bf16.msra.mxu0 %v720
    %1724 = vmatpush.bf16.msra.mxu0 %v712
    %1725 = vmatpush.bf16.msra.mxu0 %v704
    %1726 = vmatpush.bf16.msra.mxu0 %v696
    %1727 = vmatpush.bf16.msra.mxu0 %v688
    %1728 = vmatpush.bf16.msra.mxu0 %v680
    %1729 = vmatpush.bf16.msra.mxu0 %v672
    %1730 = vmatmul.bf16.gmra.mxu0 %v1682
    %v1731 = vpop.f32.mrf.mxu0
    %v1732 = vadd.f32 %v1719, %v1731
    %v1733 = vpop.f32.mrf.mxu0
    %1734 = vdwg.mxu0
    %1735 = vmatpush.bf16.msra.mxu0 %v665
    %1736 = vmatpush.bf16.msra.mxu0 %v657
    %1737 = vmatpush.bf16.msra.mxu0 %v649
    %1738 = vmatpush.bf16.msra.mxu0 %v641
    %1739 = vmatpush.bf16.msra.mxu0 %v633
    %1740 = vmatpush.bf16.msra.mxu0 %v625
    %1741 = vmatpush.bf16.msra.mxu0 %v617
    %1742 = vmatpush.bf16.msra.mxu0 %v609
    %1743 = vmatmul.bf16.gmra.mxu0 %v1681
    %v1744 = vpop.f32.mrf.mxu0
    %v1745 = vadd.f32 0.0, %v1744
    %v1746 = vpop.f32.mrf.mxu0
    %1747 = vdwg.mxu0
    %1748 = vmatpush.bf16.msra.mxu0 %v729
    %1749 = vmatpush.bf16.msra.mxu0 %v721
    %1750 = vmatpush.bf16.msra.mxu0 %v713
    %1751 = vmatpush.bf16.msra.mxu0 %v705
    %1752 = vmatpush.bf16.msra.mxu0 %v697
    %1753 = vmatpush.bf16.msra.mxu0 %v689
    %1754 = vmatpush.bf16.msra.mxu0 %v681
    %1755 = vmatpush.bf16.msra.mxu0 %v673
    %1756 = vmatmul.bf16.gmra.mxu0 %v1682
    %v1757 = vpop.f32.mrf.mxu0
    %v1758 = vadd.f32 %v1745, %v1757
    %v1759 = vpop.f32.mrf.mxu0
    %1760 = vdwg.mxu0
    %1761 = vmatpush.bf16.msra.mxu0 %v666
    %1762 = vmatpush.bf16.msra.mxu0 %v658
    %1763 = vmatpush.bf16.msra.mxu0 %v650
    %1764 = vmatpush.bf16.msra.mxu0 %v642
    %1765 = vmatpush.bf16.msra.mxu0 %v634
    %1766 = vmatpush.bf16.msra.mxu0 %v626
    %1767 = vmatpush.bf16.msra.mxu0 %v618
    %1768 = vmatpush.bf16.msra.mxu0 %v610
    %1769 = vmatmul.bf16.gmra.mxu0 %v1681
    %v1770 = vpop.f32.mrf.mxu0
    %v1771 = vadd.f32 0.0, %v1770
    %v1772 = vpop.f32.mrf.mxu0
    %1773 = vdwg.mxu0
    %1774 = vmatpush.bf16.msra.mxu0 %v730
    %1775 = vmatpush.bf16.msra.mxu0 %v722
    %1776 = vmatpush.bf16.msra.mxu0 %v714
    %1777 = vmatpush.bf16.msra.mxu0 %v706
    %1778 = vmatpush.bf16.msra.mxu0 %v698
    %1779 = vmatpush.bf16.msra.mxu0 %v690
    %1780 = vmatpush.bf16.msra.mxu0 %v682
    %1781 = vmatpush.bf16.msra.mxu0 %v674
    %1782 = vmatmul.bf16.gmra.mxu0 %v1682
    %v1783 = vpop.f32.mrf.mxu0
    %v1784 = vadd.f32 %v1771, %v1783
    %v1785 = vpop.f32.mrf.mxu0
    %1786 = vdwg.mxu0
    %1787 = vmatpush.bf16.msra.mxu0 %v667
    %1788 = vmatpush.bf16.msra.mxu0 %v659
    %1789 = vmatpush.bf16.msra.mxu0 %v651
    %1790 = vmatpush.bf16.msra.mxu0 %v643
    %1791 = vmatpush.bf16.msra.mxu0 %v635
    %1792 = vmatpush.bf16.msra.mxu0 %v627
    %1793 = vmatpush.bf16.msra.mxu0 %v619
    %1794 = vmatpush.bf16.msra.mxu0 %v611
    %1795 = vmatmul.bf16.gmra.mxu0 %v1681
    %v1796 = vpop.f32.mrf.mxu0
    %v1797 = vadd.f32 0.0, %v1796
    %v1798 = vpop.f32.mrf.mxu0
    %1799 = vdwg.mxu0
    %1800 = vmatpush.bf16.msra.mxu0 %v731
    %1801 = vmatpush.bf16.msra.mxu0 %v723
    %1802 = vmatpush.bf16.msra.mxu0 %v715
    %1803 = vmatpush.bf16.msra.mxu0 %v707
    %1804 = vmatpush.bf16.msra.mxu0 %v699
    %1805 = vmatpush.bf16.msra.mxu0 %v691
    %1806 = vmatpush.bf16.msra.mxu0 %v683
    %1807 = vmatpush.bf16.msra.mxu0 %v675
    %1808 = vmatmul.bf16.gmra.mxu0 %v1682
    %v1809 = vpop.f32.mrf.mxu0
    %v1810 = vadd.f32 %v1797, %v1809
    %v1811 = vpop.f32.mrf.mxu0
    %1812 = vdwg.mxu0
    %1813 = vmatpush.bf16.msra.mxu0 %v668
    %1814 = vmatpush.bf16.msra.mxu0 %v660
    %1815 = vmatpush.bf16.msra.mxu0 %v652
    %1816 = vmatpush.bf16.msra.mxu0 %v644
    %1817 = vmatpush.bf16.msra.mxu0 %v636
    %1818 = vmatpush.bf16.msra.mxu0 %v628
    %1819 = vmatpush.bf16.msra.mxu0 %v620
    %1820 = vmatpush.bf16.msra.mxu0 %v612
    %1821 = vmatmul.bf16.gmra.mxu0 %v1681
    %v1822 = vpop.f32.mrf.mxu0
    %v1823 = vadd.f32 0.0, %v1822
    %v1824 = vpop.f32.mrf.mxu0
    %1825 = vdwg.mxu0
    %1826 = vmatpush.bf16.msra.mxu0 %v732
    %1827 = vmatpush.bf16.msra.mxu0 %v724
    %1828 = vmatpush.bf16.msra.mxu0 %v716
    %1829 = vmatpush.bf16.msra.mxu0 %v708
    %1830 = vmatpush.bf16.msra.mxu0 %v700
    %1831 = vmatpush.bf16.msra.mxu0 %v692
    %1832 = vmatpush.bf16.msra.mxu0 %v684
    %1833 = vmatpush.bf16.msra.mxu0 %v676
    %1834 = vmatmul.bf16.gmra.mxu0 %v1682
    %v1835 = vpop.f32.mrf.mxu0
    %v1836 = vadd.f32 %v1823, %v1835
    %v1837 = vpop.f32.mrf.mxu0
    %1838 = vdwg.mxu0
    %1839 = vmatpush.bf16.msra.mxu0 %v669
    %1840 = vmatpush.bf16.msra.mxu0 %v661
    %1841 = vmatpush.bf16.msra.mxu0 %v653
    %1842 = vmatpush.bf16.msra.mxu0 %v645
    %1843 = vmatpush.bf16.msra.mxu0 %v637
    %1844 = vmatpush.bf16.msra.mxu0 %v629
    %1845 = vmatpush.bf16.msra.mxu0 %v621
    %1846 = vmatpush.bf16.msra.mxu0 %v613
    %1847 = vmatmul.bf16.gmra.mxu0 %v1681
    %v1848 = vpop.f32.mrf.mxu0
    %v1849 = vadd.f32 0.0, %v1848
    %v1850 = vpop.f32.mrf.mxu0
    %1851 = vdwg.mxu0
    %1852 = vmatpush.bf16.msra.mxu0 %v733
    %1853 = vmatpush.bf16.msra.mxu0 %v725
    %1854 = vmatpush.bf16.msra.mxu0 %v717
    %1855 = vmatpush.bf16.msra.mxu0 %v709
    %1856 = vmatpush.bf16.msra.mxu0 %v701
    %1857 = vmatpush.bf16.msra.mxu0 %v693
    %1858 = vmatpush.bf16.msra.mxu0 %v685
    %1859 = vmatpush.bf16.msra.mxu0 %v677
    %1860 = vmatmul.bf16.gmra.mxu0 %v1682
    %v1861 = vpop.f32.mrf.mxu0
    %v1862 = vadd.f32 %v1849, %v1861
    %v1863 = vpop.f32.mrf.mxu0
    %1864 = vdwg.mxu0
    %1865 = vmatpush.bf16.msra.mxu0 %v670
    %1866 = vmatpush.bf16.msra.mxu0 %v662
    %1867 = vmatpush.bf16.msra.mxu0 %v654
    %1868 = vmatpush.bf16.msra.mxu0 %v646
    %1869 = vmatpush.bf16.msra.mxu0 %v638
    %1870 = vmatpush.bf16.msra.mxu0 %v630
    %1871 = vmatpush.bf16.msra.mxu0 %v622
    %1872 = vmatpush.bf16.msra.mxu0 %v614
    %1873 = vmatmul.bf16.gmra.mxu0 %v1681
    %v1874 = vpop.f32.mrf.mxu0
    %v1875 = vadd.f32 0.0, %v1874
    %v1876 = vpop.f32.mrf.mxu0
    %1877 = vdwg.mxu0
    %1878 = vmatpush.bf16.msra.mxu0 %v734
    %1879 = vmatpush.bf16.msra.mxu0 %v726
    %1880 = vmatpush.bf16.msra.mxu0 %v718
    %1881 = vmatpush.bf16.msra.mxu0 %v710
    %1882 = vmatpush.bf16.msra.mxu0 %v702
    %1883 = vmatpush.bf16.msra.mxu0 %v694
    %1884 = vmatpush.bf16.msra.mxu0 %v686
    %1885 = vmatpush.bf16.msra.mxu0 %v678
    %1886 = vmatmul.bf16.gmra.mxu0 %v1682
    %v1887 = vpop.f32.mrf.mxu0
    %v1888 = vadd.f32 %v1875, %v1887
    %v1889 = vpop.f32.mrf.mxu0
    %1890 = vdwg.mxu0
    %v1899 = vrot.slane %v1732, 7
    %v1900 = vrot.slane %v1758, 6
    %v1901 = vrot.slane %v1784, 5
    %v1902 = vrot.slane %v1810, 4
    %v1903 = vrot.slane %v1836, 3
    %v1904 = vrot.slane %v1862, 2
    %v1905 = vrot.slane %v1888, 1
    %v1906 = vsel %vm1086, %v1706, %v1899
    %v1907 = vsel %vm1088, %v1900, %v1901
    %v1908 = vsel %vm1090, %v1906, %v1907
    %v1909 = vsel %vm1092, %v1902, %v1903
    %v1910 = vsel %vm1094, %v1904, %v1905
    %v1911 = vsel %vm1096, %v1909, %v1910
    %v1912 = vsel %vm1098, %v1908, %v1911
    %v1914 = vadd.f32 %v1675, %v1912
    %v1915 = vsub.f32 0.0, %v1914
    %v1916 = vmul.f32 %v1915, 1.442695
    %v1917 = vpow.pop %v1916
    %v1918 = vadd.f32 %v1917, 1.0
    %v1919 = vrcp.pop %v1918
    %v1921 = vrot.slane %v1914, 2
    %v1923 = vsub.f32 0.0, %v1921
    %v1924 = vmul.f32 %v1923, 1.442695
    %v1925 = vpow.pop %v1924
    %v1926 = vadd.f32 %v1925, 1.0
    %v1927 = vrcp.pop %v1926
    %v1928 = vrot.slane %v1914, 4
    %v1930 = vtanh.pop %v1928
    %v1931 = vrot.slane %v1914, 6
    %v1933 = vsub.f32 0.0, %v1931
    %v1934 = vmul.f32 %v1933, 1.442695
    %v1935 = vpow.pop %v1934
    %v1936 = vadd.f32 %v1935, 1.0
    %v1937 = vrcp.pop %v1936
    %v1938 = vmul.f32 %v1927, %v1669
    %v1939 = vmul.f32 %v1919, %v1930
    %v1940 = vadd.f32 %v1938, %v1939
    %v1941 = vtanh.pop %v1940
    %v1942 = vmul.f32 %v1937, %v1941
    %s1943 = scalar_lea.vmem [#allocation2], 4
    %v1944 = vld [vmem:[%s1943] ss:$8 sm:$0xf]
    %v1945 = vld [vmem:[%s1943] ss:$8 sm:$0xf0]
    %v1946 = vor.u32 %v1944, %v1945
    %v1948 = vperm.slane %v1942, 0
    %v1949 = vperm.slane %v1942, 1
    %v1952 = vpack.c.bf16 %v1948, %v1948
    %v1953 = vpack.c.bf16 %v1949, %v1949
    %1954 = vmatpush.bf16.msra.mxu0 %v663
    %1955 = vmatpush.bf16.msra.mxu0 %v655
    %1956 = vmatpush.bf16.msra.mxu0 %v647
    %1957 = vmatpush.bf16.msra.mxu0 %v639
    %1958 = vmatpush.bf16.msra.mxu0 %v631
    %1959 = vmatpush.bf16.msra.mxu0 %v623
    %1960 = vmatpush.bf16.msra.mxu0 %v615
    %1961 = vmatpush.bf16.msra.mxu0 %v607
    %1962 = vmatmul.bf16.gmra.mxu0 %v1952
    %v1963 = vpop.f32.mrf.mxu0
    %v1964 = vadd.f32 0.0, %v1963
    %v1965 = vpop.f32.mrf.mxu0
    %1966 = vdwg.mxu0
    %1967 = vmatpush.bf16.msra.mxu0 %v727
    %1968 = vmatpush.bf16.msra.mxu0 %v719
    %1969 = vmatpush.bf16.msra.mxu0 %v711
    %1970 = vmatpush.bf16.msra.mxu0 %v703
    %1971 = vmatpush.bf16.msra.mxu0 %v695
    %1972 = vmatpush.bf16.msra.mxu0 %v687
    %1973 = vmatpush.bf16.msra.mxu0 %v679
    %1974 = vmatpush.bf16.msra.mxu0 %v671
    %1975 = vmatmul.bf16.gmra.mxu0 %v1953
    %v1976 = vpop.f32.mrf.mxu0
    %v1977 = vadd.f32 %v1964, %v1976
    %v1978 = vpop.f32.mrf.mxu0
    %1979 = vdwg.mxu0
    %1980 = vmatpush.bf16.msra.mxu0 %v664
    %1981 = vmatpush.bf16.msra.mxu0 %v656
    %1982 = vmatpush.bf16.msra.mxu0 %v648
    %1983 = vmatpush.bf16.msra.mxu0 %v640
    %1984 = vmatpush.bf16.msra.mxu0 %v632
    %1985 = vmatpush.bf16.msra.mxu0 %v624
    %1986 = vmatpush.bf16.msra.mxu0 %v616
    %1987 = vmatpush.bf16.msra.mxu0 %v608
    %1988 = vmatmul.bf16.gmra.mxu0 %v1952
    %v1989 = vpop.f32.mrf.mxu0
    %v1990 = vadd.f32 0.0, %v1989
    %v1991 = vpop.f32.mrf.mxu0
    %1992 = vdwg.mxu0
    %1993 = vmatpush.bf16.msra.mxu0 %v728
    %1994 = vmatpush.bf16.msra.mxu0 %v720
    %1995 = vmatpush.bf16.msra.mxu0 %v712
    %1996 = vmatpush.bf16.msra.mxu0 %v704
    %1997 = vmatpush.bf16.msra.mxu0 %v696
    %1998 = vmatpush.bf16.msra.mxu0 %v688
    %1999 = vmatpush.bf16.msra.mxu0 %v680
    %2000 = vmatpush.bf16.msra.mxu0 %v672
    %2001 = vmatmul.bf16.gmra.mxu0 %v1953
    %v2002 = vpop.f32.mrf.mxu0
    %v2003 = vadd.f32 %v1990, %v2002
    %v2004 = vpop.f32.mrf.mxu0
    %2005 = vdwg.mxu0
    %2006 = vmatpush.bf16.msra.mxu0 %v665
    %2007 = vmatpush.bf16.msra.mxu0 %v657
    %2008 = vmatpush.bf16.msra.mxu0 %v649
    %2009 = vmatpush.bf16.msra.mxu0 %v641
    %2010 = vmatpush.bf16.msra.mxu0 %v633
    %2011 = vmatpush.bf16.msra.mxu0 %v625
    %2012 = vmatpush.bf16.msra.mxu0 %v617
    %2013 = vmatpush.bf16.msra.mxu0 %v609
    %2014 = vmatmul.bf16.gmra.mxu0 %v1952
    %v2015 = vpop.f32.mrf.mxu0
    %v2016 = vadd.f32 0.0, %v2015
    %v2017 = vpop.f32.mrf.mxu0
    %2018 = vdwg.mxu0
    %2019 = vmatpush.bf16.msra.mxu0 %v729
    %2020 = vmatpush.bf16.msra.mxu0 %v721
    %2021 = vmatpush.bf16.msra.mxu0 %v713
    %2022 = vmatpush.bf16.msra.mxu0 %v705
    %2023 = vmatpush.bf16.msra.mxu0 %v697
    %2024 = vmatpush.bf16.msra.mxu0 %v689
    %2025 = vmatpush.bf16.msra.mxu0 %v681
    %2026 = vmatpush.bf16.msra.mxu0 %v673
    %2027 = vmatmul.bf16.gmra.mxu0 %v1953
    %v2028 = vpop.f32.mrf.mxu0
    %v2029 = vadd.f32 %v2016, %v2028
    %v2030 = vpop.f32.mrf.mxu0
    %2031 = vdwg.mxu0
    %2032 = vmatpush.bf16.msra.mxu0 %v666
    %2033 = vmatpush.bf16.msra.mxu0 %v658
    %2034 = vmatpush.bf16.msra.mxu0 %v650
    %2035 = vmatpush.bf16.msra.mxu0 %v642
    %2036 = vmatpush.bf16.msra.mxu0 %v634
    %2037 = vmatpush.bf16.msra.mxu0 %v626
    %2038 = vmatpush.bf16.msra.mxu0 %v618
    %2039 = vmatpush.bf16.msra.mxu0 %v610
    %2040 = vmatmul.bf16.gmra.mxu0 %v1952
    %v2041 = vpop.f32.mrf.mxu0
    %v2042 = vadd.f32 0.0, %v2041
    %v2043 = vpop.f32.mrf.mxu0
    %2044 = vdwg.mxu0
    %2045 = vmatpush.bf16.msra.mxu0 %v730
    %2046 = vmatpush.bf16.msra.mxu0 %v722
    %2047 = vmatpush.bf16.msra.mxu0 %v714
    %2048 = vmatpush.bf16.msra.mxu0 %v706
    %2049 = vmatpush.bf16.msra.mxu0 %v698
    %2050 = vmatpush.bf16.msra.mxu0 %v690
    %2051 = vmatpush.bf16.msra.mxu0 %v682
    %2052 = vmatpush.bf16.msra.mxu0 %v674
    %2053 = vmatmul.bf16.gmra.mxu0 %v1953
    %v2054 = vpop.f32.mrf.mxu0
    %v2055 = vadd.f32 %v2042, %v2054
    %v2056 = vpop.f32.mrf.mxu0
    %2057 = vdwg.mxu0
    %2058 = vmatpush.bf16.msra.mxu0 %v667
    %2059 = vmatpush.bf16.msra.mxu0 %v659
    %2060 = vmatpush.bf16.msra.mxu0 %v651
    %2061 = vmatpush.bf16.msra.mxu0 %v643
    %2062 = vmatpush.bf16.msra.mxu0 %v635
    %2063 = vmatpush.bf16.msra.mxu0 %v627
    %2064 = vmatpush.bf16.msra.mxu0 %v619
    %2065 = vmatpush.bf16.msra.mxu0 %v611
    %2066 = vmatmul.bf16.gmra.mxu0 %v1952
    %v2067 = vpop.f32.mrf.mxu0
    %v2068 = vadd.f32 0.0, %v2067
    %v2069 = vpop.f32.mrf.mxu0
    %2070 = vdwg.mxu0
    %2071 = vmatpush.bf16.msra.mxu0 %v731
    %2072 = vmatpush.bf16.msra.mxu0 %v723
    %2073 = vmatpush.bf16.msra.mxu0 %v715
    %2074 = vmatpush.bf16.msra.mxu0 %v707
    %2075 = vmatpush.bf16.msra.mxu0 %v699
    %2076 = vmatpush.bf16.msra.mxu0 %v691
    %2077 = vmatpush.bf16.msra.mxu0 %v683
    %2078 = vmatpush.bf16.msra.mxu0 %v675
    %2079 = vmatmul.bf16.gmra.mxu0 %v1953
    %v2080 = vpop.f32.mrf.mxu0
    %v2081 = vadd.f32 %v2068, %v2080
    %v2082 = vpop.f32.mrf.mxu0
    %2083 = vdwg.mxu0
    %2084 = vmatpush.bf16.msra.mxu0 %v668
    %2085 = vmatpush.bf16.msra.mxu0 %v660
    %2086 = vmatpush.bf16.msra.mxu0 %v652
    %2087 = vmatpush.bf16.msra.mxu0 %v644
    %2088 = vmatpush.bf16.msra.mxu0 %v636
    %2089 = vmatpush.bf16.msra.mxu0 %v628
    %2090 = vmatpush.bf16.msra.mxu0 %v620
    %2091 = vmatpush.bf16.msra.mxu0 %v612
    %2092 = vmatmul.bf16.gmra.mxu0 %v1952
    %v2093 = vpop.f32.mrf.mxu0
    %v2094 = vadd.f32 0.0, %v2093
    %v2095 = vpop.f32.mrf.mxu0
    %2096 = vdwg.mxu0
    %2097 = vmatpush.bf16.msra.mxu0 %v732
    %2098 = vmatpush.bf16.msra.mxu0 %v724
    %2099 = vmatpush.bf16.msra.mxu0 %v716
    %2100 = vmatpush.bf16.msra.mxu0 %v708
    %2101 = vmatpush.bf16.msra.mxu0 %v700
    %2102 = vmatpush.bf16.msra.mxu0 %v692
    %2103 = vmatpush.bf16.msra.mxu0 %v684
    %2104 = vmatpush.bf16.msra.mxu0 %v676
    %2105 = vmatmul.bf16.gmra.mxu0 %v1953
    %v2106 = vpop.f32.mrf.mxu0
    %v2107 = vadd.f32 %v2094, %v2106
    %v2108 = vpop.f32.mrf.mxu0
    %2109 = vdwg.mxu0
    %2110 = vmatpush.bf16.msra.mxu0 %v669
    %2111 = vmatpush.bf16.msra.mxu0 %v661
    %2112 = vmatpush.bf16.msra.mxu0 %v653
    %2113 = vmatpush.bf16.msra.mxu0 %v645
    %2114 = vmatpush.bf16.msra.mxu0 %v637
    %2115 = vmatpush.bf16.msra.mxu0 %v629
    %2116 = vmatpush.bf16.msra.mxu0 %v621
    %2117 = vmatpush.bf16.msra.mxu0 %v613
    %2118 = vmatmul.bf16.gmra.mxu0 %v1952
    %v2119 = vpop.f32.mrf.mxu0
    %v2120 = vadd.f32 0.0, %v2119
    %v2121 = vpop.f32.mrf.mxu0
    %2122 = vdwg.mxu0
    %2123 = vmatpush.bf16.msra.mxu0 %v733
    %2124 = vmatpush.bf16.msra.mxu0 %v725
    %2125 = vmatpush.bf16.msra.mxu0 %v717
    %2126 = vmatpush.bf16.msra.mxu0 %v709
    %2127 = vmatpush.bf16.msra.mxu0 %v701
    %2128 = vmatpush.bf16.msra.mxu0 %v693
    %2129 = vmatpush.bf16.msra.mxu0 %v685
    %2130 = vmatpush.bf16.msra.mxu0 %v677
    %2131 = vmatmul.bf16.gmra.mxu0 %v1953
    %v2132 = vpop.f32.mrf.mxu0
    %v2133 = vadd.f32 %v2120, %v2132
    %v2134 = vpop.f32.mrf.mxu0
    %2135 = vdwg.mxu0
    %2136 = vmatpush.bf16.msra.mxu0 %v670
    %2137 = vmatpush.bf16.msra.mxu0 %v662
    %2138 = vmatpush.bf16.msra.mxu0 %v654
    %2139 = vmatpush.bf16.msra.mxu0 %v646
    %2140 = vmatpush.bf16.msra.mxu0 %v638
    %2141 = vmatpush.bf16.msra.mxu0 %v630
    %2142 = vmatpush.bf16.msra.mxu0 %v622
    %2143 = vmatpush.bf16.msra.mxu0 %v614
    %2144 = vmatmul.bf16.gmra.mxu0 %v1952
    %v2145 = vpop.f32.mrf.mxu0
    %v2146 = vadd.f32 0.0, %v2145
    %v2147 = vpop.f32.mrf.mxu0
    %2148 = vdwg.mxu0
    %2149 = vmatpush.bf16.msra.mxu0 %v734
    %2150 = vmatpush.bf16.msra.mxu0 %v726
    %2151 = vmatpush.bf16.msra.mxu0 %v718
    %2152 = vmatpush.bf16.msra.mxu0 %v710
    %2153 = vmatpush.bf16.msra.mxu0 %v702
    %2154 = vmatpush.bf16.msra.mxu0 %v694
    %2155 = vmatpush.bf16.msra.mxu0 %v686
    %2156 = vmatpush.bf16.msra.mxu0 %v678
    %2157 = vmatmul.bf16.gmra.mxu0 %v1953
    %v2158 = vpop.f32.mrf.mxu0
    %v2159 = vadd.f32 %v2146, %v2158
    %v2160 = vpop.f32.mrf.mxu0
    %2161 = vdwg.mxu0
    %v2170 = vrot.slane %v2003, 7
    %v2171 = vrot.slane %v2029, 6
    %v2172 = vrot.slane %v2055, 5
    %v2173 = vrot.slane %v2081, 4
    %v2174 = vrot.slane %v2107, 3
    %v2175 = vrot.slane %v2133, 2
    %v2176 = vrot.slane %v2159, 1
    %v2177 = vsel %vm1086, %v1977, %v2170
    %v2178 = vsel %vm1088, %v2171, %v2172
    %v2179 = vsel %vm1090, %v2177, %v2178
    %v2180 = vsel %vm1092, %v2173, %v2174
    %v2181 = vsel %vm1094, %v2175, %v2176
    %v2182 = vsel %vm1096, %v2180, %v2181
    %v2183 = vsel %vm1098, %v2179, %v2182
    %v2185 = vadd.f32 %v1946, %v2183
    %v2186 = vsub.f32 0.0, %v2185
    %v2187 = vmul.f32 %v2186, 1.442695
    %v2188 = vpow.pop %v2187
    %v2189 = vadd.f32 %v2188, 1.0
    %v2190 = vrcp.pop %v2189
    %v2192 = vrot.slane %v2185, 2
    %v2194 = vsub.f32 0.0, %v2192
    %v2195 = vmul.f32 %v2194, 1.442695
    %v2196 = vpow.pop %v2195
    %v2197 = vadd.f32 %v2196, 1.0
    %v2198 = vrcp.pop %v2197
    %v2199 = vrot.slane %v2185, 4
    %v2201 = vtanh.pop %v2199
    %v2202 = vrot.slane %v2185, 6
    %v2204 = vsub.f32 0.0, %v2202
    %v2205 = vmul.f32 %v2204, 1.442695
    %v2206 = vpow.pop %v2205
    %v2207 = vadd.f32 %v2206, 1.0
    %v2208 = vrcp.pop %v2207
    %v2209 = vmul.f32 %v2198, %v1940
    %v2210 = vmul.f32 %v2190, %v2201
    %v2211 = vadd.f32 %v2209, %v2210
    %v2212 = vtanh.pop %v2211
    %v2213 = vmul.f32 %v2208, %v2212
    %s2214 = scalar_lea.vmem [#allocation2], 5
    %v2215 = vld [vmem:[%s2214] ss:$8 sm:$0xf]
    %v2216 = vld [vmem:[%s2214] ss:$8 sm:$0xf0]
    %v2217 = vor.u32 %v2215, %v2216
    %v2219 = vperm.slane %v2213, 0
    %v2220 = vperm.slane %v2213, 1
    %v2223 = vpack.c.bf16 %v2219, %v2219
    %v2224 = vpack.c.bf16 %v2220, %v2220
    %2225 = vmatpush.bf16.msra.mxu0 %v663
    %2226 = vmatpush.bf16.msra.mxu0 %v655
    %2227 = vmatpush.bf16.msra.mxu0 %v647
    %2228 = vmatpush.bf16.msra.mxu0 %v639
    %2229 = vmatpush.bf16.msra.mxu0 %v631
    %2230 = vmatpush.bf16.msra.mxu0 %v623
    %2231 = vmatpush.bf16.msra.mxu0 %v615
    %2232 = vmatpush.bf16.msra.mxu0 %v607
    %2233 = vmatmul.bf16.gmra.mxu0 %v2223
    %v2234 = vpop.f32.mrf.mxu0
    %v2235 = vadd.f32 0.0, %v2234
    %v2236 = vpop.f32.mrf.mxu0
    %2237 = vdwg.mxu0
    %2238 = vmatpush.bf16.msra.mxu0 %v727
    %2239 = vmatpush.bf16.msra.mxu0 %v719
    %2240 = vmatpush.bf16.msra.mxu0 %v711
    %2241 = vmatpush.bf16.msra.mxu0 %v703
    %2242 = vmatpush.bf16.msra.mxu0 %v695
    %2243 = vmatpush.bf16.msra.mxu0 %v687
    %2244 = vmatpush.bf16.msra.mxu0 %v679
    %2245 = vmatpush.bf16.msra.mxu0 %v671
    %2246 = vmatmul.bf16.gmra.mxu0 %v2224
    %v2247 = vpop.f32.mrf.mxu0
    %v2248 = vadd.f32 %v2235, %v2247
    %v2249 = vpop.f32.mrf.mxu0
    %2250 = vdwg.mxu0
    %2251 = vmatpush.bf16.msra.mxu0 %v664
    %2252 = vmatpush.bf16.msra.mxu0 %v656
    %2253 = vmatpush.bf16.msra.mxu0 %v648
    %2254 = vmatpush.bf16.msra.mxu0 %v640
    %2255 = vmatpush.bf16.msra.mxu0 %v632
    %2256 = vmatpush.bf16.msra.mxu0 %v624
    %2257 = vmatpush.bf16.msra.mxu0 %v616
    %2258 = vmatpush.bf16.msra.mxu0 %v608
    %2259 = vmatmul.bf16.gmra.mxu0 %v2223
    %v2260 = vpop.f32.mrf.mxu0
    %v2261 = vadd.f32 0.0, %v2260
    %v2262 = vpop.f32.mrf.mxu0
    %2263 = vdwg.mxu0
    %2264 = vmatpush.bf16.msra.mxu0 %v728
    %2265 = vmatpush.bf16.msra.mxu0 %v720
    %2266 = vmatpush.bf16.msra.mxu0 %v712
    %2267 = vmatpush.bf16.msra.mxu0 %v704
    %2268 = vmatpush.bf16.msra.mxu0 %v696
    %2269 = vmatpush.bf16.msra.mxu0 %v688
    %2270 = vmatpush.bf16.msra.mxu0 %v680
    %2271 = vmatpush.bf16.msra.mxu0 %v672
    %2272 = vmatmul.bf16.gmra.mxu0 %v2224
    %v2273 = vpop.f32.mrf.mxu0
    %v2274 = vadd.f32 %v2261, %v2273
    %v2275 = vpop.f32.mrf.mxu0
    %2276 = vdwg.mxu0
    %2277 = vmatpush.bf16.msra.mxu0 %v665
    %2278 = vmatpush.bf16.msra.mxu0 %v657
    %2279 = vmatpush.bf16.msra.mxu0 %v649
    %2280 = vmatpush.bf16.msra.mxu0 %v641
    %2281 = vmatpush.bf16.msra.mxu0 %v633
    %2282 = vmatpush.bf16.msra.mxu0 %v625
    %2283 = vmatpush.bf16.msra.mxu0 %v617
    %2284 = vmatpush.bf16.msra.mxu0 %v609
    %2285 = vmatmul.bf16.gmra.mxu0 %v2223
    %v2286 = vpop.f32.mrf.mxu0
    %v2287 = vadd.f32 0.0, %v2286
    %v2288 = vpop.f32.mrf.mxu0
    %2289 = vdwg.mxu0
    %2290 = vmatpush.bf16.msra.mxu0 %v729
    %2291 = vmatpush.bf16.msra.mxu0 %v721
    %2292 = vmatpush.bf16.msra.mxu0 %v713
    %2293 = vmatpush.bf16.msra.mxu0 %v705
    %2294 = vmatpush.bf16.msra.mxu0 %v697
    %2295 = vmatpush.bf16.msra.mxu0 %v689
    %2296 = vmatpush.bf16.msra.mxu0 %v681
    %2297 = vmatpush.bf16.msra.mxu0 %v673
    %2298 = vmatmul.bf16.gmra.mxu0 %v2224
    %v2299 = vpop.f32.mrf.mxu0
    %v2300 = vadd.f32 %v2287, %v2299
    %v2301 = vpop.f32.mrf.mxu0
    %2302 = vdwg.mxu0
    %2303 = vmatpush.bf16.msra.mxu0 %v666
    %2304 = vmatpush.bf16.msra.mxu0 %v658
    %2305 = vmatpush.bf16.msra.mxu0 %v650
    %2306 = vmatpush.bf16.msra.mxu0 %v642
    %2307 = vmatpush.bf16.msra.mxu0 %v634
    %2308 = vmatpush.bf16.msra.mxu0 %v626
    %2309 = vmatpush.bf16.msra.mxu0 %v618
    %2310 = vmatpush.bf16.msra.mxu0 %v610
    %2311 = vmatmul.bf16.gmra.mxu0 %v2223
    %v2312 = vpop.f32.mrf.mxu0
    %v2313 = vadd.f32 0.0, %v2312
    %v2314 = vpop.f32.mrf.mxu0
    %2315 = vdwg.mxu0
    %2316 = vmatpush.bf16.msra.mxu0 %v730
    %2317 = vmatpush.bf16.msra.mxu0 %v722
    %2318 = vmatpush.bf16.msra.mxu0 %v714
    %2319 = vmatpush.bf16.msra.mxu0 %v706
    %2320 = vmatpush.bf16.msra.mxu0 %v698
    %2321 = vmatpush.bf16.msra.mxu0 %v690
    %2322 = vmatpush.bf16.msra.mxu0 %v682
    %2323 = vmatpush.bf16.msra.mxu0 %v674
    %2324 = vmatmul.bf16.gmra.mxu0 %v2224
    %v2325 = vpop.f32.mrf.mxu0
    %v2326 = vadd.f32 %v2313, %v2325
    %v2327 = vpop.f32.mrf.mxu0
    %2328 = vdwg.mxu0
    %2329 = vmatpush.bf16.msra.mxu0 %v667
    %2330 = vmatpush.bf16.msra.mxu0 %v659
    %2331 = vmatpush.bf16.msra.mxu0 %v651
    %2332 = vmatpush.bf16.msra.mxu0 %v643
    %2333 = vmatpush.bf16.msra.mxu0 %v635
    %2334 = vmatpush.bf16.msra.mxu0 %v627
    %2335 = vmatpush.bf16.msra.mxu0 %v619
    %2336 = vmatpush.bf16.msra.mxu0 %v611
    %2337 = vmatmul.bf16.gmra.mxu0 %v2223
    %v2338 = vpop.f32.mrf.mxu0
    %v2339 = vadd.f32 0.0, %v2338
    %v2340 = vpop.f32.mrf.mxu0
    %2341 = vdwg.mxu0
    %2342 = vmatpush.bf16.msra.mxu0 %v731
    %2343 = vmatpush.bf16.msra.mxu0 %v723
    %2344 = vmatpush.bf16.msra.mxu0 %v715
    %2345 = vmatpush.bf16.msra.mxu0 %v707
    %2346 = vmatpush.bf16.msra.mxu0 %v699
    %2347 = vmatpush.bf16.msra.mxu0 %v691
    %2348 = vmatpush.bf16.msra.mxu0 %v683
    %2349 = vmatpush.bf16.msra.mxu0 %v675
    %2350 = vmatmul.bf16.gmra.mxu0 %v2224
    %v2351 = vpop.f32.mrf.mxu0
    %v2352 = vadd.f32 %v2339, %v2351
    %v2353 = vpop.f32.mrf.mxu0
    %2354 = vdwg.mxu0
    %2355 = vmatpush.bf16.msra.mxu0 %v668
    %2356 = vmatpush.bf16.msra.mxu0 %v660
    %2357 = vmatpush.bf16.msra.mxu0 %v652
    %2358 = vmatpush.bf16.msra.mxu0 %v644
    %2359 = vmatpush.bf16.msra.mxu0 %v636
    %2360 = vmatpush.bf16.msra.mxu0 %v628
    %2361 = vmatpush.bf16.msra.mxu0 %v620
    %2362 = vmatpush.bf16.msra.mxu0 %v612
    %2363 = vmatmul.bf16.gmra.mxu0 %v2223
    %v2364 = vpop.f32.mrf.mxu0
    %v2365 = vadd.f32 0.0, %v2364
    %v2366 = vpop.f32.mrf.mxu0
    %2367 = vdwg.mxu0
    %2368 = vmatpush.bf16.msra.mxu0 %v732
    %2369 = vmatpush.bf16.msra.mxu0 %v724
    %2370 = vmatpush.bf16.msra.mxu0 %v716
    %2371 = vmatpush.bf16.msra.mxu0 %v708
    %2372 = vmatpush.bf16.msra.mxu0 %v700
    %2373 = vmatpush.bf16.msra.mxu0 %v692
    %2374 = vmatpush.bf16.msra.mxu0 %v684
    %2375 = vmatpush.bf16.msra.mxu0 %v676
    %2376 = vmatmul.bf16.gmra.mxu0 %v2224
    %v2377 = vpop.f32.mrf.mxu0
    %v2378 = vadd.f32 %v2365, %v2377
    %v2379 = vpop.f32.mrf.mxu0
    %2380 = vdwg.mxu0
    %2381 = vmatpush.bf16.msra.mxu0 %v669
    %2382 = vmatpush.bf16.msra.mxu0 %v661
    %2383 = vmatpush.bf16.msra.mxu0 %v653
    %2384 = vmatpush.bf16.msra.mxu0 %v645
    %2385 = vmatpush.bf16.msra.mxu0 %v637
    %2386 = vmatpush.bf16.msra.mxu0 %v629
    %2387 = vmatpush.bf16.msra.mxu0 %v621
    %2388 = vmatpush.bf16.msra.mxu0 %v613
    %2389 = vmatmul.bf16.gmra.mxu0 %v2223
    %v2390 = vpop.f32.mrf.mxu0
    %v2391 = vadd.f32 0.0, %v2390
    %v2392 = vpop.f32.mrf.mxu0
    %2393 = vdwg.mxu0
    %2394 = vmatpush.bf16.msra.mxu0 %v733
    %2395 = vmatpush.bf16.msra.mxu0 %v725
    %2396 = vmatpush.bf16.msra.mxu0 %v717
    %2397 = vmatpush.bf16.msra.mxu0 %v709
    %2398 = vmatpush.bf16.msra.mxu0 %v701
    %2399 = vmatpush.bf16.msra.mxu0 %v693
    %2400 = vmatpush.bf16.msra.mxu0 %v685
    %2401 = vmatpush.bf16.msra.mxu0 %v677
    %2402 = vmatmul.bf16.gmra.mxu0 %v2224
    %v2403 = vpop.f32.mrf.mxu0
    %v2404 = vadd.f32 %v2391, %v2403
    %v2405 = vpop.f32.mrf.mxu0
    %2406 = vdwg.mxu0
    %2407 = vmatpush.bf16.msra.mxu0 %v670
    %2408 = vmatpush.bf16.msra.mxu0 %v662
    %2409 = vmatpush.bf16.msra.mxu0 %v654
    %2410 = vmatpush.bf16.msra.mxu0 %v646
    %2411 = vmatpush.bf16.msra.mxu0 %v638
    %2412 = vmatpush.bf16.msra.mxu0 %v630
    %2413 = vmatpush.bf16.msra.mxu0 %v622
    %2414 = vmatpush.bf16.msra.mxu0 %v614
    %2415 = vmatmul.bf16.gmra.mxu0 %v2223
    %v2416 = vpop.f32.mrf.mxu0
    %v2417 = vadd.f32 0.0, %v2416
    %v2418 = vpop.f32.mrf.mxu0
    %2419 = vdwg.mxu0
    %2420 = vmatpush.bf16.msra.mxu0 %v734
    %2421 = vmatpush.bf16.msra.mxu0 %v726
    %2422 = vmatpush.bf16.msra.mxu0 %v718
    %2423 = vmatpush.bf16.msra.mxu0 %v710
    %2424 = vmatpush.bf16.msra.mxu0 %v702
    %2425 = vmatpush.bf16.msra.mxu0 %v694
    %2426 = vmatpush.bf16.msra.mxu0 %v686
    %2427 = vmatpush.bf16.msra.mxu0 %v678
    %2428 = vmatmul.bf16.gmra.mxu0 %v2224
    %v2429 = vpop.f32.mrf.mxu0
    %v2430 = vadd.f32 %v2417, %v2429
    %v2431 = vpop.f32.mrf.mxu0
    %2432 = vdwg.mxu0
    %v2441 = vrot.slane %v2274, 7
    %v2442 = vrot.slane %v2300, 6
    %v2443 = vrot.slane %v2326, 5
    %v2444 = vrot.slane %v2352, 4
    %v2445 = vrot.slane %v2378, 3
    %v2446 = vrot.slane %v2404, 2
    %v2447 = vrot.slane %v2430, 1
    %v2448 = vsel %vm1086, %v2248, %v2441
    %v2449 = vsel %vm1088, %v2442, %v2443
    %v2450 = vsel %vm1090, %v2448, %v2449
    %v2451 = vsel %vm1092, %v2444, %v2445
    %v2452 = vsel %vm1094, %v2446, %v2447
    %v2453 = vsel %vm1096, %v2451, %v2452
    %v2454 = vsel %vm1098, %v2450, %v2453
    %v2456 = vadd.f32 %v2217, %v2454
    %v2457 = vsub.f32 0.0, %v2456
    %v2458 = vmul.f32 %v2457, 1.442695
    %v2459 = vpow.pop %v2458
    %v2460 = vadd.f32 %v2459, 1.0
    %v2461 = vrcp.pop %v2460
    %v2463 = vrot.slane %v2456, 2
    %v2465 = vsub.f32 0.0, %v2463
    %v2466 = vmul.f32 %v2465, 1.442695
    %v2467 = vpow.pop %v2466
    %v2468 = vadd.f32 %v2467, 1.0
    %v2469 = vrcp.pop %v2468
    %v2470 = vrot.slane %v2456, 4
    %v2472 = vtanh.pop %v2470
    %v2473 = vrot.slane %v2456, 6
    %v2475 = vsub.f32 0.0, %v2473
    %v2476 = vmul.f32 %v2475, 1.442695
    %v2477 = vpow.pop %v2476
    %v2478 = vadd.f32 %v2477, 1.0
    %v2479 = vrcp.pop %v2478
    %v2480 = vmul.f32 %v2469, %v2211
    %v2481 = vmul.f32 %v2461, %v2472
    %v2482 = vadd.f32 %v2480, %v2481
    %v2483 = vtanh.pop %v2482
    %v2484 = vmul.f32 %v2479, %v2483
    %s2485 = scalar_lea.vmem [#allocation2], 6
    %v2486 = vld [vmem:[%s2485] ss:$8 sm:$0xf]
    %v2487 = vld [vmem:[%s2485] ss:$8 sm:$0xf0]
    %v2488 = vor.u32 %v2486, %v2487
    %v2490 = vperm.slane %v2484, 0
    %v2491 = vperm.slane %v2484, 1
    %v2494 = vpack.c.bf16 %v2490, %v2490
    %v2495 = vpack.c.bf16 %v2491, %v2491
    %2496 = vmatpush.bf16.msra.mxu0 %v663
    %2497 = vmatpush.bf16.msra.mxu0 %v655
    %2498 = vmatpush.bf16.msra.mxu0 %v647
    %2499 = vmatpush.bf16.msra.mxu0 %v639
    %2500 = vmatpush.bf16.msra.mxu0 %v631
    %2501 = vmatpush.bf16.msra.mxu0 %v623
    %2502 = vmatpush.bf16.msra.mxu0 %v615
    %2503 = vmatpush.bf16.msra.mxu0 %v607
    %2504 = vmatmul.bf16.gmra.mxu0 %v2494
    %v2505 = vpop.f32.mrf.mxu0
    %v2506 = vadd.f32 0.0, %v2505
    %v2507 = vpop.f32.mrf.mxu0
    %2508 = vdwg.mxu0
    %2509 = vmatpush.bf16.msra.mxu0 %v727
    %2510 = vmatpush.bf16.msra.mxu0 %v719
    %2511 = vmatpush.bf16.msra.mxu0 %v711
    %2512 = vmatpush.bf16.msra.mxu0 %v703
    %2513 = vmatpush.bf16.msra.mxu0 %v695
    %2514 = vmatpush.bf16.msra.mxu0 %v687
    %2515 = vmatpush.bf16.msra.mxu0 %v679
    %2516 = vmatpush.bf16.msra.mxu0 %v671
    %2517 = vmatmul.bf16.gmra.mxu0 %v2495
    %v2518 = vpop.f32.mrf.mxu0
    %v2519 = vadd.f32 %v2506, %v2518
    %v2520 = vpop.f32.mrf.mxu0
    %2521 = vdwg.mxu0
    %2522 = vmatpush.bf16.msra.mxu0 %v664
    %2523 = vmatpush.bf16.msra.mxu0 %v656
    %2524 = vmatpush.bf16.msra.mxu0 %v648
    %2525 = vmatpush.bf16.msra.mxu0 %v640
    %2526 = vmatpush.bf16.msra.mxu0 %v632
    %2527 = vmatpush.bf16.msra.mxu0 %v624
    %2528 = vmatpush.bf16.msra.mxu0 %v616
    %2529 = vmatpush.bf16.msra.mxu0 %v608
    %2530 = vmatmul.bf16.gmra.mxu0 %v2494
    %v2531 = vpop.f32.mrf.mxu0
    %v2532 = vadd.f32 0.0, %v2531
    %v2533 = vpop.f32.mrf.mxu0
    %2534 = vdwg.mxu0
    %2535 = vmatpush.bf16.msra.mxu0 %v728
    %2536 = vmatpush.bf16.msra.mxu0 %v720
    %2537 = vmatpush.bf16.msra.mxu0 %v712
    %2538 = vmatpush.bf16.msra.mxu0 %v704
    %2539 = vmatpush.bf16.msra.mxu0 %v696
    %2540 = vmatpush.bf16.msra.mxu0 %v688
    %2541 = vmatpush.bf16.msra.mxu0 %v680
    %2542 = vmatpush.bf16.msra.mxu0 %v672
    %2543 = vmatmul.bf16.gmra.mxu0 %v2495
    %v2544 = vpop.f32.mrf.mxu0
    %v2545 = vadd.f32 %v2532, %v2544
    %v2546 = vpop.f32.mrf.mxu0
    %2547 = vdwg.mxu0
    %2548 = vmatpush.bf16.msra.mxu0 %v665
    %2549 = vmatpush.bf16.msra.mxu0 %v657
    %2550 = vmatpush.bf16.msra.mxu0 %v649
    %2551 = vmatpush.bf16.msra.mxu0 %v641
    %2552 = vmatpush.bf16.msra.mxu0 %v633
    %2553 = vmatpush.bf16.msra.mxu0 %v625
    %2554 = vmatpush.bf16.msra.mxu0 %v617
    %2555 = vmatpush.bf16.msra.mxu0 %v609
    %2556 = vmatmul.bf16.gmra.mxu0 %v2494
    %v2557 = vpop.f32.mrf.mxu0
    %v2558 = vadd.f32 0.0, %v2557
    %v2559 = vpop.f32.mrf.mxu0
    %2560 = vdwg.mxu0
    %2561 = vmatpush.bf16.msra.mxu0 %v729
    %2562 = vmatpush.bf16.msra.mxu0 %v721
    %2563 = vmatpush.bf16.msra.mxu0 %v713
    %2564 = vmatpush.bf16.msra.mxu0 %v705
    %2565 = vmatpush.bf16.msra.mxu0 %v697
    %2566 = vmatpush.bf16.msra.mxu0 %v689
    %2567 = vmatpush.bf16.msra.mxu0 %v681
    %2568 = vmatpush.bf16.msra.mxu0 %v673
    %2569 = vmatmul.bf16.gmra.mxu0 %v2495
    %v2570 = vpop.f32.mrf.mxu0
    %v2571 = vadd.f32 %v2558, %v2570
    %v2572 = vpop.f32.mrf.mxu0
    %2573 = vdwg.mxu0
    %2574 = vmatpush.bf16.msra.mxu0 %v666
    %2575 = vmatpush.bf16.msra.mxu0 %v658
    %2576 = vmatpush.bf16.msra.mxu0 %v650
    %2577 = vmatpush.bf16.msra.mxu0 %v642
    %2578 = vmatpush.bf16.msra.mxu0 %v634
    %2579 = vmatpush.bf16.msra.mxu0 %v626
    %2580 = vmatpush.bf16.msra.mxu0 %v618
    %2581 = vmatpush.bf16.msra.mxu0 %v610
    %2582 = vmatmul.bf16.gmra.mxu0 %v2494
    %v2583 = vpop.f32.mrf.mxu0
    %v2584 = vadd.f32 0.0, %v2583
    %v2585 = vpop.f32.mrf.mxu0
    %2586 = vdwg.mxu0
    %2587 = vmatpush.bf16.msra.mxu0 %v730
    %2588 = vmatpush.bf16.msra.mxu0 %v722
    %2589 = vmatpush.bf16.msra.mxu0 %v714
    %2590 = vmatpush.bf16.msra.mxu0 %v706
    %2591 = vmatpush.bf16.msra.mxu0 %v698
    %2592 = vmatpush.bf16.msra.mxu0 %v690
    %2593 = vmatpush.bf16.msra.mxu0 %v682
    %2594 = vmatpush.bf16.msra.mxu0 %v674
    %2595 = vmatmul.bf16.gmra.mxu0 %v2495
    %v2596 = vpop.f32.mrf.mxu0
    %v2597 = vadd.f32 %v2584, %v2596
    %v2598 = vpop.f32.mrf.mxu0
    %2599 = vdwg.mxu0
    %2600 = vmatpush.bf16.msra.mxu0 %v667
    %2601 = vmatpush.bf16.msra.mxu0 %v659
    %2602 = vmatpush.bf16.msra.mxu0 %v651
    %2603 = vmatpush.bf16.msra.mxu0 %v643
    %2604 = vmatpush.bf16.msra.mxu0 %v635
    %2605 = vmatpush.bf16.msra.mxu0 %v627
    %2606 = vmatpush.bf16.msra.mxu0 %v619
    %2607 = vmatpush.bf16.msra.mxu0 %v611
    %2608 = vmatmul.bf16.gmra.mxu0 %v2494
    %v2609 = vpop.f32.mrf.mxu0
    %v2610 = vadd.f32 0.0, %v2609
    %v2611 = vpop.f32.mrf.mxu0
    %2612 = vdwg.mxu0
    %2613 = vmatpush.bf16.msra.mxu0 %v731
    %2614 = vmatpush.bf16.msra.mxu0 %v723
    %2615 = vmatpush.bf16.msra.mxu0 %v715
    %2616 = vmatpush.bf16.msra.mxu0 %v707
    %2617 = vmatpush.bf16.msra.mxu0 %v699
    %2618 = vmatpush.bf16.msra.mxu0 %v691
    %2619 = vmatpush.bf16.msra.mxu0 %v683
    %2620 = vmatpush.bf16.msra.mxu0 %v675
    %2621 = vmatmul.bf16.gmra.mxu0 %v2495
    %v2622 = vpop.f32.mrf.mxu0
    %v2623 = vadd.f32 %v2610, %v2622
    %v2624 = vpop.f32.mrf.mxu0
    %2625 = vdwg.mxu0
    %2626 = vmatpush.bf16.msra.mxu0 %v668
    %2627 = vmatpush.bf16.msra.mxu0 %v660
    %2628 = vmatpush.bf16.msra.mxu0 %v652
    %2629 = vmatpush.bf16.msra.mxu0 %v644
    %2630 = vmatpush.bf16.msra.mxu0 %v636
    %2631 = vmatpush.bf16.msra.mxu0 %v628
    %2632 = vmatpush.bf16.msra.mxu0 %v620
    %2633 = vmatpush.bf16.msra.mxu0 %v612
    %2634 = vmatmul.bf16.gmra.mxu0 %v2494
    %v2635 = vpop.f32.mrf.mxu0
    %v2636 = vadd.f32 0.0, %v2635
    %v2637 = vpop.f32.mrf.mxu0
    %2638 = vdwg.mxu0
    %2639 = vmatpush.bf16.msra.mxu0 %v732
    %2640 = vmatpush.bf16.msra.mxu0 %v724
    %2641 = vmatpush.bf16.msra.mxu0 %v716
    %2642 = vmatpush.bf16.msra.mxu0 %v708
    %2643 = vmatpush.bf16.msra.mxu0 %v700
    %2644 = vmatpush.bf16.msra.mxu0 %v692
    %2645 = vmatpush.bf16.msra.mxu0 %v684
    %2646 = vmatpush.bf16.msra.mxu0 %v676
    %2647 = vmatmul.bf16.gmra.mxu0 %v2495
    %v2648 = vpop.f32.mrf.mxu0
    %v2649 = vadd.f32 %v2636, %v2648
    %v2650 = vpop.f32.mrf.mxu0
    %2651 = vdwg.mxu0
    %2652 = vmatpush.bf16.msra.mxu0 %v669
    %2653 = vmatpush.bf16.msra.mxu0 %v661
    %2654 = vmatpush.bf16.msra.mxu0 %v653
    %2655 = vmatpush.bf16.msra.mxu0 %v645
    %2656 = vmatpush.bf16.msra.mxu0 %v637
    %2657 = vmatpush.bf16.msra.mxu0 %v629
    %2658 = vmatpush.bf16.msra.mxu0 %v621
    %2659 = vmatpush.bf16.msra.mxu0 %v613
    %2660 = vmatmul.bf16.gmra.mxu0 %v2494
    %v2661 = vpop.f32.mrf.mxu0
    %v2662 = vadd.f32 0.0, %v2661
    %v2663 = vpop.f32.mrf.mxu0
    %2664 = vdwg.mxu0
    %2665 = vmatpush.bf16.msra.mxu0 %v733
    %2666 = vmatpush.bf16.msra.mxu0 %v725
    %2667 = vmatpush.bf16.msra.mxu0 %v717
    %2668 = vmatpush.bf16.msra.mxu0 %v709
    %2669 = vmatpush.bf16.msra.mxu0 %v701
    %2670 = vmatpush.bf16.msra.mxu0 %v693
    %2671 = vmatpush.bf16.msra.mxu0 %v685
    %2672 = vmatpush.bf16.msra.mxu0 %v677
    %2673 = vmatmul.bf16.gmra.mxu0 %v2495
    %v2674 = vpop.f32.mrf.mxu0
    %v2675 = vadd.f32 %v2662, %v2674
    %v2676 = vpop.f32.mrf.mxu0
    %2677 = vdwg.mxu0
    %2678 = vmatpush.bf16.msra.mxu0 %v670
    %2679 = vmatpush.bf16.msra.mxu0 %v662
    %2680 = vmatpush.bf16.msra.mxu0 %v654
    %2681 = vmatpush.bf16.msra.mxu0 %v646
    %2682 = vmatpush.bf16.msra.mxu0 %v638
    %2683 = vmatpush.bf16.msra.mxu0 %v630
    %2684 = vmatpush.bf16.msra.mxu0 %v622
    %2685 = vmatpush.bf16.msra.mxu0 %v614
    %2686 = vmatmul.bf16.gmra.mxu0 %v2494
    %v2687 = vpop.f32.mrf.mxu0
    %v2688 = vadd.f32 0.0, %v2687
    %v2689 = vpop.f32.mrf.mxu0
    %2690 = vdwg.mxu0
    %2691 = vmatpush.bf16.msra.mxu0 %v734
    %2692 = vmatpush.bf16.msra.mxu0 %v726
    %2693 = vmatpush.bf16.msra.mxu0 %v718
    %2694 = vmatpush.bf16.msra.mxu0 %v710
    %2695 = vmatpush.bf16.msra.mxu0 %v702
    %2696 = vmatpush.bf16.msra.mxu0 %v694
    %2697 = vmatpush.bf16.msra.mxu0 %v686
    %2698 = vmatpush.bf16.msra.mxu0 %v678
    %2699 = vmatmul.bf16.gmra.mxu0 %v2495
    %v2700 = vpop.f32.mrf.mxu0
    %v2701 = vadd.f32 %v2688, %v2700
    %v2702 = vpop.f32.mrf.mxu0
    %2703 = vdwg.mxu0
    %v2712 = vrot.slane %v2545, 7
    %v2713 = vrot.slane %v2571, 6
    %v2714 = vrot.slane %v2597, 5
    %v2715 = vrot.slane %v2623, 4
    %v2716 = vrot.slane %v2649, 3
    %v2717 = vrot.slane %v2675, 2
    %v2718 = vrot.slane %v2701, 1
    %v2719 = vsel %vm1086, %v2519, %v2712
    %v2720 = vsel %vm1088, %v2713, %v2714
    %v2721 = vsel %vm1090, %v2719, %v2720
    %v2722 = vsel %vm1092, %v2715, %v2716
    %v2723 = vsel %vm1094, %v2717, %v2718
    %v2724 = vsel %vm1096, %v2722, %v2723
    %v2725 = vsel %vm1098, %v2721, %v2724
    %v2727 = vadd.f32 %v2488, %v2725
    %v2728 = vsub.f32 0.0, %v2727
    %v2729 = vmul.f32 %v2728, 1.442695
    %v2730 = vpow.pop %v2729
    %v2731 = vadd.f32 %v2730, 1.0
    %v2732 = vrcp.pop %v2731
    %v2734 = vrot.slane %v2727, 2
    %v2736 = vsub.f32 0.0, %v2734
    %v2737 = vmul.f32 %v2736, 1.442695
    %v2738 = vpow.pop %v2737
    %v2739 = vadd.f32 %v2738, 1.0
    %v2740 = vrcp.pop %v2739
    %v2741 = vrot.slane %v2727, 4
    %v2743 = vtanh.pop %v2741
    %v2744 = vrot.slane %v2727, 6
    %v2746 = vsub.f32 0.0, %v2744
    %v2747 = vmul.f32 %v2746, 1.442695
    %v2748 = vpow.pop %v2747
    %v2749 = vadd.f32 %v2748, 1.0
    %v2750 = vrcp.pop %v2749
    %v2751 = vmul.f32 %v2740, %v2482
    %v2752 = vmul.f32 %v2732, %v2743
    %v2753 = vadd.f32 %v2751, %v2752
    %v2754 = vtanh.pop %v2753
    %v2755 = vmul.f32 %v2750, %v2754
    %s2756 = scalar_lea.vmem [#allocation2], 7
    %v2757 = vld [vmem:[%s2756] ss:$8 sm:$0xf]
    %v2758 = vld [vmem:[%s2756] ss:$8 sm:$0xf0]
    %v2759 = vor.u32 %v2757, %v2758
    %v2761 = vperm.slane %v2755, 0
    %v2762 = vperm.slane %v2755, 1
    %v2765 = vpack.c.bf16 %v2761, %v2761
    %v2766 = vpack.c.bf16 %v2762, %v2762
    %2767 = vmatpush.bf16.msra.mxu0 %v663
    %2768 = vmatpush.bf16.msra.mxu0 %v655
    %2769 = vmatpush.bf16.msra.mxu0 %v647
    %2770 = vmatpush.bf16.msra.mxu0 %v639
    %2771 = vmatpush.bf16.msra.mxu0 %v631
    %2772 = vmatpush.bf16.msra.mxu0 %v623
    %2773 = vmatpush.bf16.msra.mxu0 %v615
    %2774 = vmatpush.bf16.msra.mxu0 %v607
    %2775 = vmatmul.bf16.gmra.mxu0 %v2765
    %v2776 = vpop.f32.mrf.mxu0
    %v2777 = vadd.f32 0.0, %v2776
    %v2778 = vpop.f32.mrf.mxu0
    %2779 = vdwg.mxu0
    %2780 = vmatpush.bf16.msra.mxu0 %v727
    %2781 = vmatpush.bf16.msra.mxu0 %v719
    %2782 = vmatpush.bf16.msra.mxu0 %v711
    %2783 = vmatpush.bf16.msra.mxu0 %v703
    %2784 = vmatpush.bf16.msra.mxu0 %v695
    %2785 = vmatpush.bf16.msra.mxu0 %v687
    %2786 = vmatpush.bf16.msra.mxu0 %v679
    %2787 = vmatpush.bf16.msra.mxu0 %v671
    %2788 = vmatmul.bf16.gmra.mxu0 %v2766
    %v2789 = vpop.f32.mrf.mxu0
    %v2790 = vadd.f32 %v2777, %v2789
    %v2791 = vpop.f32.mrf.mxu0
    %2792 = vdwg.mxu0
    %2793 = vmatpush.bf16.msra.mxu0 %v664
    %2794 = vmatpush.bf16.msra.mxu0 %v656
    %2795 = vmatpush.bf16.msra.mxu0 %v648
    %2796 = vmatpush.bf16.msra.mxu0 %v640
    %2797 = vmatpush.bf16.msra.mxu0 %v632
    %2798 = vmatpush.bf16.msra.mxu0 %v624
    %2799 = vmatpush.bf16.msra.mxu0 %v616
    %2800 = vmatpush.bf16.msra.mxu0 %v608
    %2801 = vmatmul.bf16.gmra.mxu0 %v2765
    %v2802 = vpop.f32.mrf.mxu0
    %v2803 = vadd.f32 0.0, %v2802
    %v2804 = vpop.f32.mrf.mxu0
    %2805 = vdwg.mxu0
    %2806 = vmatpush.bf16.msra.mxu0 %v728
    %2807 = vmatpush.bf16.msra.mxu0 %v720
    %2808 = vmatpush.bf16.msra.mxu0 %v712
    %2809 = vmatpush.bf16.msra.mxu0 %v704
    %2810 = vmatpush.bf16.msra.mxu0 %v696
    %2811 = vmatpush.bf16.msra.mxu0 %v688
    %2812 = vmatpush.bf16.msra.mxu0 %v680
    %2813 = vmatpush.bf16.msra.mxu0 %v672
    %2814 = vmatmul.bf16.gmra.mxu0 %v2766
    %v2815 = vpop.f32.mrf.mxu0
    %v2816 = vadd.f32 %v2803, %v2815
    %v2817 = vpop.f32.mrf.mxu0
    %2818 = vdwg.mxu0
    %2819 = vmatpush.bf16.msra.mxu0 %v665
    %2820 = vmatpush.bf16.msra.mxu0 %v657
    %2821 = vmatpush.bf16.msra.mxu0 %v649
    %2822 = vmatpush.bf16.msra.mxu0 %v641
    %2823 = vmatpush.bf16.msra.mxu0 %v633
    %2824 = vmatpush.bf16.msra.mxu0 %v625
    %2825 = vmatpush.bf16.msra.mxu0 %v617
    %2826 = vmatpush.bf16.msra.mxu0 %v609
    %2827 = vmatmul.bf16.gmra.mxu0 %v2765
    %v2828 = vpop.f32.mrf.mxu0
    %v2829 = vadd.f32 0.0, %v2828
    %v2830 = vpop.f32.mrf.mxu0
    %2831 = vdwg.mxu0
    %2832 = vmatpush.bf16.msra.mxu0 %v729
    %2833 = vmatpush.bf16.msra.mxu0 %v721
    %2834 = vmatpush.bf16.msra.mxu0 %v713
    %2835 = vmatpush.bf16.msra.mxu0 %v705
    %2836 = vmatpush.bf16.msra.mxu0 %v697
    %2837 = vmatpush.bf16.msra.mxu0 %v689
    %2838 = vmatpush.bf16.msra.mxu0 %v681
    %2839 = vmatpush.bf16.msra.mxu0 %v673
    %2840 = vmatmul.bf16.gmra.mxu0 %v2766
    %v2841 = vpop.f32.mrf.mxu0
    %v2842 = vadd.f32 %v2829, %v2841
    %v2843 = vpop.f32.mrf.mxu0
    %2844 = vdwg.mxu0
    %2845 = vmatpush.bf16.msra.mxu0 %v666
    %2846 = vmatpush.bf16.msra.mxu0 %v658
    %2847 = vmatpush.bf16.msra.mxu0 %v650
    %2848 = vmatpush.bf16.msra.mxu0 %v642
    %2849 = vmatpush.bf16.msra.mxu0 %v634
    %2850 = vmatpush.bf16.msra.mxu0 %v626
    %2851 = vmatpush.bf16.msra.mxu0 %v618
    %2852 = vmatpush.bf16.msra.mxu0 %v610
    %2853 = vmatmul.bf16.gmra.mxu0 %v2765
    %v2854 = vpop.f32.mrf.mxu0
    %v2855 = vadd.f32 0.0, %v2854
    %v2856 = vpop.f32.mrf.mxu0
    %2857 = vdwg.mxu0
    %2858 = vmatpush.bf16.msra.mxu0 %v730
    %2859 = vmatpush.bf16.msra.mxu0 %v722
    %2860 = vmatpush.bf16.msra.mxu0 %v714
    %2861 = vmatpush.bf16.msra.mxu0 %v706
    %2862 = vmatpush.bf16.msra.mxu0 %v698
    %2863 = vmatpush.bf16.msra.mxu0 %v690
    %2864 = vmatpush.bf16.msra.mxu0 %v682
    %2865 = vmatpush.bf16.msra.mxu0 %v674
    %2866 = vmatmul.bf16.gmra.mxu0 %v2766
    %v2867 = vpop.f32.mrf.mxu0
    %v2868 = vadd.f32 %v2855, %v2867
    %v2869 = vpop.f32.mrf.mxu0
    %2870 = vdwg.mxu0
    %2871 = vmatpush.bf16.msra.mxu0 %v667
    %2872 = vmatpush.bf16.msra.mxu0 %v659
    %2873 = vmatpush.bf16.msra.mxu0 %v651
    %2874 = vmatpush.bf16.msra.mxu0 %v643
    %2875 = vmatpush.bf16.msra.mxu0 %v635
    %2876 = vmatpush.bf16.msra.mxu0 %v627
    %2877 = vmatpush.bf16.msra.mxu0 %v619
    %2878 = vmatpush.bf16.msra.mxu0 %v611
    %2879 = vmatmul.bf16.gmra.mxu0 %v2765
    %v2880 = vpop.f32.mrf.mxu0
    %v2881 = vadd.f32 0.0, %v2880
    %v2882 = vpop.f32.mrf.mxu0
    %2883 = vdwg.mxu0
    %2884 = vmatpush.bf16.msra.mxu0 %v731
    %2885 = vmatpush.bf16.msra.mxu0 %v723
    %2886 = vmatpush.bf16.msra.mxu0 %v715
    %2887 = vmatpush.bf16.msra.mxu0 %v707
    %2888 = vmatpush.bf16.msra.mxu0 %v699
    %2889 = vmatpush.bf16.msra.mxu0 %v691
    %2890 = vmatpush.bf16.msra.mxu0 %v683
    %2891 = vmatpush.bf16.msra.mxu0 %v675
    %2892 = vmatmul.bf16.gmra.mxu0 %v2766
    %v2893 = vpop.f32.mrf.mxu0
    %v2894 = vadd.f32 %v2881, %v2893
    %v2895 = vpop.f32.mrf.mxu0
    %2896 = vdwg.mxu0
    %2897 = vmatpush.bf16.msra.mxu0 %v668
    %2898 = vmatpush.bf16.msra.mxu0 %v660
    %2899 = vmatpush.bf16.msra.mxu0 %v652
    %2900 = vmatpush.bf16.msra.mxu0 %v644
    %2901 = vmatpush.bf16.msra.mxu0 %v636
    %2902 = vmatpush.bf16.msra.mxu0 %v628
    %2903 = vmatpush.bf16.msra.mxu0 %v620
    %2904 = vmatpush.bf16.msra.mxu0 %v612
    %2905 = vmatmul.bf16.gmra.mxu0 %v2765
    %v2906 = vpop.f32.mrf.mxu0
    %v2907 = vadd.f32 0.0, %v2906
    %v2908 = vpop.f32.mrf.mxu0
    %2909 = vdwg.mxu0
    %2910 = vmatpush.bf16.msra.mxu0 %v732
    %2911 = vmatpush.bf16.msra.mxu0 %v724
    %2912 = vmatpush.bf16.msra.mxu0 %v716
    %2913 = vmatpush.bf16.msra.mxu0 %v708
    %2914 = vmatpush.bf16.msra.mxu0 %v700
    %2915 = vmatpush.bf16.msra.mxu0 %v692
    %2916 = vmatpush.bf16.msra.mxu0 %v684
    %2917 = vmatpush.bf16.msra.mxu0 %v676
    %2918 = vmatmul.bf16.gmra.mxu0 %v2766
    %v2919 = vpop.f32.mrf.mxu0
    %v2920 = vadd.f32 %v2907, %v2919
    %v2921 = vpop.f32.mrf.mxu0
    %2922 = vdwg.mxu0
    %2923 = vmatpush.bf16.msra.mxu0 %v669
    %2924 = vmatpush.bf16.msra.mxu0 %v661
    %2925 = vmatpush.bf16.msra.mxu0 %v653
    %2926 = vmatpush.bf16.msra.mxu0 %v645
    %2927 = vmatpush.bf16.msra.mxu0 %v637
    %2928 = vmatpush.bf16.msra.mxu0 %v629
    %2929 = vmatpush.bf16.msra.mxu0 %v621
    %2930 = vmatpush.bf16.msra.mxu0 %v613
    %2931 = vmatmul.bf16.gmra.mxu0 %v2765
    %v2932 = vpop.f32.mrf.mxu0
    %v2933 = vadd.f32 0.0, %v2932
    %v2934 = vpop.f32.mrf.mxu0
    %2935 = vdwg.mxu0
    %2936 = vmatpush.bf16.msra.mxu0 %v733
    %2937 = vmatpush.bf16.msra.mxu0 %v725
    %2938 = vmatpush.bf16.msra.mxu0 %v717
    %2939 = vmatpush.bf16.msra.mxu0 %v709
    %2940 = vmatpush.bf16.msra.mxu0 %v701
    %2941 = vmatpush.bf16.msra.mxu0 %v693
    %2942 = vmatpush.bf16.msra.mxu0 %v685
    %2943 = vmatpush.bf16.msra.mxu0 %v677
    %2944 = vmatmul.bf16.gmra.mxu0 %v2766
    %v2945 = vpop.f32.mrf.mxu0
    %v2946 = vadd.f32 %v2933, %v2945
    %v2947 = vpop.f32.mrf.mxu0
    %2948 = vdwg.mxu0
    %2949 = vmatpush.bf16.msra.mxu0 %v670
    %2950 = vmatpush.bf16.msra.mxu0 %v662
    %2951 = vmatpush.bf16.msra.mxu0 %v654
    %2952 = vmatpush.bf16.msra.mxu0 %v646
    %2953 = vmatpush.bf16.msra.mxu0 %v638
    %2954 = vmatpush.bf16.msra.mxu0 %v630
    %2955 = vmatpush.bf16.msra.mxu0 %v622
    %2956 = vmatpush.bf16.msra.mxu0 %v614
    %2957 = vmatmul.bf16.gmra.mxu0 %v2765
    %v2958 = vpop.f32.mrf.mxu0
    %v2959 = vadd.f32 0.0, %v2958
    %v2960 = vpop.f32.mrf.mxu0
    %2961 = vdwg.mxu0
    %2962 = vmatpush.bf16.msra.mxu0 %v734
    %2963 = vmatpush.bf16.msra.mxu0 %v726
    %2964 = vmatpush.bf16.msra.mxu0 %v718
    %2965 = vmatpush.bf16.msra.mxu0 %v710
    %2966 = vmatpush.bf16.msra.mxu0 %v702
    %2967 = vmatpush.bf16.msra.mxu0 %v694
    %2968 = vmatpush.bf16.msra.mxu0 %v686
    %2969 = vmatpush.bf16.msra.mxu0 %v678
    %2970 = vmatmul.bf16.gmra.mxu0 %v2766
    %v2971 = vpop.f32.mrf.mxu0
    %v2972 = vadd.f32 %v2959, %v2971
    %v2973 = vpop.f32.mrf.mxu0
    %2974 = vdwg.mxu0
    %v2983 = vrot.slane %v2816, 7
    %v2984 = vrot.slane %v2842, 6
    %v2985 = vrot.slane %v2868, 5
    %v2986 = vrot.slane %v2894, 4
    %v2987 = vrot.slane %v2920, 3
    %v2988 = vrot.slane %v2946, 2
    %v2989 = vrot.slane %v2972, 1
    %v2990 = vsel %vm1086, %v2790, %v2983
    %v2991 = vsel %vm1088, %v2984, %v2985
    %v2992 = vsel %vm1090, %v2990, %v2991
    %v2993 = vsel %vm1092, %v2986, %v2987
    %v2994 = vsel %vm1094, %v2988, %v2989
    %v2995 = vsel %vm1096, %v2993, %v2994
    %v2996 = vsel %vm1098, %v2992, %v2995
    %v2998 = vadd.f32 %v2759, %v2996
    %v2999 = vsub.f32 0.0, %v2998
    %v3000 = vmul.f32 %v2999, 1.442695
    %v3001 = vpow.pop %v3000
    %v3002 = vadd.f32 %v3001, 1.0
    %v3003 = vrcp.pop %v3002
    %v3005 = vrot.slane %v2998, 2
    %v3007 = vsub.f32 0.0, %v3005
    %v3008 = vmul.f32 %v3007, 1.442695
    %v3009 = vpow.pop %v3008
    %v3010 = vadd.f32 %v3009, 1.0
    %v3011 = vrcp.pop %v3010
    %v3012 = vrot.slane %v2998, 4
    %v3014 = vtanh.pop %v3012
    %v3015 = vrot.slane %v2998, 6
    %v3017 = vsub.f32 0.0, %v3015
    %v3018 = vmul.f32 %v3017, 1.442695
    %v3019 = vpow.pop %v3018
    %v3020 = vadd.f32 %v3019, 1.0
    %v3021 = vrcp.pop %v3020
    %v3022 = vmul.f32 %v3011, %v2753
    %v3023 = vmul.f32 %v3003, %v3014
    %v3024 = vadd.f32 %v3022, %v3023
    %v3025 = vtanh.pop %v3024
    %v3026 = vmul.f32 %v3021, %v3025
    %v3027 = vld [vmem:[%s4] sm:$0x3]
    %v3028 = vmul.f32 %v3026, %v3027
    %v3030 = vperm.slane %v3028, 0
    %v3031 = vperm.slane %v3028, 1
    %v3034 = vsel %vm1086, %v3030, 0.0
    %v3035 = vsel %vm1086, %v3031, 0.0
    %v3036 = vadd.f32 %v3034, %v3035
    %3037 = vadd.xlane.f32.xlu0 %v3036
    %v3038 = vpop.xlane.xlu0 %3037
    %s3039 = sld [smem:[#allocation3]]
    %v3040 = vstv %s3039
    %v3041 = vadd.f32 %v3038, %v3040
    %vm3042 = vcmask 0
    %3043 = vst.msk [vmem:[#allocation4] sm:$0x1] %vm3042, %v3041
    // Predicated region
    $region26: #{lstm_forward.1} parent=1 // pred_check
      _
    $region27: #{lstm_forward.1} parent=1 // pred_check_branch
      %3045 = sbr.rel (0) target = $region29
    $region28: #{lstm_forward.1} parent=1 // pred_region
      %3047 = vsyncadd [#allocation5], 0
      %s3049 = sshll.u32 [#allocation4], 4
      %s3050 = int_to_ptr.vmem [resolvable:$true] %s3049
      %s3051 = sshll.u32 %s6, 4
      %s3052 = int_to_ptr.hbm [resolvable:$true] %s3051
      %3054 = dma.vmem_to_hbm [thread:$0]  %s3050, 16, %s3052, [#allocation5]
    $region29: #{lstm_forward.1} parent=1 // pred_fallthru
      _
    // Predicated region
    $region30: #{lstm_forward.1} parent=1 // pred_check
      _
    $region31: #{lstm_forward.1} parent=1 // pred_check_branch
      %3056 = sbr.rel (0) target = $region33
    $region32: #{lstm_forward.1} parent=1 // pred_region
      %3058 = dma.done [#allocation5], 16
    $region33: #{lstm_forward.1} parent=1 // pred_fallthru
      _
    %3059 = vsyncpa [#allocation5], 1

</llo_original>
